<compile_context>
chip_gen: v5e
topology: v5e:2x2
jax: 0.10.0
libtpu: 0.0.40
codegen_flags: <defaults>
</compile_context>

<pallas_src>
import jax
import jax.numpy as jnp
import numpy as np
from jax.experimental import pallas as pl
from jax.experimental.pallas import tpu as pltpu

IN_DIM  = 128   # input feature size (x)
HID     = 128   # fc1 output size == GRU hidden size (h1, h2)
FC_DIM  = 256   # fc2 / fc3 hidden size
OUT_DIM = 128   # fc4 / sigmoid-mask size

STREAMS = 2     # independent streams -> leading "parallel" grid axis (v7x 2nd TC)
T_STEPS = 16    # timesteps per stream
T_BLOCK = 8     # timesteps processed per grid step
BATCH   = 8     # rows per timestep (fills the 8 f32 vreg sublanes)


def nsnet2_kernel(x_ref, h1_ref, h2_ref,
                  w_fc1_ref, b_fc1_ref,
                  wg1_ref, bg1_ref,
                  wg2_ref, bg2_ref,
                  w_fc2_ref, b_fc2_ref,
                  w_fc3_ref, b_fc3_ref,
                  w_fc4_ref, b_fc4_ref,
                  mask_ref, h1n_ref, h2n_ref):
    tb = pl.program_id(1)

    # Initialize the VMEM-resident hidden-state carries from the inputs
    # (once per stream, at the first time block).
    @pl.when(tb == 0)
    def _():
        h1n_ref[...] = h1_ref[...]
        h2n_ref[...] = h2_ref[...]

    x = x_ref[0]                      # (TB*B, IN) bf16 for this time block
    B = h1n_ref.shape[1]
    H = h1n_ref.shape[2]
    n_steps = x.shape[0] // B         # == T_BLOCK (static)

    def mm(a, w_ref):
        # bf16 x bf16 MXU dot with f32 accumulation.
        return jnp.dot(a.astype(jnp.bfloat16), w_ref[...],
                       preferred_element_type=jnp.float32)

    # ---- fc1 for the whole time block: one batched GEMM (non-recurrent). ----
    fc1_all = (mm(x, w_fc1_ref) + b_fc1_ref[...]).astype(jnp.bfloat16)  # (TB*B, H)

    # Hoist the (tiny) GRU bias reads out of the serial loop.
    bg1 = bg1_ref[...]                # (1, 4H) f32: [bi_z+bh_z | bi_r+bh_r | bi_n | bh_n]
    bg2 = bg2_ref[...]

    def gru_cell(inp, h, wg_ref, bg):
        # Single packed gate dot: [inp | h] @ [Wi;Wh] -> [z | r | n_i | n_h].
        xh = jnp.concatenate([inp.astype(jnp.bfloat16),
                              h.astype(jnp.bfloat16)], axis=-1)          # (B, 2H)
        g = jnp.dot(xh, wg_ref[...], preferred_element_type=jnp.float32) + bg
        z = jax.nn.sigmoid(g[:, :H])                  # gru_z
        r = jax.nn.sigmoid(g[:, H:2 * H])             # gru_r
        n = jnp.tanh(g[:, 2 * H:3 * H] + r * g[:, 3 * H:])   # gru_n
        return (1.0 - z) * n + z * h                  # rnnGRU update

    # ---- Serial recurrence over the time block (static, fully unrolled). ----
    h1 = h1n_ref[0]                   # (B, H) f32 carry
    h2 = h2n_ref[0]
    rnn2_steps = []
    for step in range(n_steps):
        fc1_t = fc1_all[step * B:(step + 1) * B, :]   # static, lane-aligned slice
        h1 = gru_cell(fc1_t, h1, wg1_ref, bg1)
        h2 = gru_cell(h1, h2, wg2_ref, bg2)
        rnn2_steps.append(h2)
    h1n_ref[0] = h1
    h2n_ref[0] = h2

    # ---- fc2/fc3/fc4 + sigmoid: batched over the whole time block. ----
    rnn2_all = jnp.concatenate(rnn2_steps, axis=0)    # (TB*B, H) f32
    fc2 = jnp.maximum(mm(rnn2_all, w_fc2_ref) + b_fc2_ref[...], 0.0)
    fc3 = jnp.maximum(mm(fc2, w_fc3_ref) + b_fc3_ref[...], 0.0)
    fc4 = mm(fc3, w_fc4_ref) + b_fc4_ref[...]
    mask_ref[0] = jax.nn.sigmoid(fc4)                 # (TB*B, OUT) f32, lane-dense


def _const_spec(arr):
    """Full-array block, constant index_map -> weight stays VMEM-resident."""
    shape = arr.shape
    nd = len(shape)
    # TODO(synk): add pipeline_mode=pl.Buffered(1) for real-size weights on v5e.
    return pl.BlockSpec(shape, lambda s, tb, _nd=nd: (0,) * _nd)


def nsnet2_forward(x_seq, h1, h2, params):
    """x_seq: (S, T, B, IN) bf16; h1/h2: (S, B, HID) f32.
    Returns (mask (S,T,B,OUT) f32, h1_final (S,B,HID), h2_final (S,B,HID))."""
    S, T, B, IN = x_seq.shape
    assert T % T_BLOCK == 0
    x_flat = x_seq.reshape(S, T * B, IN)              # time-major rows

    weight_args = (params["w_fc1"], params["b_fc1"],
                   params["wg1"], params["bg1"],
                   params["wg2"], params["bg2"],
                   params["w_fc2"], params["b_fc2"],
                   params["w_fc3"], params["b_fc3"],
                   params["w_fc4"], params["b_fc4"])
    args = (x_flat, h1, h2) + weight_args

    in_specs = [
        pl.BlockSpec((1, T_BLOCK * B, IN_DIM), lambda s, tb: (s, tb, 0)),  # stream x
        pl.BlockSpec((1, B, HID), lambda s, tb: (s, 0, 0)),                # h1 init
        pl.BlockSpec((1, B, HID), lambda s, tb: (s, 0, 0)),                # h2 init
    ]
    in_specs += [_const_spec(a) for a in weight_args]

    out_shapes = (jax.ShapeDtypeStruct((S, T * B, OUT_DIM), jnp.float32),
                  jax.ShapeDtypeStruct((S, B, HID), jnp.float32),
                  jax.ShapeDtypeStruct((S, B, HID), jnp.float32))
    out_specs = [
        pl.BlockSpec((1, T_BLOCK * B, OUT_DIM), lambda s, tb: (s, tb, 0)),  # mask
        pl.BlockSpec((1, B, HID), lambda s, tb: (s, 0, 0)),                 # h1 carry
        pl.BlockSpec((1, B, HID), lambda s, tb: (s, 0, 0)),                 # h2 carry
    ]

    mask_flat, h1_fin, h2_fin = pl.pallas_call(
        nsnet2_kernel,
        out_shape=out_shapes,
        grid_spec=pltpu.PrefetchScalarGridSpec(
            num_scalar_prefetch=0,
            grid=(S, T // T_BLOCK),          # streams (parallel) x time blocks (serial)
            in_specs=in_specs,
            out_specs=out_specs,
        ),
        compiler_params=pltpu.CompilerParams(
            dimension_semantics=("parallel", "arbitrary")),
    )(*args)

    return mask_flat.reshape(S, T, B, OUT_DIM), h1_fin, h2_fin


def init_params(key):
    """Deterministic synthetic weights.
    Matrices stored (in, out) in bf16; biases (1, out) in f32.
    GRU gate weights are kept per-gate for the reference and also packed into
    the single (2H, 4H) block layout [z | r | n_i | n_h] used by the kernel."""
    ks = jax.random.split(key, 32)
    ki = iter(range(32))
    s = 0.05

    def w(shape):
        return (s * jax.random.normal(ks[next(ki)], shape, jnp.float32)
                ).astype(jnp.bfloat16)

    def b(shape):
        return s * jax.random.normal(ks[next(ki)], shape, jnp.float32)

    p = {}
    p["w_fc1"], p["b_fc1"] = w((IN_DIM, HID)), b((1, HID))

    def make_gru():
        gw = {n: w((HID, HID)) for n in ("wiz", "wir", "win", "whz", "whr", "whn")}
        gb = {n: b((1, HID)) for n in ("biz", "bir", "bin", "bhz", "bhr", "bhn")}
        zeros = jnp.zeros((HID, HID), jnp.bfloat16)
        wi = jnp.concatenate([gw["wiz"], gw["wir"], gw["win"], zeros], axis=1)
        wh = jnp.concatenate([gw["whz"], gw["whr"], zeros, gw["whn"]], axis=1)
        wg = jnp.concatenate([wi, wh], axis=0)                    # (2H, 4H) bf16
        bg = jnp.concatenate([gb["biz"] + gb["bhz"],
                              gb["bir"] + gb["bhr"],
                              gb["bin"], gb["bhn"]], axis=1)      # (1, 4H) f32
        return wg, bg, gw, gb

    p["wg1"], p["bg1"], p["gru1_w"], p["gru1_b"] = make_gru()
    p["wg2"], p["bg2"], p["gru2_w"], p["gru2_b"] = make_gru()

    p["w_fc2"], p["b_fc2"] = w((HID, FC_DIM)), b((1, FC_DIM))
    p["w_fc3"], p["b_fc3"] = w((FC_DIM, FC_DIM)), b((1, FC_DIM))
    p["w_fc4"], p["b_fc4"] = w((FC_DIM, OUT_DIM)), b((1, OUT_DIM))
    return p


def reference_forward(x_seq, h1, h2, p):
    """Pure-numpy f32 reference mirroring NsNet2_npy.forward (z/r/n gate order,
    linear fc1, sigmoid/tanh gating), batched over B, looped over S and T.
    Uses the same bf16-rounded weight values as the kernel."""
    def f32(a):
        return np.asarray(a.astype(jnp.float32))

    def sig(v):
        return 1.0 / (1.0 + np.exp(-v))

    w_fc1, b_fc1 = f32(p["w_fc1"]), f32(p["b_fc1"])
    w_fc2, b_fc2 = f32(p["w_fc2"]), f32(p["b_fc2"])
    w_fc3, b_fc3 = f32(p["w_fc3"]), f32(p["b_fc3"])
    w_fc4, b_fc4 = f32(p["w_fc4"]), f32(p["b_fc4"])
    g1w = {k: f32(v) for k, v in p["gru1_w"].items()}
    g1b = {k: f32(v) for k, v in p["gru1_b"].items()}
    g2w = {k: f32(v) for k, v in p["gru2_w"].items()}
    g2b = {k: f32(v) for k, v in p["gru2_b"].items()}

    def gru(inp, h, gw, gb):
        r = sig(inp @ gw["wir"] + gb["bir"] + h @ gw["whr"] + gb["bhr"])
        z = sig(inp @ gw["wiz"] + gb["biz"] + h @ gw["whz"] + gb["bhz"])
        n = np.tanh(inp @ gw["win"] + gb["bin"] + r * (h @ gw["whn"] + gb["bhn"]))
        return (1.0 - z) * n + z * h

    x_seq = f32(x_seq)
    h1 = np.array(f32(h1))
    h2 = np.array(f32(h2))
    S, T, B, _ = x_seq.shape
    masks = np.zeros((S, T, B, OUT_DIM), np.float32)
    for s in range(S):
        h1s, h2s = h1[s], h2[s]
        for t in range(T):
            fc1 = x_seq[s, t] @ w_fc1 + b_fc1
            h1s = gru(fc1, h1s, g1w, g1b)
            h2s = gru(h1s, h2s, g2w, g2b)
            fc2 = np.maximum(0.0, h2s @ w_fc2 + b_fc2)
            fc3 = np.maximum(0.0, fc2 @ w_fc3 + b_fc3)
            masks[s, t] = sig(fc3 @ w_fc4 + b_fc4)
        h1[s], h2[s] = h1s, h2s
    return masks, h1, h2


if __name__ == "__main__":
    key = jax.random.PRNGKey(0)
    k_p, k_x, k_h1, k_h2 = jax.random.split(key, 4)

    params = init_params(k_p)
    x_seq = jax.random.normal(
        k_x, (STREAMS, T_STEPS, BATCH, IN_DIM), jnp.float32).astype(jnp.bfloat16)
    h1 = jax.random.normal(k_h1, (STREAMS, BATCH, HID), jnp.float32)
    h2 = jax.random.normal(k_h2, (STREAMS, BATCH, HID), jnp.float32)

    mask, h1_fin, h2_fin = jax.block_until_ready(
        nsnet2_forward(x_seq, h1, h2, params))

    ref_mask, ref_h1, ref_h2 = reference_forward(x_seq, h1, h2, params)
    # Tolerances cover bf16 activation casts at MXU inputs compounding through
    # the 16-step recurrence (weights are identical bf16 values on both sides).
    np.testing.assert_allclose(np.asarray(mask), ref_mask, rtol=3e-2, atol=3e-2)
    np.testing.assert_allclose(np.asarray(h1_fin), ref_h1, rtol=3e-2, atol=3e-2)
    np.testing.assert_allclose(np.asarray(h2_fin), ref_h2, rtol=3e-2, atol=3e-2)

    print("KERNEL_OK")
</pallas_src>

<mosaic_0001>
module attributes {stable_mosaic.version = 11 : i64} {
  func.func @nsnet2_kernel(%arg0: i32, %arg1: i32, %arg2: memref<1x64x128xbf16, #tpu.memory_space<vmem>>, %arg3: memref<1x8x128xf32, #tpu.memory_space<vmem>>, %arg4: memref<1x8x128xf32, #tpu.memory_space<vmem>>, %arg5: memref<128x128xbf16, #tpu.memory_space<vmem>>, %arg6: memref<1x128xf32, #tpu.memory_space<vmem>>, %arg7: memref<256x512xbf16, #tpu.memory_space<vmem>>, %arg8: memref<1x512xf32, #tpu.memory_space<vmem>>, %arg9: memref<256x512xbf16, #tpu.memory_space<vmem>>, %arg10: memref<1x512xf32, #tpu.memory_space<vmem>>, %arg11: memref<128x256xbf16, #tpu.memory_space<vmem>>, %arg12: memref<1x256xf32, #tpu.memory_space<vmem>>, %arg13: memref<256x256xbf16, #tpu.memory_space<vmem>>, %arg14: memref<1x256xf32, #tpu.memory_space<vmem>>, %arg15: memref<256x128xbf16, #tpu.memory_space<vmem>>, %arg16: memref<1x128xf32, #tpu.memory_space<vmem>>, %arg17: memref<1x64x128xf32, #tpu.memory_space<vmem>>, %arg18: memref<1x8x128xf32, #tpu.memory_space<vmem>>, %arg19: memref<1x8x128xf32, #tpu.memory_space<vmem>>) attributes {dimension_semantics = [#tpu.dimension_semantics<parallel>, #tpu.dimension_semantics<arbitrary>], iteration_bounds = array<i64: 2, 2>, scalar_prefetch = 0 : i64, scratch_operands = 0 : i64, tpu.core_type = #tpu.core_type<tc>, window_params = [{transform_indices = @transform_0, window_bounds = array<i64: 1, 64, 128>}, {transform_indices = @transform_1, window_bounds = array<i64: 1, 8, 128>}, {transform_indices = @transform_2, window_bounds = array<i64: 1, 8, 128>}, {pipeline_mode = #tpu.pipeline_mode<synchronous>, transform_indices = @transform_3, window_bounds = array<i64: 128, 128>}, {pipeline_mode = #tpu.pipeline_mode<synchronous>, transform_indices = @transform_4, window_bounds = array<i64: 1, 128>}, {pipeline_mode = #tpu.pipeline_mode<synchronous>, transform_indices = @transform_5, window_bounds = array<i64: 256, 512>}, {pipeline_mode = #tpu.pipeline_mode<synchronous>, transform_indices = @transform_6, window_bounds = array<i64: 1, 512>}, {pipeline_mode = #tpu.pipeline_mode<synchronous>, transform_indices = @transform_7, window_bounds = array<i64: 256, 512>}, {pipeline_mode = #tpu.pipeline_mode<synchronous>, transform_indices = @transform_8, window_bounds = array<i64: 1, 512>}, {pipeline_mode = #tpu.pipeline_mode<synchronous>, transform_indices = @transform_9, window_bounds = array<i64: 128, 256>}, {pipeline_mode = #tpu.pipeline_mode<synchronous>, transform_indices = @transform_10, window_bounds = array<i64: 1, 256>}, {pipeline_mode = #tpu.pipeline_mode<synchronous>, transform_indices = @transform_11, window_bounds = array<i64: 256, 256>}, {pipeline_mode = #tpu.pipeline_mode<synchronous>, transform_indices = @transform_12, window_bounds = array<i64: 1, 256>}, {pipeline_mode = #tpu.pipeline_mode<synchronous>, transform_indices = @transform_13, window_bounds = array<i64: 256, 128>}, {pipeline_mode = #tpu.pipeline_mode<synchronous>, transform_indices = @transform_14, window_bounds = array<i64: 1, 128>}, {transform_indices = @transform_15, window_bounds = array<i64: 1, 64, 128>}, {transform_indices = @transform_16, window_bounds = array<i64: 1, 8, 128>}, {transform_indices = @transform_17, window_bounds = array<i64: 1, 8, 128>}]} {
    %c0_i32 = arith.constant 0 : i32
    %0 = arith.cmpi eq, %arg1, %c0_i32 : i32
    %1 = arith.extui %0 : i1 to i32
    %c0_i32_0 = arith.constant 0 : i32
    %2 = arith.cmpi ne, %1, %c0_i32_0 : i32
    scf.if %2 {
      %c0_140 = arith.constant 0 : index
      %c0_141 = arith.constant 0 : index
      %c0_142 = arith.constant 0 : index
      %518 = vector.load %arg3[%c0_140, %c0_141, %c0_142] : memref<1x8x128xf32, #tpu.memory_space<vmem>>, vector<1x8x128xf32>
      %c0_143 = arith.constant 0 : index
      %c0_144 = arith.constant 0 : index
      %c0_145 = arith.constant 0 : index
      %519 = vector.load %arg18[%c0_143, %c0_144, %c0_145] : memref<1x8x128xf32, #tpu.memory_space<vmem>>, vector<1x8x128xf32>
      tpu.vector_store %arg18[%c0_143, %c0_144, %c0_145], %518 {strides = array<i32>} : memref<1x8x128xf32, #tpu.memory_space<vmem>>, vector<1x8x128xf32>,
      %c0_146 = arith.constant 0 : index
      %c0_147 = arith.constant 0 : index
      %c0_148 = arith.constant 0 : index
      %520 = vector.load %arg4[%c0_146, %c0_147, %c0_148] : memref<1x8x128xf32, #tpu.memory_space<vmem>>, vector<1x8x128xf32>
      %c0_149 = arith.constant 0 : index
      %c0_150 = arith.constant 0 : index
      %c0_151 = arith.constant 0 : index
      %521 = vector.load %arg19[%c0_149, %c0_150, %c0_151] : memref<1x8x128xf32, #tpu.memory_space<vmem>>, vector<1x8x128xf32>
      tpu.vector_store %arg19[%c0_149, %c0_150, %c0_151], %520 {strides = array<i32>} : memref<1x8x128xf32, #tpu.memory_space<vmem>>, vector<1x8x128xf32>,
    } else {
    }
    %c0 = arith.constant 0 : index
    %c0_1 = arith.constant 0 : index
    %c0_2 = arith.constant 0 : index
    %3 = vector.load %arg2[%c0, %c0_1, %c0_2] : memref<1x64x128xbf16, #tpu.memory_space<vmem>>, vector<1x64x128xbf16>
    %4 = vector.shape_cast %3 : vector<1x64x128xbf16> to vector<64x128xbf16>
    %c0_3 = arith.constant 0 : index
    %c0_4 = arith.constant 0 : index
    %5 = vector.load %arg5[%c0_3, %c0_4] : memref<128x128xbf16, #tpu.memory_space<vmem>>, vector<128x128xbf16>
    %cst = arith.constant dense<0.000000e+00> : vector<64x128xf32>
    %6 = tpu.matmul %4, %5, %cst {dimension_numbers = #tpu.dot_dimension_numbers<[1], [0], [0], [1], [0, 0, 1, 1], [], []>} : vector<64x128xbf16>, vector<128x128xbf16>, vector<64x128xf32> -> vector<64x128xf32>
    %c0_5 = arith.constant 0 : index
    %c0_6 = arith.constant 0 : index
    %7 = vector.load %arg6[%c0_5, %c0_6] : memref<1x128xf32, #tpu.memory_space<vmem>>, vector<1x128xf32>
    %8 = vector.broadcast %7 : vector<1x128xf32> to vector<64x128xf32>
    %9 = arith.addf %6, %8 : vector<64x128xf32>
    %10 = arith.truncf %9 : vector<64x128xf32> to vector<64x128xbf16>
    %c0_7 = arith.constant 0 : index
    %c0_8 = arith.constant 0 : index
    %11 = vector.load %arg8[%c0_7, %c0_8] : memref<1x512xf32, #tpu.memory_space<vmem>>, vector<1x512xf32>
    %c0_9 = arith.constant 0 : index
    %c0_10 = arith.constant 0 : index
    %12 = vector.load %arg10[%c0_9, %c0_10] : memref<1x512xf32, #tpu.memory_space<vmem>>, vector<1x512xf32>
    %c0_11 = arith.constant 0 : index
    %c0_12 = arith.constant 0 : index
    %c0_13 = arith.constant 0 : index
    %13 = vector.load %arg18[%c0_11, %c0_12, %c0_13] : memref<1x8x128xf32, #tpu.memory_space<vmem>>, vector<1x8x128xf32>
    %14 = vector.shape_cast %13 : vector<1x8x128xf32> to vector<8x128xf32>
    %c0_14 = arith.constant 0 : index
    %c0_15 = arith.constant 0 : index
    %c0_16 = arith.constant 0 : index
    %15 = vector.load %arg19[%c0_14, %c0_15, %c0_16] : memref<1x8x128xf32, #tpu.memory_space<vmem>>, vector<1x8x128xf32>
    %16 = vector.shape_cast %15 : vector<1x8x128xf32> to vector<8x128xf32>
    %17 = vector.extract_strided_slice %10 {offsets = [0, 0], sizes = [8, 128], strides = [1, 1]} : vector<64x128xbf16> to vector<8x128xbf16>
    %18 = arith.truncf %14 : vector<8x128xf32> to vector<8x128xbf16>
    %19 = tpu.concatenate %17, %18 in 1 : vector<8x128xbf16>, vector<8x128xbf16> -> vector<8x256xbf16>
    %c0_17 = arith.constant 0 : index
    %c0_18 = arith.constant 0 : index
    %20 = vector.load %arg7[%c0_17, %c0_18] : memref<256x512xbf16, #tpu.memory_space<vmem>>, vector<256x512xbf16>
    %cst_19 = arith.constant dense<0.000000e+00> : vector<8x512xf32>
    %21 = tpu.matmul %19, %20, %cst_19 {dimension_numbers = #tpu.dot_dimension_numbers<[1], [0], [0], [1], [0, 0, 1, 1], [], []>} : vector<8x256xbf16>, vector<256x512xbf16>, vector<8x512xf32> -> vector<8x512xf32>
    %22 = vector.broadcast %11 : vector<1x512xf32> to vector<8x512xf32>
    %23 = arith.addf %21, %22 : vector<8x512xf32>
    %24 = vector.extract_strided_slice %23 {offsets = [0, 0], sizes = [8, 128], strides = [1, 1]} : vector<8x512xf32> to vector<8x128xf32>
    %25 = arith.negf %24 : vector<8x128xf32>
    %26 = math.exp %25 : vector<8x128xf32>
    %cst_20 = arith.constant 1.000000e+00 : f32
    %27 = vector.broadcast %cst_20 : f32 to vector<8x128xf32>
    %28 = arith.addf %27, %26 : vector<8x128xf32>
    %29 = arith.divf %27, %28 : vector<8x128xf32>
    %30 = vector.extract_strided_slice %23 {offsets = [0, 128], sizes = [8, 128], strides = [1, 1]} : vector<8x512xf32> to vector<8x128xf32>
    %31 = arith.negf %30 : vector<8x128xf32>
    %32 = math.exp %31 : vector<8x128xf32>
    %cst_21 = arith.constant 1.000000e+00 : f32
    %33 = vector.broadcast %cst_21 : f32 to vector<8x128xf32>
    %34 = arith.addf %33, %32 : vector<8x128xf32>
    %35 = arith.divf %33, %34 : vector<8x128xf32>
    %36 = vector.extract_strided_slice %23 {offsets = [0, 256], sizes = [8, 128], strides = [1, 1]} : vector<8x512xf32> to vector<8x128xf32>
    %37 = vector.extract_strided_slice %23 {offsets = [0, 384], sizes = [8, 128], strides = [1, 1]} : vector<8x512xf32> to vector<8x128xf32>
    %38 = arith.mulf %35, %37 : vector<8x128xf32>
    %39 = arith.addf %36, %38 : vector<8x128xf32>
    %40 = math.tanh %39 : vector<8x128xf32>
    %cst_22 = arith.constant 1.000000e+00 : f32
    %41 = vector.broadcast %cst_22 : f32 to vector<8x128xf32>
    %42 = arith.subf %41, %29 : vector<8x128xf32>
    %43 = arith.mulf %42, %40 : vector<8x128xf32>
    %44 = arith.mulf %29, %14 : vector<8x128xf32>
    %45 = arith.addf %43, %44 : vector<8x128xf32>
    %46 = arith.truncf %45 : vector<8x128xf32> to vector<8x128xbf16>
    %47 = arith.truncf %16 : vector<8x128xf32> to vector<8x128xbf16>
    %48 = tpu.concatenate %46, %47 in 1 : vector<8x128xbf16>, vector<8x128xbf16> -> vector<8x256xbf16>
    %c0_23 = arith.constant 0 : index
    %c0_24 = arith.constant 0 : index
    %49 = vector.load %arg9[%c0_23, %c0_24] : memref<256x512xbf16, #tpu.memory_space<vmem>>, vector<256x512xbf16>
    %cst_25 = arith.constant dense<0.000000e+00> : vector<8x512xf32>
    %50 = tpu.matmul %48, %49, %cst_25 {dimension_numbers = #tpu.dot_dimension_numbers<[1], [0], [0], [1], [0, 0, 1, 1], [], []>} : vector<8x256xbf16>, vector<256x512xbf16>, vector<8x512xf32> -> vector<8x512xf32>
    %51 = vector.broadcast %12 : vector<1x512xf32> to vector<8x512xf32>
    %52 = arith.addf %50, %51 : vector<8x512xf32>
    %53 = vector.extract_strided_slice %52 {offsets = [0, 0], sizes = [8, 128], strides = [1, 1]} : vector<8x512xf32> to vector<8x128xf32>
    %54 = arith.negf %53 : vector<8x128xf32>
    %55 = math.exp %54 : vector<8x128xf32>
    %cst_26 = arith.constant 1.000000e+00 : f32
    %56 = vector.broadcast %cst_26 : f32 to vector<8x128xf32>
    %57 = arith.addf %56, %55 : vector<8x128xf32>
    %58 = arith.divf %56, %57 : vector<8x128xf32>
    %59 = vector.extract_strided_slice %52 {offsets = [0, 128], sizes = [8, 128], strides = [1, 1]} : vector<8x512xf32> to vector<8x128xf32>
    %60 = arith.negf %59 : vector<8x128xf32>
    %61 = math.exp %60 : vector<8x128xf32>
    %cst_27 = arith.constant 1.000000e+00 : f32
    %62 = vector.broadcast %cst_27 : f32 to vector<8x128xf32>
    %63 = arith.addf %62, %61 : vector<8x128xf32>
    %64 = arith.divf %62, %63 : vector<8x128xf32>
    %65 = vector.extract_strided_slice %52 {offsets = [0, 256], sizes = [8, 128], strides = [1, 1]} : vector<8x512xf32> to vector<8x128xf32>
    %66 = vector.extract_strided_slice %52 {offsets = [0, 384], sizes = [8, 128], strides = [1, 1]} : vector<8x512xf32> to vector<8x128xf32>
    %67 = arith.mulf %64, %66 : vector<8x128xf32>
    %68 = arith.addf %65, %67 : vector<8x128xf32>
    %69 = math.tanh %68 : vector<8x128xf32>
    %cst_28 = arith.constant 1.000000e+00 : f32
    %70 = vector.broadcast %cst_28 : f32 to vector<8x128xf32>
    %71 = arith.subf %70, %58 : vector<8x128xf32>
    %72 = arith.mulf %71, %69 : vector<8x128xf32>
    %73 = arith.mulf %58, %16 : vector<8x128xf32>
    %74 = arith.addf %72, %73 : vector<8x128xf32>
    %75 = vector.extract_strided_slice %10 {offsets = [8, 0], sizes = [8, 128], strides = [1, 1]} : vector<64x128xbf16> to vector<8x128xbf16>
    %76 = arith.truncf %45 : vector<8x128xf32> to vector<8x128xbf16>
    %77 = tpu.concatenate %75, %76 in 1 : vector<8x128xbf16>, vector<8x128xbf16> -> vector<8x256xbf16>
    %c0_29 = arith.constant 0 : index
    %c0_30 = arith.constant 0 : index
    %78 = vector.load %arg7[%c0_29, %c0_30] : memref<256x512xbf16, #tpu.memory_space<vmem>>, vector<256x512xbf16>
    %cst_31 = arith.constant dense<0.000000e+00> : vector<8x512xf32>
    %79 = tpu.matmul %77, %78, %cst_31 {dimension_numbers = #tpu.dot_dimension_numbers<[1], [0], [0], [1], [0, 0, 1, 1], [], []>} : vector<8x256xbf16>, vector<256x512xbf16>, vector<8x512xf32> -> vector<8x512xf32>
    %80 = vector.broadcast %11 : vector<1x512xf32> to vector<8x512xf32>
    %81 = arith.addf %79, %80 : vector<8x512xf32>
    %82 = vector.extract_strided_slice %81 {offsets = [0, 0], sizes = [8, 128], strides = [1, 1]} : vector<8x512xf32> to vector<8x128xf32>
    %83 = arith.negf %82 : vector<8x128xf32>
    %84 = math.exp %83 : vector<8x128xf32>
    %cst_32 = arith.constant 1.000000e+00 : f32
    %85 = vector.broadcast %cst_32 : f32 to vector<8x128xf32>
    %86 = arith.addf %85, %84 : vector<8x128xf32>
    %87 = arith.divf %85, %86 : vector<8x128xf32>
    %88 = vector.extract_strided_slice %81 {offsets = [0, 128], sizes = [8, 128], strides = [1, 1]} : vector<8x512xf32> to vector<8x128xf32>
    %89 = arith.negf %88 : vector<8x128xf32>
    %90 = math.exp %89 : vector<8x128xf32>
    %cst_33 = arith.constant 1.000000e+00 : f32
    %91 = vector.broadcast %cst_33 : f32 to vector<8x128xf32>
    %92 = arith.addf %91, %90 : vector<8x128xf32>
    %93 = arith.divf %91, %92 : vector<8x128xf32>
    %94 = vector.extract_strided_slice %81 {offsets = [0, 256], sizes = [8, 128], strides = [1, 1]} : vector<8x512xf32> to vector<8x128xf32>
    %95 = vector.extract_strided_slice %81 {offsets = [0, 384], sizes = [8, 128], strides = [1, 1]} : vector<8x512xf32> to vector<8x128xf32>
    %96 = arith.mulf %93, %95 : vector<8x128xf32>
    %97 = arith.addf %94, %96 : vector<8x128xf32>
    %98 = math.tanh %97 : vector<8x128xf32>
    %cst_34 = arith.constant 1.000000e+00 : f32
    %99 = vector.broadcast %cst_34 : f32 to vector<8x128xf32>
    %100 = arith.subf %99, %87 : vector<8x128xf32>
    %101 = arith.mulf %100, %98 : vector<8x128xf32>
    %102 = arith.mulf %87, %45 : vector<8x128xf32>
    %103 = arith.addf %101, %102 : vector<8x128xf32>
    %104 = arith.truncf %103 : vector<8x128xf32> to vector<8x128xbf16>
    %105 = arith.truncf %74 : vector<8x128xf32> to vector<8x128xbf16>
    %106 = tpu.concatenate %104, %105 in 1 : vector<8x128xbf16>, vector<8x128xbf16> -> vector<8x256xbf16>
    %c0_35 = arith.constant 0 : index
    %c0_36 = arith.constant 0 : index
    %107 = vector.load %arg9[%c0_35, %c0_36] : memref<256x512xbf16, #tpu.memory_space<vmem>>, vector<256x512xbf16>
    %cst_37 = arith.constant dense<0.000000e+00> : vector<8x512xf32>
    %108 = tpu.matmul %106, %107, %cst_37 {dimension_numbers = #tpu.dot_dimension_numbers<[1], [0], [0], [1], [0, 0, 1, 1], [], []>} : vector<8x256xbf16>, vector<256x512xbf16>, vector<8x512xf32> -> vector<8x512xf32>
    %109 = vector.broadcast %12 : vector<1x512xf32> to vector<8x512xf32>
    %110 = arith.addf %108, %109 : vector<8x512xf32>
    %111 = vector.extract_strided_slice %110 {offsets = [0, 0], sizes = [8, 128], strides = [1, 1]} : vector<8x512xf32> to vector<8x128xf32>
    %112 = arith.negf %111 : vector<8x128xf32>
    %113 = math.exp %112 : vector<8x128xf32>
    %cst_38 = arith.constant 1.000000e+00 : f32
    %114 = vector.broadcast %cst_38 : f32 to vector<8x128xf32>
    %115 = arith.addf %114, %113 : vector<8x128xf32>
    %116 = arith.divf %114, %115 : vector<8x128xf32>
    %117 = vector.extract_strided_slice %110 {offsets = [0, 128], sizes = [8, 128], strides = [1, 1]} : vector<8x512xf32> to vector<8x128xf32>
    %118 = arith.negf %117 : vector<8x128xf32>
    %119 = math.exp %118 : vector<8x128xf32>
    %cst_39 = arith.constant 1.000000e+00 : f32
    %120 = vector.broadcast %cst_39 : f32 to vector<8x128xf32>
    %121 = arith.addf %120, %119 : vector<8x128xf32>
    %122 = arith.divf %120, %121 : vector<8x128xf32>
    %123 = vector.extract_strided_slice %110 {offsets = [0, 256], sizes = [8, 128], strides = [1, 1]} : vector<8x512xf32> to vector<8x128xf32>
    %124 = vector.extract_strided_slice %110 {offsets = [0, 384], sizes = [8, 128], strides = [1, 1]} : vector<8x512xf32> to vector<8x128xf32>
    %125 = arith.mulf %122, %124 : vector<8x128xf32>
    %126 = arith.addf %123, %125 : vector<8x128xf32>
    %127 = math.tanh %126 : vector<8x128xf32>
    %cst_40 = arith.constant 1.000000e+00 : f32
    %128 = vector.broadcast %cst_40 : f32 to vector<8x128xf32>
    %129 = arith.subf %128, %116 : vector<8x128xf32>
    %130 = arith.mulf %129, %127 : vector<8x128xf32>
    %131 = arith.mulf %116, %74 : vector<8x128xf32>
    %132 = arith.addf %130, %131 : vector<8x128xf32>
    %133 = vector.extract_strided_slice %10 {offsets = [16, 0], sizes = [8, 128], strides = [1, 1]} : vector<64x128xbf16> to vector<8x128xbf16>
    %134 = arith.truncf %103 : vector<8x128xf32> to vector<8x128xbf16>
    %135 = tpu.concatenate %133, %134 in 1 : vector<8x128xbf16>, vector<8x128xbf16> -> vector<8x256xbf16>
    %c0_41 = arith.constant 0 : index
    %c0_42 = arith.constant 0 : index
    %136 = vector.load %arg7[%c0_41, %c0_42] : memref<256x512xbf16, #tpu.memory_space<vmem>>, vector<256x512xbf16>
    %cst_43 = arith.constant dense<0.000000e+00> : vector<8x512xf32>
    %137 = tpu.matmul %135, %136, %cst_43 {dimension_numbers = #tpu.dot_dimension_numbers<[1], [0], [0], [1], [0, 0, 1, 1], [], []>} : vector<8x256xbf16>, vector<256x512xbf16>, vector<8x512xf32> -> vector<8x512xf32>
    %138 = vector.broadcast %11 : vector<1x512xf32> to vector<8x512xf32>
    %139 = arith.addf %137, %138 : vector<8x512xf32>
    %140 = vector.extract_strided_slice %139 {offsets = [0, 0], sizes = [8, 128], strides = [1, 1]} : vector<8x512xf32> to vector<8x128xf32>
    %141 = arith.negf %140 : vector<8x128xf32>
    %142 = math.exp %141 : vector<8x128xf32>
    %cst_44 = arith.constant 1.000000e+00 : f32
    %143 = vector.broadcast %cst_44 : f32 to vector<8x128xf32>
    %144 = arith.addf %143, %142 : vector<8x128xf32>
    %145 = arith.divf %143, %144 : vector<8x128xf32>
    %146 = vector.extract_strided_slice %139 {offsets = [0, 128], sizes = [8, 128], strides = [1, 1]} : vector<8x512xf32> to vector<8x128xf32>
    %147 = arith.negf %146 : vector<8x128xf32>
    %148 = math.exp %147 : vector<8x128xf32>
    %cst_45 = arith.constant 1.000000e+00 : f32
    %149 = vector.broadcast %cst_45 : f32 to vector<8x128xf32>
    %150 = arith.addf %149, %148 : vector<8x128xf32>
    %151 = arith.divf %149, %150 : vector<8x128xf32>
    %152 = vector.extract_strided_slice %139 {offsets = [0, 256], sizes = [8, 128], strides = [1, 1]} : vector<8x512xf32> to vector<8x128xf32>
    %153 = vector.extract_strided_slice %139 {offsets = [0, 384], sizes = [8, 128], strides = [1, 1]} : vector<8x512xf32> to vector<8x128xf32>
    %154 = arith.mulf %151, %153 : vector<8x128xf32>
    %155 = arith.addf %152, %154 : vector<8x128xf32>
    %156 = math.tanh %155 : vector<8x128xf32>
    %cst_46 = arith.constant 1.000000e+00 : f32
    %157 = vector.broadcast %cst_46 : f32 to vector<8x128xf32>
    %158 = arith.subf %157, %145 : vector<8x128xf32>
    %159 = arith.mulf %158, %156 : vector<8x128xf32>
    %160 = arith.mulf %145, %103 : vector<8x128xf32>
    %161 = arith.addf %159, %160 : vector<8x128xf32>
    %162 = arith.truncf %161 : vector<8x128xf32> to vector<8x128xbf16>
    %163 = arith.truncf %132 : vector<8x128xf32> to vector<8x128xbf16>
    %164 = tpu.concatenate %162, %163 in 1 : vector<8x128xbf16>, vector<8x128xbf16> -> vector<8x256xbf16>
    %c0_47 = arith.constant 0 : index
    %c0_48 = arith.constant 0 : index
    %165 = vector.load %arg9[%c0_47, %c0_48] : memref<256x512xbf16, #tpu.memory_space<vmem>>, vector<256x512xbf16>
    %cst_49 = arith.constant dense<0.000000e+00> : vector<8x512xf32>
    %166 = tpu.matmul %164, %165, %cst_49 {dimension_numbers = #tpu.dot_dimension_numbers<[1], [0], [0], [1], [0, 0, 1, 1], [], []>} : vector<8x256xbf16>, vector<256x512xbf16>, vector<8x512xf32> -> vector<8x512xf32>
    %167 = vector.broadcast %12 : vector<1x512xf32> to vector<8x512xf32>
    %168 = arith.addf %166, %167 : vector<8x512xf32>
    %169 = vector.extract_strided_slice %168 {offsets = [0, 0], sizes = [8, 128], strides = [1, 1]} : vector<8x512xf32> to vector<8x128xf32>
    %170 = arith.negf %169 : vector<8x128xf32>
    %171 = math.exp %170 : vector<8x128xf32>
    %cst_50 = arith.constant 1.000000e+00 : f32
    %172 = vector.broadcast %cst_50 : f32 to vector<8x128xf32>
    %173 = arith.addf %172, %171 : vector<8x128xf32>
    %174 = arith.divf %172, %173 : vector<8x128xf32>
    %175 = vector.extract_strided_slice %168 {offsets = [0, 128], sizes = [8, 128], strides = [1, 1]} : vector<8x512xf32> to vector<8x128xf32>
    %176 = arith.negf %175 : vector<8x128xf32>
    %177 = math.exp %176 : vector<8x128xf32>
    %cst_51 = arith.constant 1.000000e+00 : f32
    %178 = vector.broadcast %cst_51 : f32 to vector<8x128xf32>
    %179 = arith.addf %178, %177 : vector<8x128xf32>
    %180 = arith.divf %178, %179 : vector<8x128xf32>
    %181 = vector.extract_strided_slice %168 {offsets = [0, 256], sizes = [8, 128], strides = [1, 1]} : vector<8x512xf32> to vector<8x128xf32>
    %182 = vector.extract_strided_slice %168 {offsets = [0, 384], sizes = [8, 128], strides = [1, 1]} : vector<8x512xf32> to vector<8x128xf32>
    %183 = arith.mulf %180, %182 : vector<8x128xf32>
    %184 = arith.addf %181, %183 : vector<8x128xf32>
    %185 = math.tanh %184 : vector<8x128xf32>
    %cst_52 = arith.constant 1.000000e+00 : f32
    %186 = vector.broadcast %cst_52 : f32 to vector<8x128xf32>
    %187 = arith.subf %186, %174 : vector<8x128xf32>
    %188 = arith.mulf %187, %185 : vector<8x128xf32>
    %189 = arith.mulf %174, %132 : vector<8x128xf32>
    %190 = arith.addf %188, %189 : vector<8x128xf32>
    %191 = vector.extract_strided_slice %10 {offsets = [24, 0], sizes = [8, 128], strides = [1, 1]} : vector<64x128xbf16> to vector<8x128xbf16>
    %192 = arith.truncf %161 : vector<8x128xf32> to vector<8x128xbf16>
    %193 = tpu.concatenate %191, %192 in 1 : vector<8x128xbf16>, vector<8x128xbf16> -> vector<8x256xbf16>
    %c0_53 = arith.constant 0 : index
    %c0_54 = arith.constant 0 : index
    %194 = vector.load %arg7[%c0_53, %c0_54] : memref<256x512xbf16, #tpu.memory_space<vmem>>, vector<256x512xbf16>
    %cst_55 = arith.constant dense<0.000000e+00> : vector<8x512xf32>
    %195 = tpu.matmul %193, %194, %cst_55 {dimension_numbers = #tpu.dot_dimension_numbers<[1], [0], [0], [1], [0, 0, 1, 1], [], []>} : vector<8x256xbf16>, vector<256x512xbf16>, vector<8x512xf32> -> vector<8x512xf32>
    %196 = vector.broadcast %11 : vector<1x512xf32> to vector<8x512xf32>
    %197 = arith.addf %195, %196 : vector<8x512xf32>
    %198 = vector.extract_strided_slice %197 {offsets = [0, 0], sizes = [8, 128], strides = [1, 1]} : vector<8x512xf32> to vector<8x128xf32>
    %199 = arith.negf %198 : vector<8x128xf32>
    %200 = math.exp %199 : vector<8x128xf32>
    %cst_56 = arith.constant 1.000000e+00 : f32
    %201 = vector.broadcast %cst_56 : f32 to vector<8x128xf32>
    %202 = arith.addf %201, %200 : vector<8x128xf32>
    %203 = arith.divf %201, %202 : vector<8x128xf32>
    %204 = vector.extract_strided_slice %197 {offsets = [0, 128], sizes = [8, 128], strides = [1, 1]} : vector<8x512xf32> to vector<8x128xf32>
    %205 = arith.negf %204 : vector<8x128xf32>
    %206 = math.exp %205 : vector<8x128xf32>
    %cst_57 = arith.constant 1.000000e+00 : f32
    %207 = vector.broadcast %cst_57 : f32 to vector<8x128xf32>
    %208 = arith.addf %207, %206 : vector<8x128xf32>
    %209 = arith.divf %207, %208 : vector<8x128xf32>
    %210 = vector.extract_strided_slice %197 {offsets = [0, 256], sizes = [8, 128], strides = [1, 1]} : vector<8x512xf32> to vector<8x128xf32>
    %211 = vector.extract_strided_slice %197 {offsets = [0, 384], sizes = [8, 128], strides = [1, 1]} : vector<8x512xf32> to vector<8x128xf32>
    %212 = arith.mulf %209, %211 : vector<8x128xf32>
    %213 = arith.addf %210, %212 : vector<8x128xf32>
    %214 = math.tanh %213 : vector<8x128xf32>
    %cst_58 = arith.constant 1.000000e+00 : f32
    %215 = vector.broadcast %cst_58 : f32 to vector<8x128xf32>
    %216 = arith.subf %215, %203 : vector<8x128xf32>
    %217 = arith.mulf %216, %214 : vector<8x128xf32>
    %218 = arith.mulf %203, %161 : vector<8x128xf32>
    %219 = arith.addf %217, %218 : vector<8x128xf32>
    %220 = arith.truncf %219 : vector<8x128xf32> to vector<8x128xbf16>
    %221 = arith.truncf %190 : vector<8x128xf32> to vector<8x128xbf16>
    %222 = tpu.concatenate %220, %221 in 1 : vector<8x128xbf16>, vector<8x128xbf16> -> vector<8x256xbf16>
    %c0_59 = arith.constant 0 : index
    %c0_60 = arith.constant 0 : index
    %223 = vector.load %arg9[%c0_59, %c0_60] : memref<256x512xbf16, #tpu.memory_space<vmem>>, vector<256x512xbf16>
    %cst_61 = arith.constant dense<0.000000e+00> : vector<8x512xf32>
    %224 = tpu.matmul %222, %223, %cst_61 {dimension_numbers = #tpu.dot_dimension_numbers<[1], [0], [0], [1], [0, 0, 1, 1], [], []>} : vector<8x256xbf16>, vector<256x512xbf16>, vector<8x512xf32> -> vector<8x512xf32>
    %225 = vector.broadcast %12 : vector<1x512xf32> to vector<8x512xf32>
    %226 = arith.addf %224, %225 : vector<8x512xf32>
    %227 = vector.extract_strided_slice %226 {offsets = [0, 0], sizes = [8, 128], strides = [1, 1]} : vector<8x512xf32> to vector<8x128xf32>
    %228 = arith.negf %227 : vector<8x128xf32>
    %229 = math.exp %228 : vector<8x128xf32>
    %cst_62 = arith.constant 1.000000e+00 : f32
    %230 = vector.broadcast %cst_62 : f32 to vector<8x128xf32>
    %231 = arith.addf %230, %229 : vector<8x128xf32>
    %232 = arith.divf %230, %231 : vector<8x128xf32>
    %233 = vector.extract_strided_slice %226 {offsets = [0, 128], sizes = [8, 128], strides = [1, 1]} : vector<8x512xf32> to vector<8x128xf32>
    %234 = arith.negf %233 : vector<8x128xf32>
    %235 = math.exp %234 : vector<8x128xf32>
    %cst_63 = arith.constant 1.000000e+00 : f32
    %236 = vector.broadcast %cst_63 : f32 to vector<8x128xf32>
    %237 = arith.addf %236, %235 : vector<8x128xf32>
    %238 = arith.divf %236, %237 : vector<8x128xf32>
    %239 = vector.extract_strided_slice %226 {offsets = [0, 256], sizes = [8, 128], strides = [1, 1]} : vector<8x512xf32> to vector<8x128xf32>
    %240 = vector.extract_strided_slice %226 {offsets = [0, 384], sizes = [8, 128], strides = [1, 1]} : vector<8x512xf32> to vector<8x128xf32>
    %241 = arith.mulf %238, %240 : vector<8x128xf32>
    %242 = arith.addf %239, %241 : vector<8x128xf32>
    %243 = math.tanh %242 : vector<8x128xf32>
    %cst_64 = arith.constant 1.000000e+00 : f32
    %244 = vector.broadcast %cst_64 : f32 to vector<8x128xf32>
    %245 = arith.subf %244, %232 : vector<8x128xf32>
    %246 = arith.mulf %245, %243 : vector<8x128xf32>
    %247 = arith.mulf %232, %190 : vector<8x128xf32>
    %248 = arith.addf %246, %247 : vector<8x128xf32>
    %249 = vector.extract_strided_slice %10 {offsets = [32, 0], sizes = [8, 128], strides = [1, 1]} : vector<64x128xbf16> to vector<8x128xbf16>
    %250 = arith.truncf %219 : vector<8x128xf32> to vector<8x128xbf16>
    %251 = tpu.concatenate %249, %250 in 1 : vector<8x128xbf16>, vector<8x128xbf16> -> vector<8x256xbf16>
    %c0_65 = arith.constant 0 : index
    %c0_66 = arith.constant 0 : index
    %252 = vector.load %arg7[%c0_65, %c0_66] : memref<256x512xbf16, #tpu.memory_space<vmem>>, vector<256x512xbf16>
    %cst_67 = arith.constant dense<0.000000e+00> : vector<8x512xf32>
    %253 = tpu.matmul %251, %252, %cst_67 {dimension_numbers = #tpu.dot_dimension_numbers<[1], [0], [0], [1], [0, 0, 1, 1], [], []>} : vector<8x256xbf16>, vector<256x512xbf16>, vector<8x512xf32> -> vector<8x512xf32>
    %254 = vector.broadcast %11 : vector<1x512xf32> to vector<8x512xf32>
    %255 = arith.addf %253, %254 : vector<8x512xf32>
    %256 = vector.extract_strided_slice %255 {offsets = [0, 0], sizes = [8, 128], strides = [1, 1]} : vector<8x512xf32> to vector<8x128xf32>
    %257 = arith.negf %256 : vector<8x128xf32>
    %258 = math.exp %257 : vector<8x128xf32>
    %cst_68 = arith.constant 1.000000e+00 : f32
    %259 = vector.broadcast %cst_68 : f32 to vector<8x128xf32>
    %260 = arith.addf %259, %258 : vector<8x128xf32>
    %261 = arith.divf %259, %260 : vector<8x128xf32>
    %262 = vector.extract_strided_slice %255 {offsets = [0, 128], sizes = [8, 128], strides = [1, 1]} : vector<8x512xf32> to vector<8x128xf32>
    %263 = arith.negf %262 : vector<8x128xf32>
    %264 = math.exp %263 : vector<8x128xf32>
    %cst_69 = arith.constant 1.000000e+00 : f32
    %265 = vector.broadcast %cst_69 : f32 to vector<8x128xf32>
    %266 = arith.addf %265, %264 : vector<8x128xf32>
    %267 = arith.divf %265, %266 : vector<8x128xf32>
    %268 = vector.extract_strided_slice %255 {offsets = [0, 256], sizes = [8, 128], strides = [1, 1]} : vector<8x512xf32> to vector<8x128xf32>
    %269 = vector.extract_strided_slice %255 {offsets = [0, 384], sizes = [8, 128], strides = [1, 1]} : vector<8x512xf32> to vector<8x128xf32>
    %270 = arith.mulf %267, %269 : vector<8x128xf32>
    %271 = arith.addf %268, %270 : vector<8x128xf32>
    %272 = math.tanh %271 : vector<8x128xf32>
    %cst_70 = arith.constant 1.000000e+00 : f32
    %273 = vector.broadcast %cst_70 : f32 to vector<8x128xf32>
    %274 = arith.subf %273, %261 : vector<8x128xf32>
    %275 = arith.mulf %274, %272 : vector<8x128xf32>
    %276 = arith.mulf %261, %219 : vector<8x128xf32>
    %277 = arith.addf %275, %276 : vector<8x128xf32>
    %278 = arith.truncf %277 : vector<8x128xf32> to vector<8x128xbf16>
    %279 = arith.truncf %248 : vector<8x128xf32> to vector<8x128xbf16>
    %280 = tpu.concatenate %278, %279 in 1 : vector<8x128xbf16>, vector<8x128xbf16> -> vector<8x256xbf16>
    %c0_71 = arith.constant 0 : index
    %c0_72 = arith.constant 0 : index
    %281 = vector.load %arg9[%c0_71, %c0_72] : memref<256x512xbf16, #tpu.memory_space<vmem>>, vector<256x512xbf16>
    %cst_73 = arith.constant dense<0.000000e+00> : vector<8x512xf32>
    %282 = tpu.matmul %280, %281, %cst_73 {dimension_numbers = #tpu.dot_dimension_numbers<[1], [0], [0], [1], [0, 0, 1, 1], [], []>} : vector<8x256xbf16>, vector<256x512xbf16>, vector<8x512xf32> -> vector<8x512xf32>
    %283 = vector.broadcast %12 : vector<1x512xf32> to vector<8x512xf32>
    %284 = arith.addf %282, %283 : vector<8x512xf32>
    %285 = vector.extract_strided_slice %284 {offsets = [0, 0], sizes = [8, 128], strides = [1, 1]} : vector<8x512xf32> to vector<8x128xf32>
    %286 = arith.negf %285 : vector<8x128xf32>
    %287 = math.exp %286 : vector<8x128xf32>
    %cst_74 = arith.constant 1.000000e+00 : f32
    %288 = vector.broadcast %cst_74 : f32 to vector<8x128xf32>
    %289 = arith.addf %288, %287 : vector<8x128xf32>
    %290 = arith.divf %288, %289 : vector<8x128xf32>
    %291 = vector.extract_strided_slice %284 {offsets = [0, 128], sizes = [8, 128], strides = [1, 1]} : vector<8x512xf32> to vector<8x128xf32>
    %292 = arith.negf %291 : vector<8x128xf32>
    %293 = math.exp %292 : vector<8x128xf32>
    %cst_75 = arith.constant 1.000000e+00 : f32
    %294 = vector.broadcast %cst_75 : f32 to vector<8x128xf32>
    %295 = arith.addf %294, %293 : vector<8x128xf32>
    %296 = arith.divf %294, %295 : vector<8x128xf32>
    %297 = vector.extract_strided_slice %284 {offsets = [0, 256], sizes = [8, 128], strides = [1, 1]} : vector<8x512xf32> to vector<8x128xf32>
    %298 = vector.extract_strided_slice %284 {offsets = [0, 384], sizes = [8, 128], strides = [1, 1]} : vector<8x512xf32> to vector<8x128xf32>
    %299 = arith.mulf %296, %298 : vector<8x128xf32>
    %300 = arith.addf %297, %299 : vector<8x128xf32>
    %301 = math.tanh %300 : vector<8x128xf32>
    %cst_76 = arith.constant 1.000000e+00 : f32
    %302 = vector.broadcast %cst_76 : f32 to vector<8x128xf32>
    %303 = arith.subf %302, %290 : vector<8x128xf32>
    %304 = arith.mulf %303, %301 : vector<8x128xf32>
    %305 = arith.mulf %290, %248 : vector<8x128xf32>
    %306 = arith.addf %304, %305 : vector<8x128xf32>
    %307 = vector.extract_strided_slice %10 {offsets = [40, 0], sizes = [8, 128], strides = [1, 1]} : vector<64x128xbf16> to vector<8x128xbf16>
    %308 = arith.truncf %277 : vector<8x128xf32> to vector<8x128xbf16>
    %309 = tpu.concatenate %307, %308 in 1 : vector<8x128xbf16>, vector<8x128xbf16> -> vector<8x256xbf16>
    %c0_77 = arith.constant 0 : index
    %c0_78 = arith.constant 0 : index
    %310 = vector.load %arg7[%c0_77, %c0_78] : memref<256x512xbf16, #tpu.memory_space<vmem>>, vector<256x512xbf16>
    %cst_79 = arith.constant dense<0.000000e+00> : vector<8x512xf32>
    %311 = tpu.matmul %309, %310, %cst_79 {dimension_numbers = #tpu.dot_dimension_numbers<[1], [0], [0], [1], [0, 0, 1, 1], [], []>} : vector<8x256xbf16>, vector<256x512xbf16>, vector<8x512xf32> -> vector<8x512xf32>
    %312 = vector.broadcast %11 : vector<1x512xf32> to vector<8x512xf32>
    %313 = arith.addf %311, %312 : vector<8x512xf32>
    %314 = vector.extract_strided_slice %313 {offsets = [0, 0], sizes = [8, 128], strides = [1, 1]} : vector<8x512xf32> to vector<8x128xf32>
    %315 = arith.negf %314 : vector<8x128xf32>
    %316 = math.exp %315 : vector<8x128xf32>
    %cst_80 = arith.constant 1.000000e+00 : f32
    %317 = vector.broadcast %cst_80 : f32 to vector<8x128xf32>
    %318 = arith.addf %317, %316 : vector<8x128xf32>
    %319 = arith.divf %317, %318 : vector<8x128xf32>
    %320 = vector.extract_strided_slice %313 {offsets = [0, 128], sizes = [8, 128], strides = [1, 1]} : vector<8x512xf32> to vector<8x128xf32>
    %321 = arith.negf %320 : vector<8x128xf32>
    %322 = math.exp %321 : vector<8x128xf32>
    %cst_81 = arith.constant 1.000000e+00 : f32
    %323 = vector.broadcast %cst_81 : f32 to vector<8x128xf32>
    %324 = arith.addf %323, %322 : vector<8x128xf32>
    %325 = arith.divf %323, %324 : vector<8x128xf32>
    %326 = vector.extract_strided_slice %313 {offsets = [0, 256], sizes = [8, 128], strides = [1, 1]} : vector<8x512xf32> to vector<8x128xf32>
    %327 = vector.extract_strided_slice %313 {offsets = [0, 384], sizes = [8, 128], strides = [1, 1]} : vector<8x512xf32> to vector<8x128xf32>
    %328 = arith.mulf %325, %327 : vector<8x128xf32>
    %329 = arith.addf %326, %328 : vector<8x128xf32>
    %330 = math.tanh %329 : vector<8x128xf32>
    %cst_82 = arith.constant 1.000000e+00 : f32
    %331 = vector.broadcast %cst_82 : f32 to vector<8x128xf32>
    %332 = arith.subf %331, %319 : vector<8x128xf32>
    %333 = arith.mulf %332, %330 : vector<8x128xf32>
    %334 = arith.mulf %319, %277 : vector<8x128xf32>
    %335 = arith.addf %333, %334 : vector<8x128xf32>
    %336 = arith.truncf %335 : vector<8x128xf32> to vector<8x128xbf16>
    %337 = arith.truncf %306 : vector<8x128xf32> to vector<8x128xbf16>
    %338 = tpu.concatenate %336, %337 in 1 : vector<8x128xbf16>, vector<8x128xbf16> -> vector<8x256xbf16>
    %c0_83 = arith.constant 0 : index
    %c0_84 = arith.constant 0 : index
    %339 = vector.load %arg9[%c0_83, %c0_84] : memref<256x512xbf16, #tpu.memory_space<vmem>>, vector<256x512xbf16>
    %cst_85 = arith.constant dense<0.000000e+00> : vector<8x512xf32>
    %340 = tpu.matmul %338, %339, %cst_85 {dimension_numbers = #tpu.dot_dimension_numbers<[1], [0], [0], [1], [0, 0, 1, 1], [], []>} : vector<8x256xbf16>, vector<256x512xbf16>, vector<8x512xf32> -> vector<8x512xf32>
    %341 = vector.broadcast %12 : vector<1x512xf32> to vector<8x512xf32>
    %342 = arith.addf %340, %341 : vector<8x512xf32>
    %343 = vector.extract_strided_slice %342 {offsets = [0, 0], sizes = [8, 128], strides = [1, 1]} : vector<8x512xf32> to vector<8x128xf32>
    %344 = arith.negf %343 : vector<8x128xf32>
    %345 = math.exp %344 : vector<8x128xf32>
    %cst_86 = arith.constant 1.000000e+00 : f32
    %346 = vector.broadcast %cst_86 : f32 to vector<8x128xf32>
    %347 = arith.addf %346, %345 : vector<8x128xf32>
    %348 = arith.divf %346, %347 : vector<8x128xf32>
    %349 = vector.extract_strided_slice %342 {offsets = [0, 128], sizes = [8, 128], strides = [1, 1]} : vector<8x512xf32> to vector<8x128xf32>
    %350 = arith.negf %349 : vector<8x128xf32>
    %351 = math.exp %350 : vector<8x128xf32>
    %cst_87 = arith.constant 1.000000e+00 : f32
    %352 = vector.broadcast %cst_87 : f32 to vector<8x128xf32>
    %353 = arith.addf %352, %351 : vector<8x128xf32>
    %354 = arith.divf %352, %353 : vector<8x128xf32>
    %355 = vector.extract_strided_slice %342 {offsets = [0, 256], sizes = [8, 128], strides = [1, 1]} : vector<8x512xf32> to vector<8x128xf32>
    %356 = vector.extract_strided_slice %342 {offsets = [0, 384], sizes = [8, 128], strides = [1, 1]} : vector<8x512xf32> to vector<8x128xf32>
    %357 = arith.mulf %354, %356 : vector<8x128xf32>
    %358 = arith.addf %355, %357 : vector<8x128xf32>
    %359 = math.tanh %358 : vector<8x128xf32>
    %cst_88 = arith.constant 1.000000e+00 : f32
    %360 = vector.broadcast %cst_88 : f32 to vector<8x128xf32>
    %361 = arith.subf %360, %348 : vector<8x128xf32>
    %362 = arith.mulf %361, %359 : vector<8x128xf32>
    %363 = arith.mulf %348, %306 : vector<8x128xf32>
    %364 = arith.addf %362, %363 : vector<8x128xf32>
    %365 = vector.extract_strided_slice %10 {offsets = [48, 0], sizes = [8, 128], strides = [1, 1]} : vector<64x128xbf16> to vector<8x128xbf16>
    %366 = arith.truncf %335 : vector<8x128xf32> to vector<8x128xbf16>
    %367 = tpu.concatenate %365, %366 in 1 : vector<8x128xbf16>, vector<8x128xbf16> -> vector<8x256xbf16>
    %c0_89 = arith.constant 0 : index
    %c0_90 = arith.constant 0 : index
    %368 = vector.load %arg7[%c0_89, %c0_90] : memref<256x512xbf16, #tpu.memory_space<vmem>>, vector<256x512xbf16>
    %cst_91 = arith.constant dense<0.000000e+00> : vector<8x512xf32>
    %369 = tpu.matmul %367, %368, %cst_91 {dimension_numbers = #tpu.dot_dimension_numbers<[1], [0], [0], [1], [0, 0, 1, 1], [], []>} : vector<8x256xbf16>, vector<256x512xbf16>, vector<8x512xf32> -> vector<8x512xf32>
    %370 = vector.broadcast %11 : vector<1x512xf32> to vector<8x512xf32>
    %371 = arith.addf %369, %370 : vector<8x512xf32>
    %372 = vector.extract_strided_slice %371 {offsets = [0, 0], sizes = [8, 128], strides = [1, 1]} : vector<8x512xf32> to vector<8x128xf32>
    %373 = arith.negf %372 : vector<8x128xf32>
    %374 = math.exp %373 : vector<8x128xf32>
    %cst_92 = arith.constant 1.000000e+00 : f32
    %375 = vector.broadcast %cst_92 : f32 to vector<8x128xf32>
    %376 = arith.addf %375, %374 : vector<8x128xf32>
    %377 = arith.divf %375, %376 : vector<8x128xf32>
    %378 = vector.extract_strided_slice %371 {offsets = [0, 128], sizes = [8, 128], strides = [1, 1]} : vector<8x512xf32> to vector<8x128xf32>
    %379 = arith.negf %378 : vector<8x128xf32>
    %380 = math.exp %379 : vector<8x128xf32>
    %cst_93 = arith.constant 1.000000e+00 : f32
    %381 = vector.broadcast %cst_93 : f32 to vector<8x128xf32>
    %382 = arith.addf %381, %380 : vector<8x128xf32>
    %383 = arith.divf %381, %382 : vector<8x128xf32>
    %384 = vector.extract_strided_slice %371 {offsets = [0, 256], sizes = [8, 128], strides = [1, 1]} : vector<8x512xf32> to vector<8x128xf32>
    %385 = vector.extract_strided_slice %371 {offsets = [0, 384], sizes = [8, 128], strides = [1, 1]} : vector<8x512xf32> to vector<8x128xf32>
    %386 = arith.mulf %383, %385 : vector<8x128xf32>
    %387 = arith.addf %384, %386 : vector<8x128xf32>
    %388 = math.tanh %387 : vector<8x128xf32>
    %cst_94 = arith.constant 1.000000e+00 : f32
    %389 = vector.broadcast %cst_94 : f32 to vector<8x128xf32>
    %390 = arith.subf %389, %377 : vector<8x128xf32>
    %391 = arith.mulf %390, %388 : vector<8x128xf32>
    %392 = arith.mulf %377, %335 : vector<8x128xf32>
    %393 = arith.addf %391, %392 : vector<8x128xf32>
    %394 = arith.truncf %393 : vector<8x128xf32> to vector<8x128xbf16>
    %395 = arith.truncf %364 : vector<8x128xf32> to vector<8x128xbf16>
    %396 = tpu.concatenate %394, %395 in 1 : vector<8x128xbf16>, vector<8x128xbf16> -> vector<8x256xbf16>
    %c0_95 = arith.constant 0 : index
    %c0_96 = arith.constant 0 : index
    %397 = vector.load %arg9[%c0_95, %c0_96] : memref<256x512xbf16, #tpu.memory_space<vmem>>, vector<256x512xbf16>
    %cst_97 = arith.constant dense<0.000000e+00> : vector<8x512xf32>
    %398 = tpu.matmul %396, %397, %cst_97 {dimension_numbers = #tpu.dot_dimension_numbers<[1], [0], [0], [1], [0, 0, 1, 1], [], []>} : vector<8x256xbf16>, vector<256x512xbf16>, vector<8x512xf32> -> vector<8x512xf32>
    %399 = vector.broadcast %12 : vector<1x512xf32> to vector<8x512xf32>
    %400 = arith.addf %398, %399 : vector<8x512xf32>
    %401 = vector.extract_strided_slice %400 {offsets = [0, 0], sizes = [8, 128], strides = [1, 1]} : vector<8x512xf32> to vector<8x128xf32>
    %402 = arith.negf %401 : vector<8x128xf32>
    %403 = math.exp %402 : vector<8x128xf32>
    %cst_98 = arith.constant 1.000000e+00 : f32
    %404 = vector.broadcast %cst_98 : f32 to vector<8x128xf32>
    %405 = arith.addf %404, %403 : vector<8x128xf32>
    %406 = arith.divf %404, %405 : vector<8x128xf32>
    %407 = vector.extract_strided_slice %400 {offsets = [0, 128], sizes = [8, 128], strides = [1, 1]} : vector<8x512xf32> to vector<8x128xf32>
    %408 = arith.negf %407 : vector<8x128xf32>
    %409 = math.exp %408 : vector<8x128xf32>
    %cst_99 = arith.constant 1.000000e+00 : f32
    %410 = vector.broadcast %cst_99 : f32 to vector<8x128xf32>
    %411 = arith.addf %410, %409 : vector<8x128xf32>
    %412 = arith.divf %410, %411 : vector<8x128xf32>
    %413 = vector.extract_strided_slice %400 {offsets = [0, 256], sizes = [8, 128], strides = [1, 1]} : vector<8x512xf32> to vector<8x128xf32>
    %414 = vector.extract_strided_slice %400 {offsets = [0, 384], sizes = [8, 128], strides = [1, 1]} : vector<8x512xf32> to vector<8x128xf32>
    %415 = arith.mulf %412, %414 : vector<8x128xf32>
    %416 = arith.addf %413, %415 : vector<8x128xf32>
    %417 = math.tanh %416 : vector<8x128xf32>
    %cst_100 = arith.constant 1.000000e+00 : f32
    %418 = vector.broadcast %cst_100 : f32 to vector<8x128xf32>
    %419 = arith.subf %418, %406 : vector<8x128xf32>
    %420 = arith.mulf %419, %417 : vector<8x128xf32>
    %421 = arith.mulf %406, %364 : vector<8x128xf32>
    %422 = arith.addf %420, %421 : vector<8x128xf32>
    %423 = vector.extract_strided_slice %10 {offsets = [56, 0], sizes = [8, 128], strides = [1, 1]} : vector<64x128xbf16> to vector<8x128xbf16>
    %424 = arith.truncf %393 : vector<8x128xf32> to vector<8x128xbf16>
    %425 = tpu.concatenate %423, %424 in 1 : vector<8x128xbf16>, vector<8x128xbf16> -> vector<8x256xbf16>
    %c0_101 = arith.constant 0 : index
    %c0_102 = arith.constant 0 : index
    %426 = vector.load %arg7[%c0_101, %c0_102] : memref<256x512xbf16, #tpu.memory_space<vmem>>, vector<256x512xbf16>
    %cst_103 = arith.constant dense<0.000000e+00> : vector<8x512xf32>
    %427 = tpu.matmul %425, %426, %cst_103 {dimension_numbers = #tpu.dot_dimension_numbers<[1], [0], [0], [1], [0, 0, 1, 1], [], []>} : vector<8x256xbf16>, vector<256x512xbf16>, vector<8x512xf32> -> vector<8x512xf32>
    %428 = vector.broadcast %11 : vector<1x512xf32> to vector<8x512xf32>
    %429 = arith.addf %427, %428 : vector<8x512xf32>
    %430 = vector.extract_strided_slice %429 {offsets = [0, 0], sizes = [8, 128], strides = [1, 1]} : vector<8x512xf32> to vector<8x128xf32>
    %431 = arith.negf %430 : vector<8x128xf32>
    %432 = math.exp %431 : vector<8x128xf32>
    %cst_104 = arith.constant 1.000000e+00 : f32
    %433 = vector.broadcast %cst_104 : f32 to vector<8x128xf32>
    %434 = arith.addf %433, %432 : vector<8x128xf32>
    %435 = arith.divf %433, %434 : vector<8x128xf32>
    %436 = vector.extract_strided_slice %429 {offsets = [0, 128], sizes = [8, 128], strides = [1, 1]} : vector<8x512xf32> to vector<8x128xf32>
    %437 = arith.negf %436 : vector<8x128xf32>
    %438 = math.exp %437 : vector<8x128xf32>
    %cst_105 = arith.constant 1.000000e+00 : f32
    %439 = vector.broadcast %cst_105 : f32 to vector<8x128xf32>
    %440 = arith.addf %439, %438 : vector<8x128xf32>
    %441 = arith.divf %439, %440 : vector<8x128xf32>
    %442 = vector.extract_strided_slice %429 {offsets = [0, 256], sizes = [8, 128], strides = [1, 1]} : vector<8x512xf32> to vector<8x128xf32>
    %443 = vector.extract_strided_slice %429 {offsets = [0, 384], sizes = [8, 128], strides = [1, 1]} : vector<8x512xf32> to vector<8x128xf32>
    %444 = arith.mulf %441, %443 : vector<8x128xf32>
    %445 = arith.addf %442, %444 : vector<8x128xf32>
    %446 = math.tanh %445 : vector<8x128xf32>
    %cst_106 = arith.constant 1.000000e+00 : f32
    %447 = vector.broadcast %cst_106 : f32 to vector<8x128xf32>
    %448 = arith.subf %447, %435 : vector<8x128xf32>
    %449 = arith.mulf %448, %446 : vector<8x128xf32>
    %450 = arith.mulf %435, %393 : vector<8x128xf32>
    %451 = arith.addf %449, %450 : vector<8x128xf32>
    %452 = arith.truncf %451 : vector<8x128xf32> to vector<8x128xbf16>
    %453 = arith.truncf %422 : vector<8x128xf32> to vector<8x128xbf16>
    %454 = tpu.concatenate %452, %453 in 1 : vector<8x128xbf16>, vector<8x128xbf16> -> vector<8x256xbf16>
    %c0_107 = arith.constant 0 : index
    %c0_108 = arith.constant 0 : index
    %455 = vector.load %arg9[%c0_107, %c0_108] : memref<256x512xbf16, #tpu.memory_space<vmem>>, vector<256x512xbf16>
    %cst_109 = arith.constant dense<0.000000e+00> : vector<8x512xf32>
    %456 = tpu.matmul %454, %455, %cst_109 {dimension_numbers = #tpu.dot_dimension_numbers<[1], [0], [0], [1], [0, 0, 1, 1], [], []>} : vector<8x256xbf16>, vector<256x512xbf16>, vector<8x512xf32> -> vector<8x512xf32>
    %457 = vector.broadcast %12 : vector<1x512xf32> to vector<8x512xf32>
    %458 = arith.addf %456, %457 : vector<8x512xf32>
    %459 = vector.extract_strided_slice %458 {offsets = [0, 0], sizes = [8, 128], strides = [1, 1]} : vector<8x512xf32> to vector<8x128xf32>
    %460 = arith.negf %459 : vector<8x128xf32>
    %461 = math.exp %460 : vector<8x128xf32>
    %cst_110 = arith.constant 1.000000e+00 : f32
    %462 = vector.broadcast %cst_110 : f32 to vector<8x128xf32>
    %463 = arith.addf %462, %461 : vector<8x128xf32>
    %464 = arith.divf %462, %463 : vector<8x128xf32>
    %465 = vector.extract_strided_slice %458 {offsets = [0, 128], sizes = [8, 128], strides = [1, 1]} : vector<8x512xf32> to vector<8x128xf32>
    %466 = arith.negf %465 : vector<8x128xf32>
    %467 = math.exp %466 : vector<8x128xf32>
    %cst_111 = arith.constant 1.000000e+00 : f32
    %468 = vector.broadcast %cst_111 : f32 to vector<8x128xf32>
    %469 = arith.addf %468, %467 : vector<8x128xf32>
    %470 = arith.divf %468, %469 : vector<8x128xf32>
    %471 = vector.extract_strided_slice %458 {offsets = [0, 256], sizes = [8, 128], strides = [1, 1]} : vector<8x512xf32> to vector<8x128xf32>
    %472 = vector.extract_strided_slice %458 {offsets = [0, 384], sizes = [8, 128], strides = [1, 1]} : vector<8x512xf32> to vector<8x128xf32>
    %473 = arith.mulf %470, %472 : vector<8x128xf32>
    %474 = arith.addf %471, %473 : vector<8x128xf32>
    %475 = math.tanh %474 : vector<8x128xf32>
    %cst_112 = arith.constant 1.000000e+00 : f32
    %476 = vector.broadcast %cst_112 : f32 to vector<8x128xf32>
    %477 = arith.subf %476, %464 : vector<8x128xf32>
    %478 = arith.mulf %477, %475 : vector<8x128xf32>
    %479 = arith.mulf %464, %422 : vector<8x128xf32>
    %480 = arith.addf %478, %479 : vector<8x128xf32>
    %c0_113 = arith.constant 0 : index
    %c0_114 = arith.constant 0 : index
    %c0_115 = arith.constant 0 : index
    %481 = vector.load %arg18[%c0_113, %c0_114, %c0_115] : memref<1x8x128xf32, #tpu.memory_space<vmem>>, vector<1x8x128xf32>
    %482 = vector.shape_cast %481 : vector<1x8x128xf32> to vector<8x128xf32>
    %483 = vector.shape_cast %451 : vector<8x128xf32> to vector<1x8x128xf32>
    tpu.vector_store %arg18[%c0_113, %c0_114, %c0_115], %483 {strides = array<i32>} : memref<1x8x128xf32, #tpu.memory_space<vmem>>, vector<1x8x128xf32>,
    %c0_116 = arith.constant 0 : index
    %c0_117 = arith.constant 0 : index
    %c0_118 = arith.constant 0 : index
    %484 = vector.load %arg19[%c0_116, %c0_117, %c0_118] : memref<1x8x128xf32, #tpu.memory_space<vmem>>, vector<1x8x128xf32>
    %485 = vector.shape_cast %484 : vector<1x8x128xf32> to vector<8x128xf32>
    %486 = vector.shape_cast %480 : vector<8x128xf32> to vector<1x8x128xf32>
    tpu.vector_store %arg19[%c0_116, %c0_117, %c0_118], %486 {strides = array<i32>} : memref<1x8x128xf32, #tpu.memory_space<vmem>>, vector<1x8x128xf32>,
    %487 = tpu.concatenate %74, %132, %190, %248, %306, %364, %422, %480 in 0 : vector<8x128xf32>, vector<8x128xf32>, vector<8x128xf32>, vector<8x128xf32>, vector<8x128xf32>, vector<8x128xf32>, vector<8x128xf32>, vector<8x128xf32> -> vector<64x128xf32>
    %488 = arith.truncf %487 : vector<64x128xf32> to vector<64x128xbf16>
    %c0_119 = arith.constant 0 : index
    %c0_120 = arith.constant 0 : index
    %489 = vector.load %arg11[%c0_119, %c0_120] : memref<128x256xbf16, #tpu.memory_space<vmem>>, vector<128x256xbf16>
    %cst_121 = arith.constant dense<0.000000e+00> : vector<64x256xf32>
    %490 = tpu.matmul %488, %489, %cst_121 {dimension_numbers = #tpu.dot_dimension_numbers<[1], [0], [0], [1], [0, 0, 1, 1], [], []>} : vector<64x128xbf16>, vector<128x256xbf16>, vector<64x256xf32> -> vector<64x256xf32>
    %c0_122 = arith.constant 0 : index
    %c0_123 = arith.constant 0 : index
    %491 = vector.load %arg12[%c0_122, %c0_123] : memref<1x256xf32, #tpu.memory_space<vmem>>, vector<1x256xf32>
    %492 = vector.broadcast %491 : vector<1x256xf32> to vector<64x256xf32>
    %493 = arith.addf %490, %492 : vector<64x256xf32>
    %cst_124 = arith.constant 0.000000e+00 : f32
    %494 = vector.broadcast %cst_124 : f32 to vector<64x256xf32>
    %495 = arith.maximumf %493, %494 : vector<64x256xf32>
    %496 = arith.truncf %495 : vector<64x256xf32> to vector<64x256xbf16>
    %c0_125 = arith.constant 0 : index
    %c0_126 = arith.constant 0 : index
    %497 = vector.load %arg13[%c0_125, %c0_126] : memref<256x256xbf16, #tpu.memory_space<vmem>>, vector<256x256xbf16>
    %cst_127 = arith.constant dense<0.000000e+00> : vector<64x256xf32>
    %498 = tpu.matmul %496, %497, %cst_127 {dimension_numbers = #tpu.dot_dimension_numbers<[1], [0], [0], [1], [0, 0, 1, 1], [], []>} : vector<64x256xbf16>, vector<256x256xbf16>, vector<64x256xf32> -> vector<64x256xf32>
    %c0_128 = arith.constant 0 : index
    %c0_129 = arith.constant 0 : index
    %499 = vector.load %arg14[%c0_128, %c0_129] : memref<1x256xf32, #tpu.memory_space<vmem>>, vector<1x256xf32>
    %500 = vector.broadcast %499 : vector<1x256xf32> to vector<64x256xf32>
    %501 = arith.addf %498, %500 : vector<64x256xf32>
    %cst_130 = arith.constant 0.000000e+00 : f32
    %502 = vector.broadcast %cst_130 : f32 to vector<64x256xf32>
    %503 = arith.maximumf %501, %502 : vector<64x256xf32>
    %504 = arith.truncf %503 : vector<64x256xf32> to vector<64x256xbf16>
    %c0_131 = arith.constant 0 : index
    %c0_132 = arith.constant 0 : index
    %505 = vector.load %arg15[%c0_131, %c0_132] : memref<256x128xbf16, #tpu.memory_space<vmem>>, vector<256x128xbf16>
    %cst_133 = arith.constant dense<0.000000e+00> : vector<64x128xf32>
    %506 = tpu.matmul %504, %505, %cst_133 {dimension_numbers = #tpu.dot_dimension_numbers<[1], [0], [0], [1], [0, 0, 1, 1], [], []>} : vector<64x256xbf16>, vector<256x128xbf16>, vector<64x128xf32> -> vector<64x128xf32>
    %c0_134 = arith.constant 0 : index
    %c0_135 = arith.constant 0 : index
    %507 = vector.load %arg16[%c0_134, %c0_135] : memref<1x128xf32, #tpu.memory_space<vmem>>, vector<1x128xf32>
    %508 = vector.broadcast %507 : vector<1x128xf32> to vector<64x128xf32>
    %509 = arith.addf %506, %508 : vector<64x128xf32>
    %510 = arith.negf %509 : vector<64x128xf32>
    %511 = math.exp %510 : vector<64x128xf32>
    %cst_136 = arith.constant 1.000000e+00 : f32
    %512 = vector.broadcast %cst_136 : f32 to vector<64x128xf32>
    %513 = arith.addf %512, %511 : vector<64x128xf32>
    %514 = arith.divf %512, %513 : vector<64x128xf32>
    %c0_137 = arith.constant 0 : index
    %c0_138 = arith.constant 0 : index
    %c0_139 = arith.constant 0 : index
    %515 = vector.load %arg17[%c0_137, %c0_138, %c0_139] : memref<1x64x128xf32, #tpu.memory_space<vmem>>, vector<1x64x128xf32>
    %516 = vector.shape_cast %515 : vector<1x64x128xf32> to vector<64x128xf32>
    %517 = vector.shape_cast %514 : vector<64x128xf32> to vector<1x64x128xf32>
    tpu.vector_store %arg17[%c0_137, %c0_138, %c0_139], %517 {strides = array<i32>} : memref<1x64x128xf32, #tpu.memory_space<vmem>>, vector<1x64x128xf32>,
    return
  }
  func.func @transform_0(%arg0: i32, %arg1: i32) -> (i32, i32, i32) {
    %c0_i32 = arith.constant 0 : i32
    %c0_i32_0 = arith.constant 0 : i32
    return %arg0, %arg1, %c0_i32 : i32, i32, i32
  }
  func.func @transform_1(%arg0: i32, %arg1: i32) -> (i32, i32, i32) {
    %c0_i32 = arith.constant 0 : i32
    %c0_i32_0 = arith.constant 0 : i32
    %c0_i32_1 = arith.constant 0 : i32
    return %arg0, %c0_i32, %c0_i32_0 : i32, i32, i32
  }
  func.func @transform_2(%arg0: i32, %arg1: i32) -> (i32, i32, i32) {
    %c0_i32 = arith.constant 0 : i32
    %c0_i32_0 = arith.constant 0 : i32
    %c0_i32_1 = arith.constant 0 : i32
    return %arg0, %c0_i32, %c0_i32_0 : i32, i32, i32
  }
  func.func @transform_3(%arg0: i32, %arg1: i32) -> (i32, i32) {
    %c0_i32 = arith.constant 0 : i32
    %c0_i32_0 = arith.constant 0 : i32
    %c0_i32_1 = arith.constant 0 : i32
    return %c0_i32, %c0_i32_0 : i32, i32
  }
  func.func @transform_4(%arg0: i32, %arg1: i32) -> (i32, i32) {
    %c0_i32 = arith.constant 0 : i32
    %c0_i32_0 = arith.constant 0 : i32
    %c0_i32_1 = arith.constant 0 : i32
    return %c0_i32, %c0_i32_0 : i32, i32
  }
  func.func @transform_5(%arg0: i32, %arg1: i32) -> (i32, i32) {
    %c0_i32 = arith.constant 0 : i32
    %c0_i32_0 = arith.constant 0 : i32
    %c0_i32_1 = arith.constant 0 : i32
    return %c0_i32, %c0_i32_0 : i32, i32
  }
  func.func @transform_6(%arg0: i32, %arg1: i32) -> (i32, i32) {
    %c0_i32 = arith.constant 0 : i32
    %c0_i32_0 = arith.constant 0 : i32
    %c0_i32_1 = arith.constant 0 : i32
    return %c0_i32, %c0_i32_0 : i32, i32
  }
  func.func @transform_7(%arg0: i32, %arg1: i32) -> (i32, i32) {
    %c0_i32 = arith.constant 0 : i32
    %c0_i32_0 = arith.constant 0 : i32
    %c0_i32_1 = arith.constant 0 : i32
    return %c0_i32, %c0_i32_0 : i32, i32
  }
  func.func @transform_8(%arg0: i32, %arg1: i32) -> (i32, i32) {
    %c0_i32 = arith.constant 0 : i32
    %c0_i32_0 = arith.constant 0 : i32
    %c0_i32_1 = arith.constant 0 : i32
    return %c0_i32, %c0_i32_0 : i32, i32
  }
  func.func @transform_9(%arg0: i32, %arg1: i32) -> (i32, i32) {
    %c0_i32 = arith.constant 0 : i32
    %c0_i32_0 = arith.constant 0 : i32
    %c0_i32_1 = arith.constant 0 : i32
    return %c0_i32, %c0_i32_0 : i32, i32
  }
  func.func @transform_10(%arg0: i32, %arg1: i32) -> (i32, i32) {
    %c0_i32 = arith.constant 0 : i32
    %c0_i32_0 = arith.constant 0 : i32
    %c0_i32_1 = arith.constant 0 : i32
    return %c0_i32, %c0_i32_0 : i32, i32
  }
  func.func @transform_11(%arg0: i32, %arg1: i32) -> (i32, i32) {
    %c0_i32 = arith.constant 0 : i32
    %c0_i32_0 = arith.constant 0 : i32
    %c0_i32_1 = arith.constant 0 : i32
    return %c0_i32, %c0_i32_0 : i32, i32
  }
  func.func @transform_12(%arg0: i32, %arg1: i32) -> (i32, i32) {
    %c0_i32 = arith.constant 0 : i32
    %c0_i32_0 = arith.constant 0 : i32
    %c0_i32_1 = arith.constant 0 : i32
    return %c0_i32, %c0_i32_0 : i32, i32
  }
  func.func @transform_13(%arg0: i32, %arg1: i32) -> (i32, i32) {
    %c0_i32 = arith.constant 0 : i32
    %c0_i32_0 = arith.constant 0 : i32
    %c0_i32_1 = arith.constant 0 : i32
    return %c0_i32, %c0_i32_0 : i32, i32
  }
  func.func @transform_14(%arg0: i32, %arg1: i32) -> (i32, i32) {
    %c0_i32 = arith.constant 0 : i32
    %c0_i32_0 = arith.constant 0 : i32
    %c0_i32_1 = arith.constant 0 : i32
    return %c0_i32, %c0_i32_0 : i32, i32
  }
  func.func @transform_15(%arg0: i32, %arg1: i32) -> (i32, i32, i32) {
    %c0_i32 = arith.constant 0 : i32
    %c0_i32_0 = arith.constant 0 : i32
    return %arg0, %arg1, %c0_i32 : i32, i32, i32
  }
  func.func @transform_16(%arg0: i32, %arg1: i32) -> (i32, i32, i32) {
    %c0_i32 = arith.constant 0 : i32
    %c0_i32_0 = arith.constant 0 : i32
    %c0_i32_1 = arith.constant 0 : i32
    return %arg0, %c0_i32, %c0_i32_0 : i32, i32, i32
  }
  func.func @transform_17(%arg0: i32, %arg1: i32) -> (i32, i32, i32) {
    %c0_i32 = arith.constant 0 : i32
    %c0_i32_0 = arith.constant 0 : i32
    %c0_i32_1 = arith.constant 0 : i32
    return %arg0, %c0_i32, %c0_i32_0 : i32, i32, i32
  }
}

</mosaic_0001>

<llo_original>
// kernel: tpu_custom_call.1
$region0: #{tpu_custom_call.1}
  #allocation0 [shape = 'u32[]', space=smem, size = 0x4, offset = 0x4, fixed_abs, tag = 'smem constant byte address 0x4 - core index']
  #allocation1 [shape = 'u32[72,128]{1,0:T(1,128)}', space=vmem, size = 0x9000, scoped, tag = 'internal scratch']
  %s0 = inlined_call_operand.hbm [shape: bf16[2,128,128], index: 0, kind: input, shape index: {}]
  %s1 = inlined_call_operand.hbm [shape: f32[2,8,128], index: 1, kind: input, shape index: {}]
  %s2 = inlined_call_operand.hbm [shape: f32[2,8,128], index: 2, kind: input, shape index: {}]
  %s3 = inlined_call_operand.hbm [shape: bf16[128,128], index: 3, kind: input, shape index: {}]
  %s4 = inlined_call_operand.hbm [shape: f32[1,128], index: 4, kind: input, shape index: {}]
  %s5 = inlined_call_operand.hbm [shape: bf16[256,512], index: 5, kind: input, shape index: {}]
  %s6 = inlined_call_operand.vmem [shape: f32[1,512], index: 6, kind: input, shape index: {}]
  %s7 = inlined_call_operand.hbm [shape: bf16[256,512], index: 7, kind: input, shape index: {}]
  %s8 = inlined_call_operand.hbm [shape: f32[1,512], index: 8, kind: input, shape index: {}]
  %s9 = inlined_call_operand.hbm [shape: bf16[128,256], index: 9, kind: input, shape index: {}]
  %s10 = inlined_call_operand.vmem [shape: f32[1,256], index: 10, kind: input, shape index: {}]
  %s11 = inlined_call_operand.hbm [shape: bf16[256,256], index: 11, kind: input, shape index: {}]
  %s12 = inlined_call_operand.vmem [shape: f32[1,256], index: 12, kind: input, shape index: {}]
  %s13 = inlined_call_operand.hbm [shape: bf16[256,128], index: 13, kind: input, shape index: {}]
  %s14 = inlined_call_operand.vmem [shape: f32[1,128], index: 14, kind: input, shape index: {}]
  %s15 = inlined_call_operand.hbm [shape: f32[2,128,128], index: 15, kind: output, shape index: {0}]
  %s16 = inlined_call_operand.hbm [shape: f32[2,8,128], index: 16, kind: output, shape index: {1}]
  %s17 = inlined_call_operand.hbm [shape: f32[2,8,128], index: 17, kind: output, shape index: {2}]
  %18 = xla_tuple %s15, %s16, %s17
  %s19 = sld [smem:[#allocation0]]
  $region157: #{tpu_custom_call.1} parent=0
    _
  %s21 = ssub.s32 1, %s19
  %s22 = scalar_select 0, %s21, %s19
  $region1: #{tpu_custom_call.1} parent=0
    #allocation2 [shape = 'u8[32768]{0}', space=vmem, size = 0x8000, scoped, tag = 'input window, operand 0']
    #allocation3 [shape = 's32[2]{0}', space=sflag, size = 0x8, scoped, tag = 'scoped memory for tpu_custom_call.1']
    #allocation4 [shape = 's32[2]{0}', space=sflag, size = 0x8, scoped, tag = 'scoped memory for tpu_custom_call.1']
    #allocation5 [shape = 'u8[8192]{0}', space=vmem, size = 0x2000, scoped, tag = 'input window, operand 1']
    #allocation6 [shape = 's32[2]{0}', space=sflag, size = 0x8, scoped, tag = 'scoped memory for tpu_custom_call.1']
    #allocation7 [shape = 'u8[8192]{0}', space=vmem, size = 0x2000, scoped, tag = 'input window, operand 2']
    #allocation8 [shape = 'u8[32768]{0}', space=vmem, size = 0x8000, scoped, tag = 'input window, operand 3, single buffered']
    #allocation9 [shape = 's32[1]{0}', space=sflag, size = 0x4, scoped, tag = 'scoped memory for tpu_custom_call.1']
    #allocation10 [shape = 'u8[512]{0}', space=vmem, size = 0x400, scoped, tag = 'input window, operand 4, single buffered']
    #allocation11 [shape = 'u8[262144]{0}', space=vmem, size = 0x40000, scoped, tag = 'input window, operand 5, single buffered']
    #allocation12 [shape = 's32[1]{0}', space=sflag, size = 0x4, scoped, tag = 'scoped memory for tpu_custom_call.1']
    #allocation13 [shape = 'u8[262144]{0}', space=vmem, size = 0x40000, scoped, tag = 'input window, operand 7, single buffered']
    #allocation14 [shape = 'u8[2048]{0}', space=vmem, size = 0x800, scoped, tag = 'input window, operand 8, single buffered']
    #allocation15 [shape = 's32[1]{0}', space=sflag, size = 0x4, scoped, tag = 'scoped memory for tpu_custom_call.1']
    #allocation16 [shape = 'u8[65536]{0}', space=vmem, size = 0x10000, scoped, tag = 'input window, operand 9, single buffered']
    #allocation17 [shape = 'u8[131072]{0}', space=vmem, size = 0x20000, scoped, tag = 'input window, operand 11, single buffered']
    #allocation18 [shape = 's32[1]{0}', space=sflag, size = 0x4, scoped, tag = 'scoped memory for tpu_custom_call.1']
    #allocation19 [shape = 'u8[65536]{0}', space=vmem, size = 0x10000, scoped, tag = 'input window, operand 13, single buffered']
    #allocation20 [shape = 'u8[65536]{0}', space=vmem, size = 0x10000, scoped, tag = 'output window, operand 0']
    #allocation21 [shape = 'u8[8192]{0}', space=vmem, size = 0x2000, scoped, tag = 'output window, operand 1']
    #allocation22 [shape = 's32[2]{0}', space=sflag, size = 0x8, scoped, tag = 'scoped memory for tpu_custom_call.1']
    #allocation23 [shape = 'u8[8192]{0}', space=vmem, size = 0x2000, scoped, tag = 'output window, operand 2']
    %23 = vsyncpa [#allocation3], 0
    %s24 = scalar_lea.sflag [#allocation3], 1
    %25 = vsyncpa %s24, 0
    %26 = vsyncpa [#allocation6], 0
    %s27 = scalar_lea.sflag [#allocation6], 1
    %28 = vsyncpa %s27, 0
    %29 = vsyncpa [#allocation9], 0
    %30 = vsyncpa [#allocation12], 0
    %31 = vsyncpa [#allocation15], 0
    %32 = vsyncpa [#allocation18], 0
    %33 = vsyncpa [#allocation4], 0
    %s34 = scalar_lea.sflag [#allocation4], 1
    %35 = vsyncpa %s34, 0
    %36 = vsyncpa [#allocation22], 0
    %s37 = scalar_lea.sflag [#allocation22], 1
    %38 = vsyncpa %s37, 0
    loop: start=0, step=1, limit=6
    $region2: #{tpu_custom_call.1} parent=1 // loop_pre_header
      _
    $region3: #{tpu_custom_call.1} parent=1 // loop_header
      %s40 = sphi 0, %s44
      %p41 = scmp.ge.s32.totalorder %s40, 6
      %s47 = sphi 0, %s59
      %s48 = sphi 0, %s55
      %s49 = sphi 0, %s47
      %s50 = sphi 0, %s48
      %s51 = sphi 0, %s49
      %s52 = sphi 0, %s50
      %s64 = sphi 0, %s66
      %s67 = sphi 0, %s64
      %s68 = sphi 0, %s67
      %s84 = sphi 0, %s68
      %s90 = sphi 0, %s92
      %s93 = sphi 0, %s90
      %s94 = sphi 0, %s93
      %s110 = sphi 0, %s94
      %s116 = sphi 0, %s118
      %s119 = sphi 0, %s116
      %s120 = sphi 0, %s119
      %s136 = sphi 0, %s120
      %s140 = sphi 0, %s140
      %s142 = sphi 0, %s140
      %s143 = sphi 0, %s142
      %s157 = sphi 0, %s143
      %s161 = sphi 0, %s161
      %s163 = sphi 0, %s161
      %s164 = sphi 0, %s163
      %s178 = sphi 0, %s164
      %s182 = sphi 0, %s182
      %s184 = sphi 0, %s182
      %s185 = sphi 0, %s184
      %s199 = sphi 0, %s185
      %s203 = sphi 0, %s203
      %s205 = sphi 0, %s203
      %s206 = sphi 0, %s205
      %s220 = sphi 0, %s206
      %s224 = sphi 0, %s224
      %s226 = sphi 0, %s224
      %s227 = sphi 0, %s226
      %s241 = sphi 0, %s227
      %s245 = sphi 0, %s245
      %s247 = sphi 0, %s245
      %s248 = sphi 0, %s247
      %s262 = sphi 0, %s248
      %s266 = sphi 0, %s266
      %s268 = sphi 0, %s266
      %s269 = sphi 0, %s268
      %s283 = sphi 0, %s269
      %s287 = sphi 0, %s287
      %s289 = sphi 0, %s287
      %s290 = sphi 0, %s289
      %s304 = sphi 0, %s290
      %s308 = sphi 0, %s308
      %s310 = sphi 0, %s308
      %s311 = sphi 0, %s310
      %s325 = sphi 0, %s311
      %s329 = sphi 0, %s329
      %s331 = sphi 0, %s329
      %s332 = sphi 0, %s331
      %s346 = sphi 0, %s332
      %s350 = sphi 0, %s350
      %s352 = sphi 0, %s350
      %s353 = sphi 0, %s352
      %s367 = sphi 0, %s353
      %s371 = sphi 0, %s371
      %s373 = sphi 0, %s371
      %s374 = sphi 0, %s373
      %s388 = sphi 0, %s374
      %s396 = sphi 0, %s398
      %s399 = sphi 0, %s396
      %s400 = sphi 0, %s399
      %s416 = sphi 0, %s400
      %s422 = sphi 0, %s424
      %s425 = sphi 0, %s422
      %s426 = sphi 0, %s425
      %s442 = sphi 0, %s426
      %s448 = sphi 0, %s450
      %s451 = sphi 0, %s448
      %s452 = sphi 0, %s451
      %s468 = sphi 0, %s452
    $region4: #{tpu_custom_call.1} parent=1 // loop_header_branch
      %43 = sbr.rel (%p41) target = $region8
    $region5: #{tpu_custom_call.1} parent=1 // loop_body
      %s45 = ssub.s32 %s40, 1
      %s46 = ssub.s32 %s40, 2
      %s53 = sadd.s32 1, %s48
      %p54 = scmp.ge.s32.totalorder %s53, 2
      %s55 = scalar_select %p54, 0, %s53
      %s56 = sadd.s32 1, %s47
      %s57 = scalar_select %p54, %s56, %s47
      %p58 = scmp.ge.s32.totalorder %s57, 2
      %s59 = scalar_select %p58, 0, %s57
      %s60 = ssub.s32 %s47, %s59
      %s61 = ssub.s32 %s48, %s55
      %s62 = sor.u32 %s60, %s61
      %p63 = scmp.eq.s32.totalorder %s62, 0
      %s65 = sadd.s32 %s64, 1
      %s66 = scalar_select %p63, %s64, %s65
      %p69 = pneg %p63
      %p70 = scmp.eq.s32.totalorder %s40, 3
      %p71 = por %p69, %p70
      %p72 = scmp.ne.s32.totalorder %s64, %s67
      %p73 = scmp.eq.s32.totalorder %s40, 0
      %p74 = por %p72, %p73
      %p75 = scmp.ne.s32.totalorder %s64, %s67
      %p76 = scmp.eq.s32.totalorder %s45, 3
      %p77 = por %p75, %p76
      %p78 = scmp.ne.s32.totalorder %s67, %s68
      %p79 = scmp.eq.s32.totalorder %s45, 0
      %p80 = por %p78, %p79
      %p81 = scmp.ne.s32.totalorder %s67, %s68
      %p82 = scmp.eq.s32.totalorder %s46, 3
      %p83 = por %p81, %p82
      %p85 = scmp.ne.s32.totalorder %s68, %s84
      %p86 = scmp.eq.s32.totalorder %s46, 0
      %p87 = por %p85, %p86
      %s88 = ssub.s32 %s47, %s59
      %p89 = scmp.eq.s32.totalorder %s88, 0
      %s91 = sadd.s32 %s90, 1
      %s92 = scalar_select %p89, %s90, %s91
      %p95 = pneg %p89
      %p96 = scmp.eq.s32.totalorder %s40, 3
      %p97 = por %p95, %p96
      %p98 = scmp.ne.s32.totalorder %s90, %s93
      %p99 = scmp.eq.s32.totalorder %s40, 0
      %p100 = por %p98, %p99
      %p101 = scmp.ne.s32.totalorder %s90, %s93
      %p102 = scmp.eq.s32.totalorder %s45, 3
      %p103 = por %p101, %p102
      %p104 = scmp.ne.s32.totalorder %s93, %s94
      %p105 = scmp.eq.s32.totalorder %s45, 0
      %p106 = por %p104, %p105
      %p107 = scmp.ne.s32.totalorder %s93, %s94
      %p108 = scmp.eq.s32.totalorder %s46, 3
      %p109 = por %p107, %p108
      %p111 = scmp.ne.s32.totalorder %s94, %s110
      %p112 = scmp.eq.s32.totalorder %s46, 0
      %p113 = por %p111, %p112
      %s114 = ssub.s32 %s47, %s59
      %p115 = scmp.eq.s32.totalorder %s114, 0
      %s117 = sadd.s32 %s116, 1
      %s118 = scalar_select %p115, %s116, %s117
      %p121 = pneg %p115
      %p122 = scmp.eq.s32.totalorder %s40, 3
      %p123 = por %p121, %p122
      %p124 = scmp.ne.s32.totalorder %s116, %s119
      %p125 = scmp.eq.s32.totalorder %s40, 0
      %p126 = por %p124, %p125
      %p127 = scmp.ne.s32.totalorder %s116, %s119
      %p128 = scmp.eq.s32.totalorder %s45, 3
      %p129 = por %p127, %p128
      %p130 = scmp.ne.s32.totalorder %s119, %s120
      %p131 = scmp.eq.s32.totalorder %s45, 0
      %p132 = por %p130, %p131
      %p133 = scmp.ne.s32.totalorder %s119, %s120
      %p134 = scmp.eq.s32.totalorder %s46, 3
      %p135 = por %p133, %p134
      %p137 = scmp.ne.s32.totalorder %s120, %s136
      %p138 = scmp.eq.s32.totalorder %s46, 0
      %p139 = por %p137, %p138
      %s141 = sadd.s32 %s140, 1
      %p144 = scmp.eq.s32.totalorder %s40, 3
      %p145 = scmp.ne.s32.totalorder %s140, %s142
      %p146 = scmp.eq.s32.totalorder %s40, 0
      %p147 = por %p145, %p146
      %p148 = scmp.ne.s32.totalorder %s140, %s142
      %p149 = scmp.eq.s32.totalorder %s45, 3
      %p150 = por %p148, %p149
      %p151 = scmp.ne.s32.totalorder %s142, %s143
      %p152 = scmp.eq.s32.totalorder %s45, 0
      %p153 = por %p151, %p152
      %p154 = scmp.ne.s32.totalorder %s142, %s143
      %p155 = scmp.eq.s32.totalorder %s46, 3
      %p156 = por %p154, %p155
      %p158 = scmp.ne.s32.totalorder %s143, %s157
      %p159 = scmp.eq.s32.totalorder %s46, 0
      %p160 = por %p158, %p159
      %s162 = sadd.s32 %s161, 1
      %p165 = scmp.eq.s32.totalorder %s40, 3
      %p166 = scmp.ne.s32.totalorder %s161, %s163
      %p167 = scmp.eq.s32.totalorder %s40, 0
      %p168 = por %p166, %p167
      %p169 = scmp.ne.s32.totalorder %s161, %s163
      %p170 = scmp.eq.s32.totalorder %s45, 3
      %p171 = por %p169, %p170
      %p172 = scmp.ne.s32.totalorder %s163, %s164
      %p173 = scmp.eq.s32.totalorder %s45, 0
      %p174 = por %p172, %p173
      %p175 = scmp.ne.s32.totalorder %s163, %s164
      %p176 = scmp.eq.s32.totalorder %s46, 3
      %p177 = por %p175, %p176
      %p179 = scmp.ne.s32.totalorder %s164, %s178
      %p180 = scmp.eq.s32.totalorder %s46, 0
      %p181 = por %p179, %p180
      %s183 = sadd.s32 %s182, 1
      %p186 = scmp.eq.s32.totalorder %s40, 3
      %p187 = scmp.ne.s32.totalorder %s182, %s184
      %p188 = scmp.eq.s32.totalorder %s40, 0
      %p189 = por %p187, %p188
      %p190 = scmp.ne.s32.totalorder %s182, %s184
      %p191 = scmp.eq.s32.totalorder %s45, 3
      %p192 = por %p190, %p191
      %p193 = scmp.ne.s32.totalorder %s184, %s185
      %p194 = scmp.eq.s32.totalorder %s45, 0
      %p195 = por %p193, %p194
      %p196 = scmp.ne.s32.totalorder %s184, %s185
      %p197 = scmp.eq.s32.totalorder %s46, 3
      %p198 = por %p196, %p197
      %p200 = scmp.ne.s32.totalorder %s185, %s199
      %p201 = scmp.eq.s32.totalorder %s46, 0
      %p202 = por %p200, %p201
      %s204 = sadd.s32 %s203, 1
      %p207 = scmp.eq.s32.totalorder %s40, 3
      %p208 = scmp.ne.s32.totalorder %s203, %s205
      %p209 = scmp.eq.s32.totalorder %s40, 0
      %p210 = por %p208, %p209
      %p211 = scmp.ne.s32.totalorder %s203, %s205
      %p212 = scmp.eq.s32.totalorder %s45, 3
      %p213 = por %p211, %p212
      %p214 = scmp.ne.s32.totalorder %s205, %s206
      %p215 = scmp.eq.s32.totalorder %s45, 0
      %p216 = por %p214, %p215
      %p217 = scmp.ne.s32.totalorder %s205, %s206
      %p218 = scmp.eq.s32.totalorder %s46, 3
      %p219 = por %p217, %p218
      %p221 = scmp.ne.s32.totalorder %s206, %s220
      %p222 = scmp.eq.s32.totalorder %s46, 0
      %p223 = por %p221, %p222
      %s225 = sadd.s32 %s224, 1
      %p228 = scmp.eq.s32.totalorder %s40, 3
      %p229 = scmp.ne.s32.totalorder %s224, %s226
      %p230 = scmp.eq.s32.totalorder %s40, 0
      %p231 = por %p229, %p230
      %p232 = scmp.ne.s32.totalorder %s224, %s226
      %p233 = scmp.eq.s32.totalorder %s45, 3
      %p234 = por %p232, %p233
      %p235 = scmp.ne.s32.totalorder %s226, %s227
      %p236 = scmp.eq.s32.totalorder %s45, 0
      %p237 = por %p235, %p236
      %p238 = scmp.ne.s32.totalorder %s226, %s227
      %p239 = scmp.eq.s32.totalorder %s46, 3
      %p240 = por %p238, %p239
      %p242 = scmp.ne.s32.totalorder %s227, %s241
      %p243 = scmp.eq.s32.totalorder %s46, 0
      %p244 = por %p242, %p243
      %s246 = sadd.s32 %s245, 1
      %p249 = scmp.eq.s32.totalorder %s40, 3
      %p250 = scmp.ne.s32.totalorder %s245, %s247
      %p251 = scmp.eq.s32.totalorder %s40, 0
      %p252 = por %p250, %p251
      %p253 = scmp.ne.s32.totalorder %s245, %s247
      %p254 = scmp.eq.s32.totalorder %s45, 3
      %p255 = por %p253, %p254
      %p256 = scmp.ne.s32.totalorder %s247, %s248
      %p257 = scmp.eq.s32.totalorder %s45, 0
      %p258 = por %p256, %p257
      %p259 = scmp.ne.s32.totalorder %s247, %s248
      %p260 = scmp.eq.s32.totalorder %s46, 3
      %p261 = por %p259, %p260
      %p263 = scmp.ne.s32.totalorder %s248, %s262
      %p264 = scmp.eq.s32.totalorder %s46, 0
      %p265 = por %p263, %p264
      %s267 = sadd.s32 %s266, 1
      %p270 = scmp.eq.s32.totalorder %s40, 3
      %p271 = scmp.ne.s32.totalorder %s266, %s268
      %p272 = scmp.eq.s32.totalorder %s40, 0
      %p273 = por %p271, %p272
      %p274 = scmp.ne.s32.totalorder %s266, %s268
      %p275 = scmp.eq.s32.totalorder %s45, 3
      %p276 = por %p274, %p275
      %p277 = scmp.ne.s32.totalorder %s268, %s269
      %p278 = scmp.eq.s32.totalorder %s45, 0
      %p279 = por %p277, %p278
      %p280 = scmp.ne.s32.totalorder %s268, %s269
      %p281 = scmp.eq.s32.totalorder %s46, 3
      %p282 = por %p280, %p281
      %p284 = scmp.ne.s32.totalorder %s269, %s283
      %p285 = scmp.eq.s32.totalorder %s46, 0
      %p286 = por %p284, %p285
      %s288 = sadd.s32 %s287, 1
      %p291 = scmp.eq.s32.totalorder %s40, 3
      %p292 = scmp.ne.s32.totalorder %s287, %s289
      %p293 = scmp.eq.s32.totalorder %s40, 0
      %p294 = por %p292, %p293
      %p295 = scmp.ne.s32.totalorder %s287, %s289
      %p296 = scmp.eq.s32.totalorder %s45, 3
      %p297 = por %p295, %p296
      %p298 = scmp.ne.s32.totalorder %s289, %s290
      %p299 = scmp.eq.s32.totalorder %s45, 0
      %p300 = por %p298, %p299
      %p301 = scmp.ne.s32.totalorder %s289, %s290
      %p302 = scmp.eq.s32.totalorder %s46, 3
      %p303 = por %p301, %p302
      %p305 = scmp.ne.s32.totalorder %s290, %s304
      %p306 = scmp.eq.s32.totalorder %s46, 0
      %p307 = por %p305, %p306
      %s309 = sadd.s32 %s308, 1
      %p312 = scmp.eq.s32.totalorder %s40, 3
      %p313 = scmp.ne.s32.totalorder %s308, %s310
      %p314 = scmp.eq.s32.totalorder %s40, 0
      %p315 = por %p313, %p314
      %p316 = scmp.ne.s32.totalorder %s308, %s310
      %p317 = scmp.eq.s32.totalorder %s45, 3
      %p318 = por %p316, %p317
      %p319 = scmp.ne.s32.totalorder %s310, %s311
      %p320 = scmp.eq.s32.totalorder %s45, 0
      %p321 = por %p319, %p320
      %p322 = scmp.ne.s32.totalorder %s310, %s311
      %p323 = scmp.eq.s32.totalorder %s46, 3
      %p324 = por %p322, %p323
      %p326 = scmp.ne.s32.totalorder %s311, %s325
      %p327 = scmp.eq.s32.totalorder %s46, 0
      %p328 = por %p326, %p327
      %s330 = sadd.s32 %s329, 1
      %p333 = scmp.eq.s32.totalorder %s40, 3
      %p334 = scmp.ne.s32.totalorder %s329, %s331
      %p335 = scmp.eq.s32.totalorder %s40, 0
      %p336 = por %p334, %p335
      %p337 = scmp.ne.s32.totalorder %s329, %s331
      %p338 = scmp.eq.s32.totalorder %s45, 3
      %p339 = por %p337, %p338
      %p340 = scmp.ne.s32.totalorder %s331, %s332
      %p341 = scmp.eq.s32.totalorder %s45, 0
      %p342 = por %p340, %p341
      %p343 = scmp.ne.s32.totalorder %s331, %s332
      %p344 = scmp.eq.s32.totalorder %s46, 3
      %p345 = por %p343, %p344
      %p347 = scmp.ne.s32.totalorder %s332, %s346
      %p348 = scmp.eq.s32.totalorder %s46, 0
      %p349 = por %p347, %p348
      %s351 = sadd.s32 %s350, 1
      %p354 = scmp.eq.s32.totalorder %s40, 3
      %p355 = scmp.ne.s32.totalorder %s350, %s352
      %p356 = scmp.eq.s32.totalorder %s40, 0
      %p357 = por %p355, %p356
      %p358 = scmp.ne.s32.totalorder %s350, %s352
      %p359 = scmp.eq.s32.totalorder %s45, 3
      %p360 = por %p358, %p359
      %p361 = scmp.ne.s32.totalorder %s352, %s353
      %p362 = scmp.eq.s32.totalorder %s45, 0
      %p363 = por %p361, %p362
      %p364 = scmp.ne.s32.totalorder %s352, %s353
      %p365 = scmp.eq.s32.totalorder %s46, 3
      %p366 = por %p364, %p365
      %p368 = scmp.ne.s32.totalorder %s353, %s367
      %p369 = scmp.eq.s32.totalorder %s46, 0
      %p370 = por %p368, %p369
      %s372 = sadd.s32 %s371, 1
      %p375 = scmp.eq.s32.totalorder %s40, 3
      %p376 = scmp.ne.s32.totalorder %s371, %s373
      %p377 = scmp.eq.s32.totalorder %s40, 0
      %p378 = por %p376, %p377
      %p379 = scmp.ne.s32.totalorder %s371, %s373
      %p380 = scmp.eq.s32.totalorder %s45, 3
      %p381 = por %p379, %p380
      %p382 = scmp.ne.s32.totalorder %s373, %s374
      %p383 = scmp.eq.s32.totalorder %s45, 0
      %p384 = por %p382, %p383
      %p385 = scmp.ne.s32.totalorder %s373, %s374
      %p386 = scmp.eq.s32.totalorder %s46, 3
      %p387 = por %p385, %p386
      %p389 = scmp.ne.s32.totalorder %s374, %s388
      %p390 = scmp.eq.s32.totalorder %s46, 0
      %p391 = por %p389, %p390
      %s392 = ssub.s32 %s47, %s59
      %s393 = ssub.s32 %s48, %s55
      %s394 = sor.u32 %s392, %s393
      %p395 = scmp.eq.s32.totalorder %s394, 0
      %s397 = sadd.s32 %s396, 1
      %s398 = scalar_select %p395, %s396, %s397
      %p401 = pneg %p395
      %p402 = scmp.eq.s32.totalorder %s40, 3
      %p403 = por %p401, %p402
      %p404 = scmp.ne.s32.totalorder %s396, %s399
      %p405 = scmp.eq.s32.totalorder %s40, 0
      %p406 = por %p404, %p405
      %p407 = scmp.ne.s32.totalorder %s396, %s399
      %p408 = scmp.eq.s32.totalorder %s45, 3
      %p409 = por %p407, %p408
      %p410 = scmp.ne.s32.totalorder %s399, %s400
      %p411 = scmp.eq.s32.totalorder %s45, 0
      %p412 = por %p410, %p411
      %p413 = scmp.ne.s32.totalorder %s399, %s400
      %p414 = scmp.eq.s32.totalorder %s46, 3
      %p415 = por %p413, %p414
      %p417 = scmp.ne.s32.totalorder %s400, %s416
      %p418 = scmp.eq.s32.totalorder %s46, 0
      %p419 = por %p417, %p418
      %s420 = ssub.s32 %s47, %s59
      %p421 = scmp.eq.s32.totalorder %s420, 0
      %s423 = sadd.s32 %s422, 1
      %s424 = scalar_select %p421, %s422, %s423
      %p427 = pneg %p421
      %p428 = scmp.eq.s32.totalorder %s40, 3
      %p429 = por %p427, %p428
      %p430 = scmp.ne.s32.totalorder %s422, %s425
      %p431 = scmp.eq.s32.totalorder %s40, 0
      %p432 = por %p430, %p431
      %p433 = scmp.ne.s32.totalorder %s422, %s425
      %p434 = scmp.eq.s32.totalorder %s45, 3
      %p435 = por %p433, %p434
      %p436 = scmp.ne.s32.totalorder %s425, %s426
      %p437 = scmp.eq.s32.totalorder %s45, 0
      %p438 = por %p436, %p437
      %p439 = scmp.ne.s32.totalorder %s425, %s426
      %p440 = scmp.eq.s32.totalorder %s46, 3
      %p441 = por %p439, %p440
      %p443 = scmp.ne.s32.totalorder %s426, %s442
      %p444 = scmp.eq.s32.totalorder %s46, 0
      %p445 = por %p443, %p444
      %s446 = ssub.s32 %s47, %s59
      %p447 = scmp.eq.s32.totalorder %s446, 0
      %s449 = sadd.s32 %s448, 1
      %s450 = scalar_select %p447, %s448, %s449
      %p453 = pneg %p447
      %p454 = scmp.eq.s32.totalorder %s40, 3
      %p455 = por %p453, %p454
      %p456 = scmp.ne.s32.totalorder %s448, %s451
      %p457 = scmp.eq.s32.totalorder %s40, 0
      %p458 = por %p456, %p457
      %p459 = scmp.ne.s32.totalorder %s448, %s451
      %p460 = scmp.eq.s32.totalorder %s45, 3
      %p461 = por %p459, %p460
      %p462 = scmp.ne.s32.totalorder %s451, %s452
      %p463 = scmp.eq.s32.totalorder %s45, 0
      %p464 = por %p462, %p463
      %p465 = scmp.ne.s32.totalorder %s451, %s452
      %p466 = scmp.eq.s32.totalorder %s46, 3
      %p467 = por %p465, %p466
      %p469 = scmp.ne.s32.totalorder %s452, %s468
      %p470 = scmp.eq.s32.totalorder %s46, 0
      %p471 = por %p469, %p470
      %p472 = scmp.le.s32.totalorder 1, %s40
      %p473 = scmp.lt.s32.totalorder %s40, 5
      %p474 = pnand %p472, %p473
      %p475 = pneg %p474
      // Predicated region
      $region9: #{tpu_custom_call.1} parent=5 // pred_check
        _
      $region10: #{tpu_custom_call.1} parent=5 // pred_check_branch
        %477 = sbr.rel (%p474) target = $region12
      $region11: #{tpu_custom_call.1} parent=5 // pred_region
        %s478 = ssub.s32 %s40, 1
        // Predicated region
        $region13: #{tpu_custom_call.1} parent=11 // pred_check
          %p479 = pneg %p153
        $region14: #{tpu_custom_call.1} parent=11 // pred_check_branch
          %481 = sbr.rel (%p479) target = $region16
        $region15: #{tpu_custom_call.1} parent=11 // pred_region
          %483 = vsyncadd [#allocation9], 0
          %s484 = sshll.u32 %s3, 4
          %s485 = int_to_ptr.hbm [resolvable:$true] %s484
          %s486 = sshll.u32 [#allocation8], 4
          %s487 = int_to_ptr.vmem [resolvable:$true] %s486
          %492 = dma.hbm_to_vmem [thread:$0]  %s485, 1024, %s487, [#allocation9], 64, 64, 4
        $region16: #{tpu_custom_call.1} parent=11 // pred_fallthru
          _
        // Predicated region
        $region17: #{tpu_custom_call.1} parent=11 // pred_check
          %p493 = pneg %p174
        $region18: #{tpu_custom_call.1} parent=11 // pred_check_branch
          %495 = sbr.rel (%p493) target = $region20
        $region19: #{tpu_custom_call.1} parent=11 // pred_region
          %497 = vsyncadd [#allocation9], 0
          %s499 = sshll.u32 %s4, 4
          %s500 = int_to_ptr.hbm [resolvable:$true] %s499
          %s501 = sshll.u32 [#allocation10], 4
          %s502 = int_to_ptr.vmem [resolvable:$true] %s501
          %504 = dma.hbm_to_vmem [thread:$0]  %s500, 16, %s502, [#allocation9]
        $region20: #{tpu_custom_call.1} parent=11 // pred_fallthru
          _
        // Predicated region
        $region21: #{tpu_custom_call.1} parent=11 // pred_check
          %p505 = pneg %p195
        $region22: #{tpu_custom_call.1} parent=11 // pred_check_branch
          %507 = sbr.rel (%p505) target = $region24
        $region23: #{tpu_custom_call.1} parent=11 // pred_region
          %509 = vsyncadd [#allocation12], 0
          %s510 = sshll.u32 %s5, 4
          %s511 = int_to_ptr.hbm [resolvable:$true] %s510
          %s512 = sshll.u32 [#allocation11], 4
          %s513 = int_to_ptr.vmem [resolvable:$true] %s512
          %518 = dma.hbm_to_vmem [thread:$0]  %s511, 8192, %s513, [#allocation12], 256, 256, 16
        $region24: #{tpu_custom_call.1} parent=11 // pred_fallthru
          _
        // Predicated region
        $region25: #{tpu_custom_call.1} parent=11 // pred_check
          %p519 = pneg %p216
        $region26: #{tpu_custom_call.1} parent=11 // pred_check_branch
          %521 = sbr.rel (%p519) target = $region28
        $region27: #{tpu_custom_call.1} parent=11 // pred_region
          _
        $region28: #{tpu_custom_call.1} parent=11 // pred_fallthru
          _
        // Predicated region
        $region29: #{tpu_custom_call.1} parent=11 // pred_check
          %p522 = pneg %p237
        $region30: #{tpu_custom_call.1} parent=11 // pred_check_branch
          %524 = sbr.rel (%p522) target = $region32
        $region31: #{tpu_custom_call.1} parent=11 // pred_region
          %526 = vsyncadd [#allocation12], 0
          %s527 = sshll.u32 %s7, 4
          %s528 = int_to_ptr.hbm [resolvable:$true] %s527
          %s529 = sshll.u32 [#allocation13], 4
          %s530 = int_to_ptr.vmem [resolvable:$true] %s529
          %535 = dma.hbm_to_vmem [thread:$0]  %s528, 8192, %s530, [#allocation12], 256, 256, 16
        $region32: #{tpu_custom_call.1} parent=11 // pred_fallthru
          _
        // Predicated region
        $region33: #{tpu_custom_call.1} parent=11 // pred_check
          %p536 = pneg %p258
        $region34: #{tpu_custom_call.1} parent=11 // pred_check_branch
          %538 = sbr.rel (%p536) target = $region36
        $region35: #{tpu_custom_call.1} parent=11 // pred_region
          %540 = vsyncadd [#allocation15], 0
          %s542 = sshll.u32 %s8, 4
          %s543 = int_to_ptr.hbm [resolvable:$true] %s542
          %s544 = sshll.u32 [#allocation14], 4
          %s545 = int_to_ptr.vmem [resolvable:$true] %s544
          %547 = dma.hbm_to_vmem [thread:$0]  %s543, 64, %s545, [#allocation15]
        $region36: #{tpu_custom_call.1} parent=11 // pred_fallthru
          _
        // Predicated region
        $region37: #{tpu_custom_call.1} parent=11 // pred_check
          %p548 = pneg %p279
        $region38: #{tpu_custom_call.1} parent=11 // pred_check_branch
          %550 = sbr.rel (%p548) target = $region40
        $region39: #{tpu_custom_call.1} parent=11 // pred_region
          %552 = vsyncadd [#allocation15], 0
          %s553 = sshll.u32 %s9, 4
          %s554 = int_to_ptr.hbm [resolvable:$true] %s553
          %s555 = sshll.u32 [#allocation16], 4
          %s556 = int_to_ptr.vmem [resolvable:$true] %s555
          %561 = dma.hbm_to_vmem [thread:$0]  %s554, 2048, %s556, [#allocation15], 128, 128, 8
        $region40: #{tpu_custom_call.1} parent=11 // pred_fallthru
          _
        // Predicated region
        $region41: #{tpu_custom_call.1} parent=11 // pred_check
          %p562 = pneg %p300
        $region42: #{tpu_custom_call.1} parent=11 // pred_check_branch
          %564 = sbr.rel (%p562) target = $region44
        $region43: #{tpu_custom_call.1} parent=11 // pred_region
          _
        $region44: #{tpu_custom_call.1} parent=11 // pred_fallthru
          _
        // Predicated region
        $region45: #{tpu_custom_call.1} parent=11 // pred_check
          %p565 = pneg %p321
        $region46: #{tpu_custom_call.1} parent=11 // pred_check_branch
          %567 = sbr.rel (%p565) target = $region48
        $region47: #{tpu_custom_call.1} parent=11 // pred_region
          %569 = vsyncadd [#allocation18], 0
          %s570 = sshll.u32 %s11, 4
          %s571 = int_to_ptr.hbm [resolvable:$true] %s570
          %s572 = sshll.u32 [#allocation17], 4
          %s573 = int_to_ptr.vmem [resolvable:$true] %s572
          %578 = dma.hbm_to_vmem [thread:$0]  %s571, 4096, %s573, [#allocation18], 128, 128, 8
        $region48: #{tpu_custom_call.1} parent=11 // pred_fallthru
          _
        // Predicated region
        $region49: #{tpu_custom_call.1} parent=11 // pred_check
          %p579 = pneg %p342
        $region50: #{tpu_custom_call.1} parent=11 // pred_check_branch
          %581 = sbr.rel (%p579) target = $region52
        $region51: #{tpu_custom_call.1} parent=11 // pred_region
          _
        $region52: #{tpu_custom_call.1} parent=11 // pred_fallthru
          _
        // Predicated region
        $region53: #{tpu_custom_call.1} parent=11 // pred_check
          %p582 = pneg %p363
        $region54: #{tpu_custom_call.1} parent=11 // pred_check_branch
          %584 = sbr.rel (%p582) target = $region56
        $region55: #{tpu_custom_call.1} parent=11 // pred_region
          %586 = vsyncadd [#allocation18], 0
          %s587 = sshll.u32 %s13, 4
          %s588 = int_to_ptr.hbm [resolvable:$true] %s587
          %s589 = sshll.u32 [#allocation19], 4
          %s590 = int_to_ptr.vmem [resolvable:$true] %s589
          %595 = dma.hbm_to_vmem [thread:$0]  %s588, 2048, %s590, [#allocation18], 64, 64, 4
        $region56: #{tpu_custom_call.1} parent=11 // pred_fallthru
          _
        // Predicated region
        $region57: #{tpu_custom_call.1} parent=11 // pred_check
          %p596 = pneg %p384
        $region58: #{tpu_custom_call.1} parent=11 // pred_check_branch
          %598 = sbr.rel (%p596) target = $region60
        $region59: #{tpu_custom_call.1} parent=11 // pred_region
          _
        $region60: #{tpu_custom_call.1} parent=11 // pred_fallthru
          _
      $region12: #{tpu_custom_call.1} parent=5 // pred_fallthru
        _
      %p599 = scmp.lt.s32.totalorder %s40, 4
      // Predicated region
      $region61: #{tpu_custom_call.1} parent=5 // pred_check
        %p600 = pneg %p599
      $region62: #{tpu_custom_call.1} parent=5 // pred_check_branch
        %602 = sbr.rel (%p600) target = $region64
      $region63: #{tpu_custom_call.1} parent=5 // pred_region
        // Predicated region
        $region65: #{tpu_custom_call.1} parent=63 // pred_check
          %p603 = pneg %p74
        $region66: #{tpu_custom_call.1} parent=63 // pred_check_branch
          %605 = sbr.rel (%p603) target = $region68
        $region67: #{tpu_custom_call.1} parent=63 // pred_region
          %s606 = sand.u32 %s64, 1
          %s607 = scalar_lea.sflag [#allocation3], %s606
          %s608 = sand.u32 %s64, 1
          %s609 = smul.addr %s608, 32
          %s610 = scalar_lea.vmem [#allocation2], %s609
          %s611 = smul.u32 8, %s48
          %613 = vsyncadd %s607, 0
          %s614 = smul.addr %s47, 16
          %s615 = sadd.s32 %s611, %s614
          %s616 = smul.addr %s615, 4
          %s617 = scalar_lea.hbm %s0, %s616
          %s618 = sshll.u32 %s617, 4
          %s619 = int_to_ptr.hbm [resolvable:$true] %s618
          %s620 = sshll.u32 %s610, 4
          %s621 = int_to_ptr.vmem [resolvable:$true] %s620
          %626 = dma.hbm_to_vmem [thread:$0]  %s619, 512, %s621, %s607, 64, 64, 4
        $region68: #{tpu_custom_call.1} parent=63 // pred_fallthru
          _
        // Predicated region
        $region69: #{tpu_custom_call.1} parent=63 // pred_check
          %p627 = pneg %p100
        $region70: #{tpu_custom_call.1} parent=63 // pred_check_branch
          %629 = sbr.rel (%p627) target = $region72
        $region71: #{tpu_custom_call.1} parent=63 // pred_region
          %s630 = sand.u32 %s40, 1
          %s631 = scalar_lea.sflag [#allocation6], %s630
          %s632 = sand.u32 %s90, 1
          %s633 = smul.addr %s632, 8
          %s634 = scalar_lea.vmem [#allocation5], %s633
          %636 = vsyncadd %s631, 0
          %s637 = smul.addr %s47, 8
          %s638 = scalar_lea.hbm %s1, %s637
          %s640 = sshll.u32 %s638, 4
          %s641 = int_to_ptr.hbm [resolvable:$true] %s640
          %s642 = sshll.u32 %s634, 4
          %s643 = int_to_ptr.vmem [resolvable:$true] %s642
          %645 = dma.hbm_to_vmem [thread:$0]  %s641, 128, %s643, %s631
        $region72: #{tpu_custom_call.1} parent=63 // pred_fallthru
          _
        // Predicated region
        $region73: #{tpu_custom_call.1} parent=63 // pred_check
          %p646 = pneg %p126
        $region74: #{tpu_custom_call.1} parent=63 // pred_check_branch
          %648 = sbr.rel (%p646) target = $region76
        $region75: #{tpu_custom_call.1} parent=63 // pred_region
          %s649 = sand.u32 %s40, 1
          %s650 = scalar_lea.sflag [#allocation6], %s649
          %s651 = sand.u32 %s116, 1
          %s652 = smul.addr %s651, 8
          %s653 = scalar_lea.vmem [#allocation7], %s652
          %655 = vsyncadd %s650, 0
          %s656 = smul.addr %s47, 8
          %s657 = scalar_lea.hbm %s2, %s656
          %s659 = sshll.u32 %s657, 4
          %s660 = int_to_ptr.hbm [resolvable:$true] %s659
          %s661 = sshll.u32 %s653, 4
          %s662 = int_to_ptr.vmem [resolvable:$true] %s661
          %664 = dma.hbm_to_vmem [thread:$0]  %s660, 128, %s662, %s650
        $region76: #{tpu_custom_call.1} parent=63 // pred_fallthru
          _
      $region64: #{tpu_custom_call.1} parent=5 // pred_fallthru
        _
      %p665 = scmp.le.s32.totalorder 1, %s40
      %p666 = scmp.lt.s32.totalorder %s40, 5
      %p667 = pnand %p665, %p666
      %p668 = pneg %p667
      // Predicated region
      $region77: #{tpu_custom_call.1} parent=5 // pred_check
        _
      $region78: #{tpu_custom_call.1} parent=5 // pred_check_branch
        %670 = sbr.rel (%p667) target = $region80
      $region79: #{tpu_custom_call.1} parent=5 // pred_region
        %s671 = ssub.s32 %s40, 1
        %s672 = sand.u32 %s67, 1
        %s673 = scalar_lea.sflag [#allocation3], %s672
        %s674 = sand.u32 %s67, 1
        %s675 = smul.addr %s674, 32
        %s676 = scalar_lea.vmem [#allocation2], %s675
        // Predicated region
        $region81: #{tpu_custom_call.1} parent=79 // pred_check
          %p677 = pneg %p80
        $region82: #{tpu_custom_call.1} parent=79 // pred_check_branch
          %679 = sbr.rel (%p677) target = $region84
        $region83: #{tpu_custom_call.1} parent=79 // pred_region
          %681 = dma.done %s673, 512
        $region84: #{tpu_custom_call.1} parent=79 // pred_fallthru
          _
        %s682 = sand.u32 %s45, 1
        %s683 = scalar_lea.sflag [#allocation6], %s682
        %s684 = sand.u32 %s93, 1
        %s685 = smul.addr %s684, 8
        %s686 = scalar_lea.vmem [#allocation5], %s685
        // Predicated region
        $region85: #{tpu_custom_call.1} parent=79 // pred_check
          %p687 = pneg %p106
        $region86: #{tpu_custom_call.1} parent=79 // pred_check_branch
          %689 = sbr.rel (%p687) target = $region88
        $region87: #{tpu_custom_call.1} parent=79 // pred_region
          %691 = dma.done %s683, 128
        $region88: #{tpu_custom_call.1} parent=79 // pred_fallthru
          _
        %s692 = sand.u32 %s45, 1
        %s693 = scalar_lea.sflag [#allocation6], %s692
        %s694 = sand.u32 %s119, 1
        %s695 = smul.addr %s694, 8
        %s696 = scalar_lea.vmem [#allocation7], %s695
        // Predicated region
        $region89: #{tpu_custom_call.1} parent=79 // pred_check
          %p697 = pneg %p132
        $region90: #{tpu_custom_call.1} parent=79 // pred_check_branch
          %699 = sbr.rel (%p697) target = $region92
        $region91: #{tpu_custom_call.1} parent=79 // pred_region
          %701 = dma.done %s693, 128
        $region92: #{tpu_custom_call.1} parent=79 // pred_fallthru
          _
        // Predicated region
        $region93: #{tpu_custom_call.1} parent=79 // pred_check
          %p702 = pneg %p153
        $region94: #{tpu_custom_call.1} parent=79 // pred_check_branch
          %704 = sbr.rel (%p702) target = $region96
        $region95: #{tpu_custom_call.1} parent=79 // pred_region
          %706 = dma.done [#allocation9], 1024
        $region96: #{tpu_custom_call.1} parent=79 // pred_fallthru
          _
        // Predicated region
        $region97: #{tpu_custom_call.1} parent=79 // pred_check
          %p707 = pneg %p174
        $region98: #{tpu_custom_call.1} parent=79 // pred_check_branch
          %709 = sbr.rel (%p707) target = $region100
        $region99: #{tpu_custom_call.1} parent=79 // pred_region
          %711 = dma.done [#allocation9], 16
        $region100: #{tpu_custom_call.1} parent=79 // pred_fallthru
          _
        // Predicated region
        $region101: #{tpu_custom_call.1} parent=79 // pred_check
          %p712 = pneg %p195
        $region102: #{tpu_custom_call.1} parent=79 // pred_check_branch
          %714 = sbr.rel (%p712) target = $region104
        $region103: #{tpu_custom_call.1} parent=79 // pred_region
          %716 = dma.done [#allocation12], 8192
        $region104: #{tpu_custom_call.1} parent=79 // pred_fallthru
          _
        // Predicated region
        $region105: #{tpu_custom_call.1} parent=79 // pred_check
          %p717 = pneg %p237
        $region106: #{tpu_custom_call.1} parent=79 // pred_check_branch
          %719 = sbr.rel (%p717) target = $region108
        $region107: #{tpu_custom_call.1} parent=79 // pred_region
          %721 = dma.done [#allocation12], 8192
        $region108: #{tpu_custom_call.1} parent=79 // pred_fallthru
          _
        // Predicated region
        $region109: #{tpu_custom_call.1} parent=79 // pred_check
          %p722 = pneg %p258
        $region110: #{tpu_custom_call.1} parent=79 // pred_check_branch
          %724 = sbr.rel (%p722) target = $region112
        $region111: #{tpu_custom_call.1} parent=79 // pred_region
          %726 = dma.done [#allocation15], 64
        $region112: #{tpu_custom_call.1} parent=79 // pred_fallthru
          _
        // Predicated region
        $region113: #{tpu_custom_call.1} parent=79 // pred_check
          %p727 = pneg %p279
        $region114: #{tpu_custom_call.1} parent=79 // pred_check_branch
          %729 = sbr.rel (%p727) target = $region116
        $region115: #{tpu_custom_call.1} parent=79 // pred_region
          %731 = dma.done [#allocation15], 2048
        $region116: #{tpu_custom_call.1} parent=79 // pred_fallthru
          _
        // Predicated region
        $region117: #{tpu_custom_call.1} parent=79 // pred_check
          %p732 = pneg %p321
        $region118: #{tpu_custom_call.1} parent=79 // pred_check_branch
          %734 = sbr.rel (%p732) target = $region120
        $region119: #{tpu_custom_call.1} parent=79 // pred_region
          %736 = dma.done [#allocation18], 4096
        $region120: #{tpu_custom_call.1} parent=79 // pred_fallthru
          _
        // Predicated region
        $region121: #{tpu_custom_call.1} parent=79 // pred_check
          %p737 = pneg %p363
        $region122: #{tpu_custom_call.1} parent=79 // pred_check_branch
          %739 = sbr.rel (%p737) target = $region124
        $region123: #{tpu_custom_call.1} parent=79 // pred_region
          %741 = dma.done [#allocation18], 2048
        $region124: #{tpu_custom_call.1} parent=79 // pred_fallthru
          _
        %s742 = sand.u32 %s67, 1
        %s743 = scalar_lea.sflag [#allocation3], %s742
        %s744 = sand.u32 %s67, 1
        %s745 = smul.addr %s744, 32
        %s746 = scalar_lea.vmem [#allocation2], %s745
        %p747 = pneg %p80
        %p748 = pneg %p77
        %s749 = sand.u32 %s45, 1
        %s750 = scalar_lea.sflag [#allocation6], %s749
        %s751 = sand.u32 %s93, 1
        %s752 = smul.addr %s751, 8
        %s753 = scalar_lea.vmem [#allocation5], %s752
        %p754 = pneg %p106
        %p755 = pneg %p103
        %s756 = sand.u32 %s45, 1
        %s757 = scalar_lea.sflag [#allocation6], %s756
        %s758 = sand.u32 %s119, 1
        %s759 = smul.addr %s758, 8
        %s760 = scalar_lea.vmem [#allocation7], %s759
        %p761 = pneg %p132
        %p762 = pneg %p129
        %p763 = pneg %p153
        %p764 = pneg %p150
        %p765 = pneg %p174
        %p766 = pneg %p171
        %p767 = pneg %p195
        %p768 = pneg %p192
        %p769 = pneg %p216
        %p770 = pneg %p213
        %p771 = pneg %p237
        %p772 = pneg %p234
        %p773 = pneg %p258
        %p774 = pneg %p255
        %p775 = pneg %p279
        %p776 = pneg %p276
        %p777 = pneg %p300
        %p778 = pneg %p297
        %p779 = pneg %p321
        %p780 = pneg %p318
        %p781 = pneg %p342
        %p782 = pneg %p339
        %p783 = pneg %p363
        %p784 = pneg %p360
        %p785 = pneg %p384
        %p786 = pneg %p381
        %p787 = pneg %p412
        %p788 = pneg %p409
        %s789 = sand.u32 %s399, 1
        %s790 = scalar_lea.sflag [#allocation4], %s789
        %s791 = sand.u32 %s399, 1
        %s792 = smul.addr %s791, 64
        %s793 = scalar_lea.vmem [#allocation20], %s792
        %p794 = pneg %p438
        %p795 = pneg %p435
        %s796 = sand.u32 %s45, 1
        %s797 = scalar_lea.sflag [#allocation22], %s796
        %s798 = sand.u32 %s425, 1
        %s799 = smul.addr %s798, 8
        %s800 = scalar_lea.vmem [#allocation21], %s799
        %p801 = pneg %p464
        %p802 = pneg %p461
        %s803 = sand.u32 %s45, 1
        %s804 = scalar_lea.sflag [#allocation22], %s803
        %s805 = sand.u32 %s451, 1
        %s806 = smul.addr %s805, 8
        %s807 = scalar_lea.vmem [#allocation23], %s806
        %s808 = smul.u32 8, %s50
        %s809 = smul.u32 8, %s50
        %p810 = scmp.eq.s32.totalorder %s50, 0
        // Predicated region
        $region125: #{tpu_custom_call.1} parent=79 // pred_check
          %p811 = pneg %p810
        $region126: #{tpu_custom_call.1} parent=79 // pred_check_branch
          %813 = sbr.rel (%p811) target = $region128
        $region127: #{tpu_custom_call.1} parent=79 // pred_region
          %v814 = vld [vmem:[%s686] sm:$0xff]
          %815 = vst [vmem:[%s800] sm:$0xff] %v814
          %v816 = vld [vmem:[%s696] sm:$0xff]
          %817 = vst [vmem:[%s807] sm:$0xff] %v816
        $region128: #{tpu_custom_call.1} parent=79 // pred_fallthru
          _
        %v818 = vld [vmem:[%s676] sm:$0xf]
        %v819 = vld [vmem:[%s676 + $0x4] sm:$0xf]
        %v820 = vld [vmem:[%s676 + $0x8] sm:$0xf]
        %v821 = vld [vmem:[%s676 + $0xc] sm:$0xf]
        %v822 = vld [vmem:[%s676 + $0x10] sm:$0xf]
        %v823 = vld [vmem:[%s676 + $0x14] sm:$0xf]
        %v824 = vld [vmem:[%s676 + $0x18] sm:$0xf]
        %v825 = vld [vmem:[%s676 + $0x1c] sm:$0xf]
        %v826 = vld [vmem:[#allocation8] sm:$0xf]
        %v827 = vld [vmem:[#allocation8 + $0x4] sm:$0xf]
        %v828 = vld [vmem:[#allocation8 + $0x8] sm:$0xf]
        %v829 = vld [vmem:[#allocation8 + $0xc] sm:$0xf]
        %v830 = vld [vmem:[#allocation8 + $0x10] sm:$0xf]
        %v831 = vld [vmem:[#allocation8 + $0x14] sm:$0xf]
        %v832 = vld [vmem:[#allocation8 + $0x18] sm:$0xf]
        %v833 = vld [vmem:[#allocation8 + $0x1c] sm:$0xf]
        %v834 = vld [vmem:[#allocation8 + $0x20] sm:$0xf]
        %v835 = vld [vmem:[#allocation8 + $0x24] sm:$0xf]
        %v836 = vld [vmem:[#allocation8 + $0x28] sm:$0xf]
        %v837 = vld [vmem:[#allocation8 + $0x2c] sm:$0xf]
        %v838 = vld [vmem:[#allocation8 + $0x30] sm:$0xf]
        %v839 = vld [vmem:[#allocation8 + $0x34] sm:$0xf]
        %v840 = vld [vmem:[#allocation8 + $0x38] sm:$0xf]
        %v841 = vld [vmem:[#allocation8 + $0x3c] sm:$0xf]
        %v842 = vld [vmem:[#allocation10] sm:$0x1]
        %v844 = vperm.slane %v842, 0
        %v854 = vunpack.c.l.b16 %v818
        %v855 = vunpack.c.l.b16 %v819
        %v856 = vunpack.c.l.b16 %v820
        %v857 = vunpack.c.l.b16 %v821
        %v858 = vunpack.c.l.b16 %v822
        %v859 = vunpack.c.l.b16 %v823
        %v860 = vunpack.c.l.b16 %v824
        %v861 = vunpack.c.l.b16 %v825
        %v862 = vpack.c.b16 %v855, %v854
        %v863 = vpack.c.b16 %v857, %v856
        %v864 = vpack.c.b16 %v859, %v858
        %v865 = vpack.c.b16 %v861, %v860
        %v886 = vunpack.c.l.b16 %v826
        %v887 = vunpack.c.l.b16 %v827
        %v888 = vunpack.c.l.b16 %v828
        %v889 = vunpack.c.l.b16 %v829
        %v890 = vunpack.c.l.b16 %v830
        %v891 = vunpack.c.l.b16 %v831
        %v892 = vunpack.c.l.b16 %v832
        %v893 = vunpack.c.l.b16 %v833
        %v894 = vunpack.c.l.b16 %v834
        %v895 = vunpack.c.l.b16 %v835
        %v896 = vunpack.c.l.b16 %v836
        %v897 = vunpack.c.l.b16 %v837
        %v898 = vunpack.c.l.b16 %v838
        %v899 = vunpack.c.l.b16 %v839
        %v900 = vunpack.c.l.b16 %v840
        %v901 = vunpack.c.l.b16 %v841
        %v902 = vpack.c.b16 %v887, %v886
        %v903 = vpack.c.b16 %v889, %v888
        %v904 = vpack.c.b16 %v891, %v890
        %v905 = vpack.c.b16 %v893, %v892
        %v906 = vpack.c.b16 %v895, %v894
        %v907 = vpack.c.b16 %v897, %v896
        %v908 = vpack.c.b16 %v899, %v898
        %v909 = vpack.c.b16 %v901, %v900
        %918 = vmatpush.bf16.msra.mxu0 %v909
        %919 = vmatpush.bf16.msra.mxu0 %v908
        %920 = vmatpush.bf16.msra.mxu0 %v907
        %921 = vmatpush.bf16.msra.mxu0 %v906
        %922 = vmatpush.bf16.msra.mxu0 %v905
        %923 = vmatpush.bf16.msra.mxu0 %v904
        %924 = vmatpush.bf16.msra.mxu0 %v903
        %925 = vmatpush.bf16.msra.mxu0 %v902
        %926 = vmatmul.bf16.gmra.mxu0 %v862
        %v927 = vpop.f32.mrf.mxu0
        %v928 = vadd.f32 %v844, %v927
        %v929 = vpop.f32.mrf.mxu0
        %v930 = vadd.f32 %v844, %v929
        %931 = vmatmul.bf16.gmra.mxu0 %v863
        %v932 = vpop.f32.mrf.mxu0
        %v933 = vadd.f32 %v844, %v932
        %v934 = vpop.f32.mrf.mxu0
        %v935 = vadd.f32 %v844, %v934
        %936 = vmatmul.bf16.gmra.mxu0 %v864
        %v937 = vpop.f32.mrf.mxu0
        %v938 = vadd.f32 %v844, %v937
        %v939 = vpop.f32.mrf.mxu0
        %v940 = vadd.f32 %v844, %v939
        %941 = vmatmul.bf16.gmra.mxu0 %v865
        %v942 = vpop.f32.mrf.mxu0
        %v943 = vadd.f32 %v844, %v942
        %v944 = vpop.f32.mrf.mxu0
        %v945 = vadd.f32 %v844, %v944
        %946 = vdwg.mxu0
        %v947 = vpack.c.bf16 %v928, %v928
        %v948 = vpack.c.bf16 %v930, %v930
        %v949 = vpack.c.bf16 %v933, %v933
        %v950 = vpack.c.bf16 %v935, %v935
        %v951 = vpack.c.bf16 %v938, %v938
        %v952 = vpack.c.bf16 %v940, %v940
        %v953 = vpack.c.bf16 %v943, %v943
        %v954 = vpack.c.bf16 %v945, %v945
        %v955 = vld [vmem:[%s6] sm:$0xf]
        %v956 = vld [vmem:[#allocation14] sm:$0xf]
        %v957 = vld [vmem:[%s800] sm:$0xff]
        %v958 = vld [vmem:[%s807] sm:$0xff]
        %v959 = vpack.c.bf16 %v957, %v957
        %v960 = vld [vmem:[#allocation11] sm:$0xff]
        %v961 = vld [vmem:[#allocation11 + $0x8] sm:$0xff]
        %v962 = vld [vmem:[#allocation11 + $0x10] sm:$0xff]
        %v963 = vld [vmem:[#allocation11 + $0x18] sm:$0xff]
        %v964 = vld [vmem:[#allocation11 + $0x20] sm:$0xff]
        %v965 = vld [vmem:[#allocation11 + $0x28] sm:$0xff]
        %v966 = vld [vmem:[#allocation11 + $0x30] sm:$0xff]
        %v967 = vld [vmem:[#allocation11 + $0x38] sm:$0xff]
        %v968 = vld [vmem:[#allocation11 + $0x40] sm:$0xff]
        %v969 = vld [vmem:[#allocation11 + $0x48] sm:$0xff]
        %v970 = vld [vmem:[#allocation11 + $0x50] sm:$0xff]
        %v971 = vld [vmem:[#allocation11 + $0x58] sm:$0xff]
        %v972 = vld [vmem:[#allocation11 + $0x60] sm:$0xff]
        %v973 = vld [vmem:[#allocation11 + $0x68] sm:$0xff]
        %v974 = vld [vmem:[#allocation11 + $0x70] sm:$0xff]
        %v975 = vld [vmem:[#allocation11 + $0x78] sm:$0xff]
        %v976 = vld [vmem:[#allocation11 + $0x80] sm:$0xff]
        %v977 = vld [vmem:[#allocation11 + $0x88] sm:$0xff]
        %v978 = vld [vmem:[#allocation11 + $0x90] sm:$0xff]
        %v979 = vld [vmem:[#allocation11 + $0x98] sm:$0xff]
        %v980 = vld [vmem:[#allocation11 + $0xa0] sm:$0xff]
        %v981 = vld [vmem:[#allocation11 + $0xa8] sm:$0xff]
        %v982 = vld [vmem:[#allocation11 + $0xb0] sm:$0xff]
        %v983 = vld [vmem:[#allocation11 + $0xb8] sm:$0xff]
        %v984 = vld [vmem:[#allocation11 + $0xc0] sm:$0xff]
        %v985 = vld [vmem:[#allocation11 + $0xc8] sm:$0xff]
        %v986 = vld [vmem:[#allocation11 + $0xd0] sm:$0xff]
        %v987 = vld [vmem:[#allocation11 + $0xd8] sm:$0xff]
        %v988 = vld [vmem:[#allocation11 + $0xe0] sm:$0xff]
        %v989 = vld [vmem:[#allocation11 + $0xe8] sm:$0xff]
        %v990 = vld [vmem:[#allocation11 + $0xf0] sm:$0xff]
        %v991 = vld [vmem:[#allocation11 + $0xf8] sm:$0xff]
        %v992 = vld [vmem:[#allocation11 + $0x100] sm:$0xff]
        %v993 = vld [vmem:[#allocation11 + $0x108] sm:$0xff]
        %v994 = vld [vmem:[#allocation11 + $0x110] sm:$0xff]
        %v995 = vld [vmem:[#allocation11 + $0x118] sm:$0xff]
        %v996 = vld [vmem:[#allocation11 + $0x120] sm:$0xff]
        %v997 = vld [vmem:[#allocation11 + $0x128] sm:$0xff]
        %v998 = vld [vmem:[#allocation11 + $0x130] sm:$0xff]
        %v999 = vld [vmem:[#allocation11 + $0x138] sm:$0xff]
        %v1000 = vld [vmem:[#allocation11 + $0x140] sm:$0xff]
        %v1001 = vld [vmem:[#allocation11 + $0x148] sm:$0xff]
        %v1002 = vld [vmem:[#allocation11 + $0x150] sm:$0xff]
        %v1003 = vld [vmem:[#allocation11 + $0x158] sm:$0xff]
        %v1004 = vld [vmem:[#allocation11 + $0x160] sm:$0xff]
        %v1005 = vld [vmem:[#allocation11 + $0x168] sm:$0xff]
        %v1006 = vld [vmem:[#allocation11 + $0x170] sm:$0xff]
        %v1007 = vld [vmem:[#allocation11 + $0x178] sm:$0xff]
        %v1008 = vld [vmem:[#allocation11 + $0x180] sm:$0xff]
        %v1009 = vld [vmem:[#allocation11 + $0x188] sm:$0xff]
        %v1010 = vld [vmem:[#allocation11 + $0x190] sm:$0xff]
        %v1011 = vld [vmem:[#allocation11 + $0x198] sm:$0xff]
        %v1012 = vld [vmem:[#allocation11 + $0x1a0] sm:$0xff]
        %v1013 = vld [vmem:[#allocation11 + $0x1a8] sm:$0xff]
        %v1014 = vld [vmem:[#allocation11 + $0x1b0] sm:$0xff]
        %v1015 = vld [vmem:[#allocation11 + $0x1b8] sm:$0xff]
        %v1016 = vld [vmem:[#allocation11 + $0x1c0] sm:$0xff]
        %v1017 = vld [vmem:[#allocation11 + $0x1c8] sm:$0xff]
        %v1018 = vld [vmem:[#allocation11 + $0x1d0] sm:$0xff]
        %v1019 = vld [vmem:[#allocation11 + $0x1d8] sm:$0xff]
        %v1020 = vld [vmem:[#allocation11 + $0x1e0] sm:$0xff]
        %v1021 = vld [vmem:[#allocation11 + $0x1e8] sm:$0xff]
        %v1022 = vld [vmem:[#allocation11 + $0x1f0] sm:$0xff]
        %v1023 = vld [vmem:[#allocation11 + $0x1f8] sm:$0xff]
        %v1025 = vperm.slane %v955, 0
        %v1026 = vperm.slane %v955, 1
        %v1027 = vperm.slane %v955, 2
        %v1028 = vperm.slane %v955, 3
        %v1097 = vunpack.c.l.b16 %v960
        %v1098 = vunpack.c.h.b16 %v960
        %v1099 = vunpack.c.l.b16 %v961
        %v1100 = vunpack.c.h.b16 %v961
        %v1101 = vunpack.c.l.b16 %v962
        %v1102 = vunpack.c.h.b16 %v962
        %v1103 = vunpack.c.l.b16 %v963
        %v1104 = vunpack.c.h.b16 %v963
        %v1105 = vunpack.c.l.b16 %v964
        %v1106 = vunpack.c.h.b16 %v964
        %v1107 = vunpack.c.l.b16 %v965
        %v1108 = vunpack.c.h.b16 %v965
        %v1109 = vunpack.c.l.b16 %v966
        %v1110 = vunpack.c.h.b16 %v966
        %v1111 = vunpack.c.l.b16 %v967
        %v1112 = vunpack.c.h.b16 %v967
        %v1113 = vunpack.c.l.b16 %v968
        %v1114 = vunpack.c.h.b16 %v968
        %v1115 = vunpack.c.l.b16 %v969
        %v1116 = vunpack.c.h.b16 %v969
        %v1117 = vunpack.c.l.b16 %v970
        %v1118 = vunpack.c.h.b16 %v970
        %v1119 = vunpack.c.l.b16 %v971
        %v1120 = vunpack.c.h.b16 %v971
        %v1121 = vunpack.c.l.b16 %v972
        %v1122 = vunpack.c.h.b16 %v972
        %v1123 = vunpack.c.l.b16 %v973
        %v1124 = vunpack.c.h.b16 %v973
        %v1125 = vunpack.c.l.b16 %v974
        %v1126 = vunpack.c.h.b16 %v974
        %v1127 = vunpack.c.l.b16 %v975
        %v1128 = vunpack.c.h.b16 %v975
        %v1129 = vunpack.c.l.b16 %v976
        %v1130 = vunpack.c.h.b16 %v976
        %v1131 = vunpack.c.l.b16 %v977
        %v1132 = vunpack.c.h.b16 %v977
        %v1133 = vunpack.c.l.b16 %v978
        %v1134 = vunpack.c.h.b16 %v978
        %v1135 = vunpack.c.l.b16 %v979
        %v1136 = vunpack.c.h.b16 %v979
        %v1137 = vunpack.c.l.b16 %v980
        %v1138 = vunpack.c.h.b16 %v980
        %v1139 = vunpack.c.l.b16 %v981
        %v1140 = vunpack.c.h.b16 %v981
        %v1141 = vunpack.c.l.b16 %v982
        %v1142 = vunpack.c.h.b16 %v982
        %v1143 = vunpack.c.l.b16 %v983
        %v1144 = vunpack.c.h.b16 %v983
        %v1145 = vunpack.c.l.b16 %v984
        %v1146 = vunpack.c.h.b16 %v984
        %v1147 = vunpack.c.l.b16 %v985
        %v1148 = vunpack.c.h.b16 %v985
        %v1149 = vunpack.c.l.b16 %v986
        %v1150 = vunpack.c.h.b16 %v986
        %v1151 = vunpack.c.l.b16 %v987
        %v1152 = vunpack.c.h.b16 %v987
        %v1153 = vunpack.c.l.b16 %v988
        %v1154 = vunpack.c.h.b16 %v988
        %v1155 = vunpack.c.l.b16 %v989
        %v1156 = vunpack.c.h.b16 %v989
        %v1157 = vunpack.c.l.b16 %v990
        %v1158 = vunpack.c.h.b16 %v990
        %v1159 = vunpack.c.l.b16 %v991
        %v1160 = vunpack.c.h.b16 %v991
        %v1161 = vunpack.c.l.b16 %v992
        %v1162 = vunpack.c.h.b16 %v992
        %v1163 = vunpack.c.l.b16 %v993
        %v1164 = vunpack.c.h.b16 %v993
        %v1165 = vunpack.c.l.b16 %v994
        %v1166 = vunpack.c.h.b16 %v994
        %v1167 = vunpack.c.l.b16 %v995
        %v1168 = vunpack.c.h.b16 %v995
        %v1169 = vunpack.c.l.b16 %v996
        %v1170 = vunpack.c.h.b16 %v996
        %v1171 = vunpack.c.l.b16 %v997
        %v1172 = vunpack.c.h.b16 %v997
        %v1173 = vunpack.c.l.b16 %v998
        %v1174 = vunpack.c.h.b16 %v998
        %v1175 = vunpack.c.l.b16 %v999
        %v1176 = vunpack.c.h.b16 %v999
        %v1177 = vunpack.c.l.b16 %v1000
        %v1178 = vunpack.c.h.b16 %v1000
        %v1179 = vunpack.c.l.b16 %v1001
        %v1180 = vunpack.c.h.b16 %v1001
        %v1181 = vunpack.c.l.b16 %v1002
        %v1182 = vunpack.c.h.b16 %v1002
        %v1183 = vunpack.c.l.b16 %v1003
        %v1184 = vunpack.c.h.b16 %v1003
        %v1185 = vunpack.c.l.b16 %v1004
        %v1186 = vunpack.c.h.b16 %v1004
        %v1187 = vunpack.c.l.b16 %v1005
        %v1188 = vunpack.c.h.b16 %v1005
        %v1189 = vunpack.c.l.b16 %v1006
        %v1190 = vunpack.c.h.b16 %v1006
        %v1191 = vunpack.c.l.b16 %v1007
        %v1192 = vunpack.c.h.b16 %v1007
        %v1193 = vunpack.c.l.b16 %v1008
        %v1194 = vunpack.c.h.b16 %v1008
        %v1195 = vunpack.c.l.b16 %v1009
        %v1196 = vunpack.c.h.b16 %v1009
        %v1197 = vunpack.c.l.b16 %v1010
        %v1198 = vunpack.c.h.b16 %v1010
        %v1199 = vunpack.c.l.b16 %v1011
        %v1200 = vunpack.c.h.b16 %v1011
        %v1201 = vunpack.c.l.b16 %v1012
        %v1202 = vunpack.c.h.b16 %v1012
        %v1203 = vunpack.c.l.b16 %v1013
        %v1204 = vunpack.c.h.b16 %v1013
        %v1205 = vunpack.c.l.b16 %v1014
        %v1206 = vunpack.c.h.b16 %v1014
        %v1207 = vunpack.c.l.b16 %v1015
        %v1208 = vunpack.c.h.b16 %v1015
        %v1209 = vunpack.c.l.b16 %v1016
        %v1210 = vunpack.c.h.b16 %v1016
        %v1211 = vunpack.c.l.b16 %v1017
        %v1212 = vunpack.c.h.b16 %v1017
        %v1213 = vunpack.c.l.b16 %v1018
        %v1214 = vunpack.c.h.b16 %v1018
        %v1215 = vunpack.c.l.b16 %v1019
        %v1216 = vunpack.c.h.b16 %v1019
        %v1217 = vunpack.c.l.b16 %v1020
        %v1218 = vunpack.c.h.b16 %v1020
        %v1219 = vunpack.c.l.b16 %v1021
        %v1220 = vunpack.c.h.b16 %v1021
        %v1221 = vunpack.c.l.b16 %v1022
        %v1222 = vunpack.c.h.b16 %v1022
        %v1223 = vunpack.c.l.b16 %v1023
        %v1224 = vunpack.c.h.b16 %v1023
        %v1225 = vpack.c.b16 %v1101, %v1097
        %v1226 = vpack.c.b16 %v1102, %v1098
        %v1227 = vpack.c.b16 %v1103, %v1099
        %v1228 = vpack.c.b16 %v1104, %v1100
        %v1229 = vpack.c.b16 %v1109, %v1105
        %v1230 = vpack.c.b16 %v1110, %v1106
        %v1231 = vpack.c.b16 %v1111, %v1107
        %v1232 = vpack.c.b16 %v1112, %v1108
        %v1233 = vpack.c.b16 %v1117, %v1113
        %v1234 = vpack.c.b16 %v1118, %v1114
        %v1235 = vpack.c.b16 %v1119, %v1115
        %v1236 = vpack.c.b16 %v1120, %v1116
        %v1237 = vpack.c.b16 %v1125, %v1121
        %v1238 = vpack.c.b16 %v1126, %v1122
        %v1239 = vpack.c.b16 %v1127, %v1123
        %v1240 = vpack.c.b16 %v1128, %v1124
        %v1241 = vpack.c.b16 %v1133, %v1129
        %v1242 = vpack.c.b16 %v1134, %v1130
        %v1243 = vpack.c.b16 %v1135, %v1131
        %v1244 = vpack.c.b16 %v1136, %v1132
        %v1245 = vpack.c.b16 %v1141, %v1137
        %v1246 = vpack.c.b16 %v1142, %v1138
        %v1247 = vpack.c.b16 %v1143, %v1139
        %v1248 = vpack.c.b16 %v1144, %v1140
        %v1249 = vpack.c.b16 %v1149, %v1145
        %v1250 = vpack.c.b16 %v1150, %v1146
        %v1251 = vpack.c.b16 %v1151, %v1147
        %v1252 = vpack.c.b16 %v1152, %v1148
        %v1253 = vpack.c.b16 %v1157, %v1153
        %v1254 = vpack.c.b16 %v1158, %v1154
        %v1255 = vpack.c.b16 %v1159, %v1155
        %v1256 = vpack.c.b16 %v1160, %v1156
        %v1257 = vpack.c.b16 %v1165, %v1161
        %v1258 = vpack.c.b16 %v1166, %v1162
        %v1259 = vpack.c.b16 %v1167, %v1163
        %v1260 = vpack.c.b16 %v1168, %v1164
        %v1261 = vpack.c.b16 %v1173, %v1169
        %v1262 = vpack.c.b16 %v1174, %v1170
        %v1263 = vpack.c.b16 %v1175, %v1171
        %v1264 = vpack.c.b16 %v1176, %v1172
        %v1265 = vpack.c.b16 %v1181, %v1177
        %v1266 = vpack.c.b16 %v1182, %v1178
        %v1267 = vpack.c.b16 %v1183, %v1179
        %v1268 = vpack.c.b16 %v1184, %v1180
        %v1269 = vpack.c.b16 %v1189, %v1185
        %v1270 = vpack.c.b16 %v1190, %v1186
        %v1271 = vpack.c.b16 %v1191, %v1187
        %v1272 = vpack.c.b16 %v1192, %v1188
        %v1273 = vpack.c.b16 %v1197, %v1193
        %v1274 = vpack.c.b16 %v1198, %v1194
        %v1275 = vpack.c.b16 %v1199, %v1195
        %v1276 = vpack.c.b16 %v1200, %v1196
        %v1277 = vpack.c.b16 %v1205, %v1201
        %v1278 = vpack.c.b16 %v1206, %v1202
        %v1279 = vpack.c.b16 %v1207, %v1203
        %v1280 = vpack.c.b16 %v1208, %v1204
        %v1281 = vpack.c.b16 %v1213, %v1209
        %v1282 = vpack.c.b16 %v1214, %v1210
        %v1283 = vpack.c.b16 %v1215, %v1211
        %v1284 = vpack.c.b16 %v1216, %v1212
        %v1285 = vpack.c.b16 %v1221, %v1217
        %v1286 = vpack.c.b16 %v1222, %v1218
        %v1287 = vpack.c.b16 %v1223, %v1219
        %v1288 = vpack.c.b16 %v1224, %v1220
        %1353 = vmatpush.bf16.msra.mxu0 %v1253
        %1354 = vmatpush.bf16.msra.mxu0 %v1249
        %1355 = vmatpush.bf16.msra.mxu0 %v1245
        %1356 = vmatpush.bf16.msra.mxu0 %v1241
        %1357 = vmatpush.bf16.msra.mxu0 %v1237
        %1358 = vmatpush.bf16.msra.mxu0 %v1233
        %1359 = vmatpush.bf16.msra.mxu0 %v1229
        %1360 = vmatpush.bf16.msra.mxu0 %v1225
        %1361 = vmatmul.bf16.gmra.mxu0 %v947
        %v1362 = vpop.f32.mrf.mxu0
        %v1363 = vadd.f32 %v1025, %v1362
        %v1364 = vpop.f32.mrf.mxu0
        %1365 = vdwg.mxu0
        %1366 = vmatpush.bf16.msra.mxu0 %v1285
        %1367 = vmatpush.bf16.msra.mxu0 %v1281
        %1368 = vmatpush.bf16.msra.mxu0 %v1277
        %1369 = vmatpush.bf16.msra.mxu0 %v1273
        %1370 = vmatpush.bf16.msra.mxu0 %v1269
        %1371 = vmatpush.bf16.msra.mxu0 %v1265
        %1372 = vmatpush.bf16.msra.mxu0 %v1261
        %1373 = vmatpush.bf16.msra.mxu0 %v1257
        %1374 = vmatmul.bf16.gmra.mxu0 %v959
        %v1375 = vpop.f32.mrf.mxu0
        %v1376 = vadd.f32 %v1363, %v1375
        %v1377 = vpop.f32.mrf.mxu0
        %1378 = vdwg.mxu0
        %1379 = vmatpush.bf16.msra.mxu0 %v1254
        %1380 = vmatpush.bf16.msra.mxu0 %v1250
        %1381 = vmatpush.bf16.msra.mxu0 %v1246
        %1382 = vmatpush.bf16.msra.mxu0 %v1242
        %1383 = vmatpush.bf16.msra.mxu0 %v1238
        %1384 = vmatpush.bf16.msra.mxu0 %v1234
        %1385 = vmatpush.bf16.msra.mxu0 %v1230
        %1386 = vmatpush.bf16.msra.mxu0 %v1226
        %1387 = vmatmul.bf16.gmra.mxu0 %v947
        %v1388 = vpop.f32.mrf.mxu0
        %v1389 = vadd.f32 %v1026, %v1388
        %v1390 = vpop.f32.mrf.mxu0
        %1391 = vdwg.mxu0
        %1392 = vmatpush.bf16.msra.mxu0 %v1286
        %1393 = vmatpush.bf16.msra.mxu0 %v1282
        %1394 = vmatpush.bf16.msra.mxu0 %v1278
        %1395 = vmatpush.bf16.msra.mxu0 %v1274
        %1396 = vmatpush.bf16.msra.mxu0 %v1270
        %1397 = vmatpush.bf16.msra.mxu0 %v1266
        %1398 = vmatpush.bf16.msra.mxu0 %v1262
        %1399 = vmatpush.bf16.msra.mxu0 %v1258
        %1400 = vmatmul.bf16.gmra.mxu0 %v959
        %v1401 = vpop.f32.mrf.mxu0
        %v1402 = vadd.f32 %v1389, %v1401
        %v1403 = vpop.f32.mrf.mxu0
        %1404 = vdwg.mxu0
        %1405 = vmatpush.bf16.msra.mxu0 %v1255
        %1406 = vmatpush.bf16.msra.mxu0 %v1251
        %1407 = vmatpush.bf16.msra.mxu0 %v1247
        %1408 = vmatpush.bf16.msra.mxu0 %v1243
        %1409 = vmatpush.bf16.msra.mxu0 %v1239
        %1410 = vmatpush.bf16.msra.mxu0 %v1235
        %1411 = vmatpush.bf16.msra.mxu0 %v1231
        %1412 = vmatpush.bf16.msra.mxu0 %v1227
        %1413 = vmatmul.bf16.gmra.mxu0 %v947
        %v1414 = vpop.f32.mrf.mxu0
        %v1415 = vadd.f32 %v1027, %v1414
        %v1416 = vpop.f32.mrf.mxu0
        %1417 = vdwg.mxu0
        %1418 = vmatpush.bf16.msra.mxu0 %v1287
        %1419 = vmatpush.bf16.msra.mxu0 %v1283
        %1420 = vmatpush.bf16.msra.mxu0 %v1279
        %1421 = vmatpush.bf16.msra.mxu0 %v1275
        %1422 = vmatpush.bf16.msra.mxu0 %v1271
        %1423 = vmatpush.bf16.msra.mxu0 %v1267
        %1424 = vmatpush.bf16.msra.mxu0 %v1263
        %1425 = vmatpush.bf16.msra.mxu0 %v1259
        %1426 = vmatmul.bf16.gmra.mxu0 %v959
        %v1427 = vpop.f32.mrf.mxu0
        %v1428 = vadd.f32 %v1415, %v1427
        %v1429 = vpop.f32.mrf.mxu0
        %1430 = vdwg.mxu0
        %1431 = vmatpush.bf16.msra.mxu0 %v1256
        %1432 = vmatpush.bf16.msra.mxu0 %v1252
        %1433 = vmatpush.bf16.msra.mxu0 %v1248
        %1434 = vmatpush.bf16.msra.mxu0 %v1244
        %1435 = vmatpush.bf16.msra.mxu0 %v1240
        %1436 = vmatpush.bf16.msra.mxu0 %v1236
        %1437 = vmatpush.bf16.msra.mxu0 %v1232
        %1438 = vmatpush.bf16.msra.mxu0 %v1228
        %1439 = vmatmul.bf16.gmra.mxu0 %v947
        %v1440 = vpop.f32.mrf.mxu0
        %v1441 = vadd.f32 %v1028, %v1440
        %v1442 = vpop.f32.mrf.mxu0
        %1443 = vdwg.mxu0
        %1444 = vmatpush.bf16.msra.mxu0 %v1288
        %1445 = vmatpush.bf16.msra.mxu0 %v1284
        %1446 = vmatpush.bf16.msra.mxu0 %v1280
        %1447 = vmatpush.bf16.msra.mxu0 %v1276
        %1448 = vmatpush.bf16.msra.mxu0 %v1272
        %1449 = vmatpush.bf16.msra.mxu0 %v1268
        %1450 = vmatpush.bf16.msra.mxu0 %v1264
        %1451 = vmatpush.bf16.msra.mxu0 %v1260
        %1452 = vmatmul.bf16.gmra.mxu0 %v959
        %v1453 = vpop.f32.mrf.mxu0
        %v1454 = vadd.f32 %v1441, %v1453
        %v1455 = vpop.f32.mrf.mxu0
        %1456 = vdwg.mxu0
        %v1457 = vxor.u32 %v1376, 2147483648
        %v1458 = vmul.f32 %v1457, 1.442695
        %v1459 = vpow.pop %v1458
        %v1460 = vadd.f32 %v1459, 1.0
        %v1461 = vrcp.pop %v1460
        %v1462 = vmul.f32 %v1460, %v1461
        %v1463 = vsub.f32 1.0, %v1462
        %v1464 = vmul.f32 %v1461, %v1463
        %v1465 = vadd.f32 %v1461, %v1464
        %vm1466 = vweird.f32 %v1460
        %vm1467 = vweird.f32 %v1461
        %vm1468 = vmor %vm1466, %vm1467
        %v1469 = vsel %vm1468, %v1461, %v1465
        %v1470 = vand.u32 2147483647, %v1460
        %vm1471 = vcmp.eq.f32.partialorder %v1470, 8.507059e+37
        %v1472 = vand.u32 %v1460, 2147483648
        %v1473 = vor.u32 1.1754944e-38, %v1472
        %v1474 = vsel %vm1471, %v1473, %v1469
        %v1475 = vmul.f32 1.0, %v1474
        %v1476 = vxor.u32 %v1402, 2147483648
        %v1477 = vmul.f32 %v1476, 1.442695
        %v1478 = vpow.pop %v1477
        %v1479 = vadd.f32 %v1478, 1.0
        %v1480 = vrcp.pop %v1479
        %v1481 = vmul.f32 %v1479, %v1480
        %v1482 = vsub.f32 1.0, %v1481
        %v1483 = vmul.f32 %v1480, %v1482
        %v1484 = vadd.f32 %v1480, %v1483
        %vm1485 = vweird.f32 %v1479
        %vm1486 = vweird.f32 %v1480
        %vm1487 = vmor %vm1485, %vm1486
        %v1488 = vsel %vm1487, %v1480, %v1484
        %v1489 = vand.u32 2147483647, %v1479
        %vm1490 = vcmp.eq.f32.partialorder %v1489, 8.507059e+37
        %v1491 = vand.u32 %v1479, 2147483648
        %v1492 = vor.u32 1.1754944e-38, %v1491
        %v1493 = vsel %vm1490, %v1492, %v1488
        %v1494 = vmul.f32 1.0, %v1493
        %v1495 = vmul.f32 %v1494, %v1454
        %v1496 = vadd.f32 %v1428, %v1495
        %v1497 = vtanh.pop %v1496
        %v1498 = vsub.f32 1.0, %v1475
        %v1499 = vmul.f32 %v1498, %v1497
        %v1500 = vmul.f32 %v1475, %v957
        %v1501 = vadd.f32 %v1499, %v1500
        %v1502 = vpack.c.bf16 %v1501, %v1501
        %v1503 = vpack.c.bf16 %v958, %v958
        %v1504 = vld [vmem:[#allocation13] sm:$0xff]
        %v1505 = vld [vmem:[#allocation13 + $0x8] sm:$0xff]
        %v1506 = vld [vmem:[#allocation13 + $0x10] sm:$0xff]
        %v1507 = vld [vmem:[#allocation13 + $0x18] sm:$0xff]
        %v1508 = vld [vmem:[#allocation13 + $0x20] sm:$0xff]
        %v1509 = vld [vmem:[#allocation13 + $0x28] sm:$0xff]
        %v1510 = vld [vmem:[#allocation13 + $0x30] sm:$0xff]
        %v1511 = vld [vmem:[#allocation13 + $0x38] sm:$0xff]
        %v1512 = vld [vmem:[#allocation13 + $0x40] sm:$0xff]
        %v1513 = vld [vmem:[#allocation13 + $0x48] sm:$0xff]
        %v1514 = vld [vmem:[#allocation13 + $0x50] sm:$0xff]
        %v1515 = vld [vmem:[#allocation13 + $0x58] sm:$0xff]
        %v1516 = vld [vmem:[#allocation13 + $0x60] sm:$0xff]
        %v1517 = vld [vmem:[#allocation13 + $0x68] sm:$0xff]
        %v1518 = vld [vmem:[#allocation13 + $0x70] sm:$0xff]
        %v1519 = vld [vmem:[#allocation13 + $0x78] sm:$0xff]
        %v1520 = vld [vmem:[#allocation13 + $0x80] sm:$0xff]
        %v1521 = vld [vmem:[#allocation13 + $0x88] sm:$0xff]
        %v1522 = vld [vmem:[#allocation13 + $0x90] sm:$0xff]
        %v1523 = vld [vmem:[#allocation13 + $0x98] sm:$0xff]
        %v1524 = vld [vmem:[#allocation13 + $0xa0] sm:$0xff]
        %v1525 = vld [vmem:[#allocation13 + $0xa8] sm:$0xff]
        %v1526 = vld [vmem:[#allocation13 + $0xb0] sm:$0xff]
        %v1527 = vld [vmem:[#allocation13 + $0xb8] sm:$0xff]
        %v1528 = vld [vmem:[#allocation13 + $0xc0] sm:$0xff]
        %v1529 = vld [vmem:[#allocation13 + $0xc8] sm:$0xff]
        %v1530 = vld [vmem:[#allocation13 + $0xd0] sm:$0xff]
        %v1531 = vld [vmem:[#allocation13 + $0xd8] sm:$0xff]
        %v1532 = vld [vmem:[#allocation13 + $0xe0] sm:$0xff]
        %v1533 = vld [vmem:[#allocation13 + $0xe8] sm:$0xff]
        %v1534 = vld [vmem:[#allocation13 + $0xf0] sm:$0xff]
        %v1535 = vld [vmem:[#allocation13 + $0xf8] sm:$0xff]
        %v1536 = vld [vmem:[#allocation13 + $0x100] sm:$0xff]
        %v1537 = vld [vmem:[#allocation13 + $0x108] sm:$0xff]
        %v1538 = vld [vmem:[#allocation13 + $0x110] sm:$0xff]
        %v1539 = vld [vmem:[#allocation13 + $0x118] sm:$0xff]
        %v1540 = vld [vmem:[#allocation13 + $0x120] sm:$0xff]
        %v1541 = vld [vmem:[#allocation13 + $0x128] sm:$0xff]
        %v1542 = vld [vmem:[#allocation13 + $0x130] sm:$0xff]
        %v1543 = vld [vmem:[#allocation13 + $0x138] sm:$0xff]
        %v1544 = vld [vmem:[#allocation13 + $0x140] sm:$0xff]
        %v1545 = vld [vmem:[#allocation13 + $0x148] sm:$0xff]
        %v1546 = vld [vmem:[#allocation13 + $0x150] sm:$0xff]
        %v1547 = vld [vmem:[#allocation13 + $0x158] sm:$0xff]
        %v1548 = vld [vmem:[#allocation13 + $0x160] sm:$0xff]
        %v1549 = vld [vmem:[#allocation13 + $0x168] sm:$0xff]
        %v1550 = vld [vmem:[#allocation13 + $0x170] sm:$0xff]
        %v1551 = vld [vmem:[#allocation13 + $0x178] sm:$0xff]
        %v1552 = vld [vmem:[#allocation13 + $0x180] sm:$0xff]
        %v1553 = vld [vmem:[#allocation13 + $0x188] sm:$0xff]
        %v1554 = vld [vmem:[#allocation13 + $0x190] sm:$0xff]
        %v1555 = vld [vmem:[#allocation13 + $0x198] sm:$0xff]
        %v1556 = vld [vmem:[#allocation13 + $0x1a0] sm:$0xff]
        %v1557 = vld [vmem:[#allocation13 + $0x1a8] sm:$0xff]
        %v1558 = vld [vmem:[#allocation13 + $0x1b0] sm:$0xff]
        %v1559 = vld [vmem:[#allocation13 + $0x1b8] sm:$0xff]
        %v1560 = vld [vmem:[#allocation13 + $0x1c0] sm:$0xff]
        %v1561 = vld [vmem:[#allocation13 + $0x1c8] sm:$0xff]
        %v1562 = vld [vmem:[#allocation13 + $0x1d0] sm:$0xff]
        %v1563 = vld [vmem:[#allocation13 + $0x1d8] sm:$0xff]
        %v1564 = vld [vmem:[#allocation13 + $0x1e0] sm:$0xff]
        %v1565 = vld [vmem:[#allocation13 + $0x1e8] sm:$0xff]
        %v1566 = vld [vmem:[#allocation13 + $0x1f0] sm:$0xff]
        %v1567 = vld [vmem:[#allocation13 + $0x1f8] sm:$0xff]
        %v1569 = vperm.slane %v956, 0
        %v1570 = vperm.slane %v956, 1
        %v1571 = vperm.slane %v956, 2
        %v1572 = vperm.slane %v956, 3
        %v1641 = vunpack.c.l.b16 %v1504
        %v1642 = vunpack.c.h.b16 %v1504
        %v1643 = vunpack.c.l.b16 %v1505
        %v1644 = vunpack.c.h.b16 %v1505
        %v1645 = vunpack.c.l.b16 %v1506
        %v1646 = vunpack.c.h.b16 %v1506
        %v1647 = vunpack.c.l.b16 %v1507
        %v1648 = vunpack.c.h.b16 %v1507
        %v1649 = vunpack.c.l.b16 %v1508
        %v1650 = vunpack.c.h.b16 %v1508
        %v1651 = vunpack.c.l.b16 %v1509
        %v1652 = vunpack.c.h.b16 %v1509
        %v1653 = vunpack.c.l.b16 %v1510
        %v1654 = vunpack.c.h.b16 %v1510
        %v1655 = vunpack.c.l.b16 %v1511
        %v1656 = vunpack.c.h.b16 %v1511
        %v1657 = vunpack.c.l.b16 %v1512
        %v1658 = vunpack.c.h.b16 %v1512
        %v1659 = vunpack.c.l.b16 %v1513
        %v1660 = vunpack.c.h.b16 %v1513
        %v1661 = vunpack.c.l.b16 %v1514
        %v1662 = vunpack.c.h.b16 %v1514
        %v1663 = vunpack.c.l.b16 %v1515
        %v1664 = vunpack.c.h.b16 %v1515
        %v1665 = vunpack.c.l.b16 %v1516
        %v1666 = vunpack.c.h.b16 %v1516
        %v1667 = vunpack.c.l.b16 %v1517
        %v1668 = vunpack.c.h.b16 %v1517
        %v1669 = vunpack.c.l.b16 %v1518
        %v1670 = vunpack.c.h.b16 %v1518
        %v1671 = vunpack.c.l.b16 %v1519
        %v1672 = vunpack.c.h.b16 %v1519
        %v1673 = vunpack.c.l.b16 %v1520
        %v1674 = vunpack.c.h.b16 %v1520
        %v1675 = vunpack.c.l.b16 %v1521
        %v1676 = vunpack.c.h.b16 %v1521
        %v1677 = vunpack.c.l.b16 %v1522
        %v1678 = vunpack.c.h.b16 %v1522
        %v1679 = vunpack.c.l.b16 %v1523
        %v1680 = vunpack.c.h.b16 %v1523
        %v1681 = vunpack.c.l.b16 %v1524
        %v1682 = vunpack.c.h.b16 %v1524
        %v1683 = vunpack.c.l.b16 %v1525
        %v1684 = vunpack.c.h.b16 %v1525
        %v1685 = vunpack.c.l.b16 %v1526
        %v1686 = vunpack.c.h.b16 %v1526
        %v1687 = vunpack.c.l.b16 %v1527
        %v1688 = vunpack.c.h.b16 %v1527
        %v1689 = vunpack.c.l.b16 %v1528
        %v1690 = vunpack.c.h.b16 %v1528
        %v1691 = vunpack.c.l.b16 %v1529
        %v1692 = vunpack.c.h.b16 %v1529
        %v1693 = vunpack.c.l.b16 %v1530
        %v1694 = vunpack.c.h.b16 %v1530
        %v1695 = vunpack.c.l.b16 %v1531
        %v1696 = vunpack.c.h.b16 %v1531
        %v1697 = vunpack.c.l.b16 %v1532
        %v1698 = vunpack.c.h.b16 %v1532
        %v1699 = vunpack.c.l.b16 %v1533
        %v1700 = vunpack.c.h.b16 %v1533
        %v1701 = vunpack.c.l.b16 %v1534
        %v1702 = vunpack.c.h.b16 %v1534
        %v1703 = vunpack.c.l.b16 %v1535
        %v1704 = vunpack.c.h.b16 %v1535
        %v1705 = vunpack.c.l.b16 %v1536
        %v1706 = vunpack.c.h.b16 %v1536
        %v1707 = vunpack.c.l.b16 %v1537
        %v1708 = vunpack.c.h.b16 %v1537
        %v1709 = vunpack.c.l.b16 %v1538
        %v1710 = vunpack.c.h.b16 %v1538
        %v1711 = vunpack.c.l.b16 %v1539
        %v1712 = vunpack.c.h.b16 %v1539
        %v1713 = vunpack.c.l.b16 %v1540
        %v1714 = vunpack.c.h.b16 %v1540
        %v1715 = vunpack.c.l.b16 %v1541
        %v1716 = vunpack.c.h.b16 %v1541
        %v1717 = vunpack.c.l.b16 %v1542
        %v1718 = vunpack.c.h.b16 %v1542
        %v1719 = vunpack.c.l.b16 %v1543
        %v1720 = vunpack.c.h.b16 %v1543
        %v1721 = vunpack.c.l.b16 %v1544
        %v1722 = vunpack.c.h.b16 %v1544
        %v1723 = vunpack.c.l.b16 %v1545
        %v1724 = vunpack.c.h.b16 %v1545
        %v1725 = vunpack.c.l.b16 %v1546
        %v1726 = vunpack.c.h.b16 %v1546
        %v1727 = vunpack.c.l.b16 %v1547
        %v1728 = vunpack.c.h.b16 %v1547
        %v1729 = vunpack.c.l.b16 %v1548
        %v1730 = vunpack.c.h.b16 %v1548
        %v1731 = vunpack.c.l.b16 %v1549
        %v1732 = vunpack.c.h.b16 %v1549
        %v1733 = vunpack.c.l.b16 %v1550
        %v1734 = vunpack.c.h.b16 %v1550
        %v1735 = vunpack.c.l.b16 %v1551
        %v1736 = vunpack.c.h.b16 %v1551
        %v1737 = vunpack.c.l.b16 %v1552
        %v1738 = vunpack.c.h.b16 %v1552
        %v1739 = vunpack.c.l.b16 %v1553
        %v1740 = vunpack.c.h.b16 %v1553
        %v1741 = vunpack.c.l.b16 %v1554
        %v1742 = vunpack.c.h.b16 %v1554
        %v1743 = vunpack.c.l.b16 %v1555
        %v1744 = vunpack.c.h.b16 %v1555
        %v1745 = vunpack.c.l.b16 %v1556
        %v1746 = vunpack.c.h.b16 %v1556
        %v1747 = vunpack.c.l.b16 %v1557
        %v1748 = vunpack.c.h.b16 %v1557
        %v1749 = vunpack.c.l.b16 %v1558
        %v1750 = vunpack.c.h.b16 %v1558
        %v1751 = vunpack.c.l.b16 %v1559
        %v1752 = vunpack.c.h.b16 %v1559
        %v1753 = vunpack.c.l.b16 %v1560
        %v1754 = vunpack.c.h.b16 %v1560
        %v1755 = vunpack.c.l.b16 %v1561
        %v1756 = vunpack.c.h.b16 %v1561
        %v1757 = vunpack.c.l.b16 %v1562
        %v1758 = vunpack.c.h.b16 %v1562
        %v1759 = vunpack.c.l.b16 %v1563
        %v1760 = vunpack.c.h.b16 %v1563
        %v1761 = vunpack.c.l.b16 %v1564
        %v1762 = vunpack.c.h.b16 %v1564
        %v1763 = vunpack.c.l.b16 %v1565
        %v1764 = vunpack.c.h.b16 %v1565
        %v1765 = vunpack.c.l.b16 %v1566
        %v1766 = vunpack.c.h.b16 %v1566
        %v1767 = vunpack.c.l.b16 %v1567
        %v1768 = vunpack.c.h.b16 %v1567
        %v1769 = vpack.c.b16 %v1645, %v1641
        %v1770 = vpack.c.b16 %v1646, %v1642
        %v1771 = vpack.c.b16 %v1647, %v1643
        %v1772 = vpack.c.b16 %v1648, %v1644
        %v1773 = vpack.c.b16 %v1653, %v1649
        %v1774 = vpack.c.b16 %v1654, %v1650
        %v1775 = vpack.c.b16 %v1655, %v1651
        %v1776 = vpack.c.b16 %v1656, %v1652
        %v1777 = vpack.c.b16 %v1661, %v1657
        %v1778 = vpack.c.b16 %v1662, %v1658
        %v1779 = vpack.c.b16 %v1663, %v1659
        %v1780 = vpack.c.b16 %v1664, %v1660
        %v1781 = vpack.c.b16 %v1669, %v1665
        %v1782 = vpack.c.b16 %v1670, %v1666
        %v1783 = vpack.c.b16 %v1671, %v1667
        %v1784 = vpack.c.b16 %v1672, %v1668
        %v1785 = vpack.c.b16 %v1677, %v1673
        %v1786 = vpack.c.b16 %v1678, %v1674
        %v1787 = vpack.c.b16 %v1679, %v1675
        %v1788 = vpack.c.b16 %v1680, %v1676
        %v1789 = vpack.c.b16 %v1685, %v1681
        %v1790 = vpack.c.b16 %v1686, %v1682
        %v1791 = vpack.c.b16 %v1687, %v1683
        %v1792 = vpack.c.b16 %v1688, %v1684
        %v1793 = vpack.c.b16 %v1693, %v1689
        %v1794 = vpack.c.b16 %v1694, %v1690
        %v1795 = vpack.c.b16 %v1695, %v1691
        %v1796 = vpack.c.b16 %v1696, %v1692
        %v1797 = vpack.c.b16 %v1701, %v1697
        %v1798 = vpack.c.b16 %v1702, %v1698
        %v1799 = vpack.c.b16 %v1703, %v1699
        %v1800 = vpack.c.b16 %v1704, %v1700
        %v1801 = vpack.c.b16 %v1709, %v1705
        %v1802 = vpack.c.b16 %v1710, %v1706
        %v1803 = vpack.c.b16 %v1711, %v1707
        %v1804 = vpack.c.b16 %v1712, %v1708
        %v1805 = vpack.c.b16 %v1717, %v1713
        %v1806 = vpack.c.b16 %v1718, %v1714
        %v1807 = vpack.c.b16 %v1719, %v1715
        %v1808 = vpack.c.b16 %v1720, %v1716
        %v1809 = vpack.c.b16 %v1725, %v1721
        %v1810 = vpack.c.b16 %v1726, %v1722
        %v1811 = vpack.c.b16 %v1727, %v1723
        %v1812 = vpack.c.b16 %v1728, %v1724
        %v1813 = vpack.c.b16 %v1733, %v1729
        %v1814 = vpack.c.b16 %v1734, %v1730
        %v1815 = vpack.c.b16 %v1735, %v1731
        %v1816 = vpack.c.b16 %v1736, %v1732
        %v1817 = vpack.c.b16 %v1741, %v1737
        %v1818 = vpack.c.b16 %v1742, %v1738
        %v1819 = vpack.c.b16 %v1743, %v1739
        %v1820 = vpack.c.b16 %v1744, %v1740
        %v1821 = vpack.c.b16 %v1749, %v1745
        %v1822 = vpack.c.b16 %v1750, %v1746
        %v1823 = vpack.c.b16 %v1751, %v1747
        %v1824 = vpack.c.b16 %v1752, %v1748
        %v1825 = vpack.c.b16 %v1757, %v1753
        %v1826 = vpack.c.b16 %v1758, %v1754
        %v1827 = vpack.c.b16 %v1759, %v1755
        %v1828 = vpack.c.b16 %v1760, %v1756
        %v1829 = vpack.c.b16 %v1765, %v1761
        %v1830 = vpack.c.b16 %v1766, %v1762
        %v1831 = vpack.c.b16 %v1767, %v1763
        %v1832 = vpack.c.b16 %v1768, %v1764
        %1897 = vmatpush.bf16.msra.mxu0 %v1797
        %1898 = vmatpush.bf16.msra.mxu0 %v1793
        %1899 = vmatpush.bf16.msra.mxu0 %v1789
        %1900 = vmatpush.bf16.msra.mxu0 %v1785
        %1901 = vmatpush.bf16.msra.mxu0 %v1781
        %1902 = vmatpush.bf16.msra.mxu0 %v1777
        %1903 = vmatpush.bf16.msra.mxu0 %v1773
        %1904 = vmatpush.bf16.msra.mxu0 %v1769
        %1905 = vmatmul.bf16.gmra.mxu0 %v1502
        %v1906 = vpop.f32.mrf.mxu0
        %v1907 = vadd.f32 %v1569, %v1906
        %v1908 = vpop.f32.mrf.mxu0
        %1909 = vdwg.mxu0
        %1910 = vmatpush.bf16.msra.mxu0 %v1829
        %1911 = vmatpush.bf16.msra.mxu0 %v1825
        %1912 = vmatpush.bf16.msra.mxu0 %v1821
        %1913 = vmatpush.bf16.msra.mxu0 %v1817
        %1914 = vmatpush.bf16.msra.mxu0 %v1813
        %1915 = vmatpush.bf16.msra.mxu0 %v1809
        %1916 = vmatpush.bf16.msra.mxu0 %v1805
        %1917 = vmatpush.bf16.msra.mxu0 %v1801
        %1918 = vmatmul.bf16.gmra.mxu0 %v1503
        %v1919 = vpop.f32.mrf.mxu0
        %v1920 = vadd.f32 %v1907, %v1919
        %v1921 = vpop.f32.mrf.mxu0
        %1922 = vdwg.mxu0
        %1923 = vmatpush.bf16.msra.mxu0 %v1798
        %1924 = vmatpush.bf16.msra.mxu0 %v1794
        %1925 = vmatpush.bf16.msra.mxu0 %v1790
        %1926 = vmatpush.bf16.msra.mxu0 %v1786
        %1927 = vmatpush.bf16.msra.mxu0 %v1782
        %1928 = vmatpush.bf16.msra.mxu0 %v1778
        %1929 = vmatpush.bf16.msra.mxu0 %v1774
        %1930 = vmatpush.bf16.msra.mxu0 %v1770
        %1931 = vmatmul.bf16.gmra.mxu0 %v1502
        %v1932 = vpop.f32.mrf.mxu0
        %v1933 = vadd.f32 %v1570, %v1932
        %v1934 = vpop.f32.mrf.mxu0
        %1935 = vdwg.mxu0
        %1936 = vmatpush.bf16.msra.mxu0 %v1830
        %1937 = vmatpush.bf16.msra.mxu0 %v1826
        %1938 = vmatpush.bf16.msra.mxu0 %v1822
        %1939 = vmatpush.bf16.msra.mxu0 %v1818
        %1940 = vmatpush.bf16.msra.mxu0 %v1814
        %1941 = vmatpush.bf16.msra.mxu0 %v1810
        %1942 = vmatpush.bf16.msra.mxu0 %v1806
        %1943 = vmatpush.bf16.msra.mxu0 %v1802
        %1944 = vmatmul.bf16.gmra.mxu0 %v1503
        %v1945 = vpop.f32.mrf.mxu0
        %v1946 = vadd.f32 %v1933, %v1945
        %v1947 = vpop.f32.mrf.mxu0
        %1948 = vdwg.mxu0
        %1949 = vmatpush.bf16.msra.mxu0 %v1799
        %1950 = vmatpush.bf16.msra.mxu0 %v1795
        %1951 = vmatpush.bf16.msra.mxu0 %v1791
        %1952 = vmatpush.bf16.msra.mxu0 %v1787
        %1953 = vmatpush.bf16.msra.mxu0 %v1783
        %1954 = vmatpush.bf16.msra.mxu0 %v1779
        %1955 = vmatpush.bf16.msra.mxu0 %v1775
        %1956 = vmatpush.bf16.msra.mxu0 %v1771
        %1957 = vmatmul.bf16.gmra.mxu0 %v1502
        %v1958 = vpop.f32.mrf.mxu0
        %v1959 = vadd.f32 %v1571, %v1958
        %v1960 = vpop.f32.mrf.mxu0
        %1961 = vdwg.mxu0
        %1962 = vmatpush.bf16.msra.mxu0 %v1831
        %1963 = vmatpush.bf16.msra.mxu0 %v1827
        %1964 = vmatpush.bf16.msra.mxu0 %v1823
        %1965 = vmatpush.bf16.msra.mxu0 %v1819
        %1966 = vmatpush.bf16.msra.mxu0 %v1815
        %1967 = vmatpush.bf16.msra.mxu0 %v1811
        %1968 = vmatpush.bf16.msra.mxu0 %v1807
        %1969 = vmatpush.bf16.msra.mxu0 %v1803
        %1970 = vmatmul.bf16.gmra.mxu0 %v1503
        %v1971 = vpop.f32.mrf.mxu0
        %v1972 = vadd.f32 %v1959, %v1971
        %v1973 = vpop.f32.mrf.mxu0
        %1974 = vdwg.mxu0
        %1975 = vmatpush.bf16.msra.mxu0 %v1800
        %1976 = vmatpush.bf16.msra.mxu0 %v1796
        %1977 = vmatpush.bf16.msra.mxu0 %v1792
        %1978 = vmatpush.bf16.msra.mxu0 %v1788
        %1979 = vmatpush.bf16.msra.mxu0 %v1784
        %1980 = vmatpush.bf16.msra.mxu0 %v1780
        %1981 = vmatpush.bf16.msra.mxu0 %v1776
        %1982 = vmatpush.bf16.msra.mxu0 %v1772
        %1983 = vmatmul.bf16.gmra.mxu0 %v1502
        %v1984 = vpop.f32.mrf.mxu0
        %v1985 = vadd.f32 %v1572, %v1984
        %v1986 = vpop.f32.mrf.mxu0
        %1987 = vdwg.mxu0
        %1988 = vmatpush.bf16.msra.mxu0 %v1832
        %1989 = vmatpush.bf16.msra.mxu0 %v1828
        %1990 = vmatpush.bf16.msra.mxu0 %v1824
        %1991 = vmatpush.bf16.msra.mxu0 %v1820
        %1992 = vmatpush.bf16.msra.mxu0 %v1816
        %1993 = vmatpush.bf16.msra.mxu0 %v1812
        %1994 = vmatpush.bf16.msra.mxu0 %v1808
        %1995 = vmatpush.bf16.msra.mxu0 %v1804
        %1996 = vmatmul.bf16.gmra.mxu0 %v1503
        %v1997 = vpop.f32.mrf.mxu0
        %v1998 = vadd.f32 %v1985, %v1997
        %v1999 = vpop.f32.mrf.mxu0
        %2000 = vdwg.mxu0
        %v2001 = vxor.u32 %v1920, 2147483648
        %v2002 = vmul.f32 %v2001, 1.442695
        %v2003 = vpow.pop %v2002
        %v2004 = vadd.f32 %v2003, 1.0
        %v2005 = vrcp.pop %v2004
        %v2006 = vmul.f32 %v2004, %v2005
        %v2007 = vsub.f32 1.0, %v2006
        %v2008 = vmul.f32 %v2005, %v2007
        %v2009 = vadd.f32 %v2005, %v2008
        %vm2010 = vweird.f32 %v2004
        %vm2011 = vweird.f32 %v2005
        %vm2012 = vmor %vm2010, %vm2011
        %v2013 = vsel %vm2012, %v2005, %v2009
        %v2014 = vand.u32 2147483647, %v2004
        %vm2015 = vcmp.eq.f32.partialorder %v2014, 8.507059e+37
        %v2016 = vand.u32 %v2004, 2147483648
        %v2017 = vor.u32 1.1754944e-38, %v2016
        %v2018 = vsel %vm2015, %v2017, %v2013
        %v2019 = vmul.f32 1.0, %v2018
        %v2020 = vxor.u32 %v1946, 2147483648
        %v2021 = vmul.f32 %v2020, 1.442695
        %v2022 = vpow.pop %v2021
        %v2023 = vadd.f32 %v2022, 1.0
        %v2024 = vrcp.pop %v2023
        %v2025 = vmul.f32 %v2023, %v2024
        %v2026 = vsub.f32 1.0, %v2025
        %v2027 = vmul.f32 %v2024, %v2026
        %v2028 = vadd.f32 %v2024, %v2027
        %vm2029 = vweird.f32 %v2023
        %vm2030 = vweird.f32 %v2024
        %vm2031 = vmor %vm2029, %vm2030
        %v2032 = vsel %vm2031, %v2024, %v2028
        %v2033 = vand.u32 2147483647, %v2023
        %vm2034 = vcmp.eq.f32.partialorder %v2033, 8.507059e+37
        %v2035 = vand.u32 %v2023, 2147483648
        %v2036 = vor.u32 1.1754944e-38, %v2035
        %v2037 = vsel %vm2034, %v2036, %v2032
        %v2038 = vmul.f32 1.0, %v2037
        %v2039 = vmul.f32 %v2038, %v1998
        %v2040 = vadd.f32 %v1972, %v2039
        %v2041 = vtanh.pop %v2040
        %v2042 = vsub.f32 1.0, %v2019
        %v2043 = vmul.f32 %v2042, %v2041
        %v2044 = vmul.f32 %v2019, %v958
        %v2045 = vadd.f32 %v2043, %v2044
        %2046 = vmatpush.bf16.msra.mxu0 %v1253
        %2047 = vmatpush.bf16.msra.mxu0 %v1249
        %2048 = vmatpush.bf16.msra.mxu0 %v1245
        %2049 = vmatpush.bf16.msra.mxu0 %v1241
        %2050 = vmatpush.bf16.msra.mxu0 %v1237
        %2051 = vmatpush.bf16.msra.mxu0 %v1233
        %2052 = vmatpush.bf16.msra.mxu0 %v1229
        %2053 = vmatpush.bf16.msra.mxu0 %v1225
        %2054 = vmatmul.bf16.gmra.mxu0 %v948
        %v2055 = vpop.f32.mrf.mxu0
        %v2056 = vadd.f32 %v1025, %v2055
        %v2057 = vpop.f32.mrf.mxu0
        %2058 = vdwg.mxu0
        %2059 = vmatpush.bf16.msra.mxu0 %v1285
        %2060 = vmatpush.bf16.msra.mxu0 %v1281
        %2061 = vmatpush.bf16.msra.mxu0 %v1277
        %2062 = vmatpush.bf16.msra.mxu0 %v1273
        %2063 = vmatpush.bf16.msra.mxu0 %v1269
        %2064 = vmatpush.bf16.msra.mxu0 %v1265
        %2065 = vmatpush.bf16.msra.mxu0 %v1261
        %2066 = vmatpush.bf16.msra.mxu0 %v1257
        %2067 = vmatmul.bf16.gmra.mxu0 %v1502
        %v2068 = vpop.f32.mrf.mxu0
        %v2069 = vadd.f32 %v2056, %v2068
        %v2070 = vpop.f32.mrf.mxu0
        %2071 = vdwg.mxu0
        %2072 = vmatpush.bf16.msra.mxu0 %v1254
        %2073 = vmatpush.bf16.msra.mxu0 %v1250
        %2074 = vmatpush.bf16.msra.mxu0 %v1246
        %2075 = vmatpush.bf16.msra.mxu0 %v1242
        %2076 = vmatpush.bf16.msra.mxu0 %v1238
        %2077 = vmatpush.bf16.msra.mxu0 %v1234
        %2078 = vmatpush.bf16.msra.mxu0 %v1230
        %2079 = vmatpush.bf16.msra.mxu0 %v1226
        %2080 = vmatmul.bf16.gmra.mxu0 %v948
        %v2081 = vpop.f32.mrf.mxu0
        %v2082 = vadd.f32 %v1026, %v2081
        %v2083 = vpop.f32.mrf.mxu0
        %2084 = vdwg.mxu0
        %2085 = vmatpush.bf16.msra.mxu0 %v1286
        %2086 = vmatpush.bf16.msra.mxu0 %v1282
        %2087 = vmatpush.bf16.msra.mxu0 %v1278
        %2088 = vmatpush.bf16.msra.mxu0 %v1274
        %2089 = vmatpush.bf16.msra.mxu0 %v1270
        %2090 = vmatpush.bf16.msra.mxu0 %v1266
        %2091 = vmatpush.bf16.msra.mxu0 %v1262
        %2092 = vmatpush.bf16.msra.mxu0 %v1258
        %2093 = vmatmul.bf16.gmra.mxu0 %v1502
        %v2094 = vpop.f32.mrf.mxu0
        %v2095 = vadd.f32 %v2082, %v2094
        %v2096 = vpop.f32.mrf.mxu0
        %2097 = vdwg.mxu0
        %2098 = vmatpush.bf16.msra.mxu0 %v1255
        %2099 = vmatpush.bf16.msra.mxu0 %v1251
        %2100 = vmatpush.bf16.msra.mxu0 %v1247
        %2101 = vmatpush.bf16.msra.mxu0 %v1243
        %2102 = vmatpush.bf16.msra.mxu0 %v1239
        %2103 = vmatpush.bf16.msra.mxu0 %v1235
        %2104 = vmatpush.bf16.msra.mxu0 %v1231
        %2105 = vmatpush.bf16.msra.mxu0 %v1227
        %2106 = vmatmul.bf16.gmra.mxu0 %v948
        %v2107 = vpop.f32.mrf.mxu0
        %v2108 = vadd.f32 %v1027, %v2107
        %v2109 = vpop.f32.mrf.mxu0
        %2110 = vdwg.mxu0
        %2111 = vmatpush.bf16.msra.mxu0 %v1287
        %2112 = vmatpush.bf16.msra.mxu0 %v1283
        %2113 = vmatpush.bf16.msra.mxu0 %v1279
        %2114 = vmatpush.bf16.msra.mxu0 %v1275
        %2115 = vmatpush.bf16.msra.mxu0 %v1271
        %2116 = vmatpush.bf16.msra.mxu0 %v1267
        %2117 = vmatpush.bf16.msra.mxu0 %v1263
        %2118 = vmatpush.bf16.msra.mxu0 %v1259
        %2119 = vmatmul.bf16.gmra.mxu0 %v1502
        %v2120 = vpop.f32.mrf.mxu0
        %v2121 = vadd.f32 %v2108, %v2120
        %v2122 = vpop.f32.mrf.mxu0
        %2123 = vdwg.mxu0
        %2124 = vmatpush.bf16.msra.mxu0 %v1256
        %2125 = vmatpush.bf16.msra.mxu0 %v1252
        %2126 = vmatpush.bf16.msra.mxu0 %v1248
        %2127 = vmatpush.bf16.msra.mxu0 %v1244
        %2128 = vmatpush.bf16.msra.mxu0 %v1240
        %2129 = vmatpush.bf16.msra.mxu0 %v1236
        %2130 = vmatpush.bf16.msra.mxu0 %v1232
        %2131 = vmatpush.bf16.msra.mxu0 %v1228
        %2132 = vmatmul.bf16.gmra.mxu0 %v948
        %v2133 = vpop.f32.mrf.mxu0
        %v2134 = vadd.f32 %v1028, %v2133
        %v2135 = vpop.f32.mrf.mxu0
        %2136 = vdwg.mxu0
        %2137 = vmatpush.bf16.msra.mxu0 %v1288
        %2138 = vmatpush.bf16.msra.mxu0 %v1284
        %2139 = vmatpush.bf16.msra.mxu0 %v1280
        %2140 = vmatpush.bf16.msra.mxu0 %v1276
        %2141 = vmatpush.bf16.msra.mxu0 %v1272
        %2142 = vmatpush.bf16.msra.mxu0 %v1268
        %2143 = vmatpush.bf16.msra.mxu0 %v1264
        %2144 = vmatpush.bf16.msra.mxu0 %v1260
        %2145 = vmatmul.bf16.gmra.mxu0 %v1502
        %v2146 = vpop.f32.mrf.mxu0
        %v2147 = vadd.f32 %v2134, %v2146
        %v2148 = vpop.f32.mrf.mxu0
        %2149 = vdwg.mxu0
        %v2150 = vxor.u32 %v2069, 2147483648
        %v2151 = vmul.f32 %v2150, 1.442695
        %v2152 = vpow.pop %v2151
        %v2153 = vadd.f32 %v2152, 1.0
        %v2154 = vrcp.pop %v2153
        %v2155 = vmul.f32 %v2153, %v2154
        %v2156 = vsub.f32 1.0, %v2155
        %v2157 = vmul.f32 %v2154, %v2156
        %v2158 = vadd.f32 %v2154, %v2157
        %vm2159 = vweird.f32 %v2153
        %vm2160 = vweird.f32 %v2154
        %vm2161 = vmor %vm2159, %vm2160
        %v2162 = vsel %vm2161, %v2154, %v2158
        %v2163 = vand.u32 2147483647, %v2153
        %vm2164 = vcmp.eq.f32.partialorder %v2163, 8.507059e+37
        %v2165 = vand.u32 %v2153, 2147483648
        %v2166 = vor.u32 1.1754944e-38, %v2165
        %v2167 = vsel %vm2164, %v2166, %v2162
        %v2168 = vmul.f32 1.0, %v2167
        %v2169 = vxor.u32 %v2095, 2147483648
        %v2170 = vmul.f32 %v2169, 1.442695
        %v2171 = vpow.pop %v2170
        %v2172 = vadd.f32 %v2171, 1.0
        %v2173 = vrcp.pop %v2172
        %v2174 = vmul.f32 %v2172, %v2173
        %v2175 = vsub.f32 1.0, %v2174
        %v2176 = vmul.f32 %v2173, %v2175
        %v2177 = vadd.f32 %v2173, %v2176
        %vm2178 = vweird.f32 %v2172
        %vm2179 = vweird.f32 %v2173
        %vm2180 = vmor %vm2178, %vm2179
        %v2181 = vsel %vm2180, %v2173, %v2177
        %v2182 = vand.u32 2147483647, %v2172
        %vm2183 = vcmp.eq.f32.partialorder %v2182, 8.507059e+37
        %v2184 = vand.u32 %v2172, 2147483648
        %v2185 = vor.u32 1.1754944e-38, %v2184
        %v2186 = vsel %vm2183, %v2185, %v2181
        %v2187 = vmul.f32 1.0, %v2186
        %v2188 = vmul.f32 %v2187, %v2147
        %v2189 = vadd.f32 %v2121, %v2188
        %v2190 = vtanh.pop %v2189
        %v2191 = vsub.f32 1.0, %v2168
        %v2192 = vmul.f32 %v2191, %v2190
        %v2193 = vmul.f32 %v2168, %v1501
        %v2194 = vadd.f32 %v2192, %v2193
        %v2195 = vpack.c.bf16 %v2194, %v2194
        %v2196 = vpack.c.bf16 %v2045, %v2045
        %2197 = vmatpush.bf16.msra.mxu0 %v1797
        %2198 = vmatpush.bf16.msra.mxu0 %v1793
        %2199 = vmatpush.bf16.msra.mxu0 %v1789
        %2200 = vmatpush.bf16.msra.mxu0 %v1785
        %2201 = vmatpush.bf16.msra.mxu0 %v1781
        %2202 = vmatpush.bf16.msra.mxu0 %v1777
        %2203 = vmatpush.bf16.msra.mxu0 %v1773
        %2204 = vmatpush.bf16.msra.mxu0 %v1769
        %2205 = vmatmul.bf16.gmra.mxu0 %v2195
        %v2206 = vpop.f32.mrf.mxu0
        %v2207 = vadd.f32 %v1569, %v2206
        %v2208 = vpop.f32.mrf.mxu0
        %2209 = vdwg.mxu0
        %2210 = vmatpush.bf16.msra.mxu0 %v1829
        %2211 = vmatpush.bf16.msra.mxu0 %v1825
        %2212 = vmatpush.bf16.msra.mxu0 %v1821
        %2213 = vmatpush.bf16.msra.mxu0 %v1817
        %2214 = vmatpush.bf16.msra.mxu0 %v1813
        %2215 = vmatpush.bf16.msra.mxu0 %v1809
        %2216 = vmatpush.bf16.msra.mxu0 %v1805
        %2217 = vmatpush.bf16.msra.mxu0 %v1801
        %2218 = vmatmul.bf16.gmra.mxu0 %v2196
        %v2219 = vpop.f32.mrf.mxu0
        %v2220 = vadd.f32 %v2207, %v2219
        %v2221 = vpop.f32.mrf.mxu0
        %2222 = vdwg.mxu0
        %2223 = vmatpush.bf16.msra.mxu0 %v1798
        %2224 = vmatpush.bf16.msra.mxu0 %v1794
        %2225 = vmatpush.bf16.msra.mxu0 %v1790
        %2226 = vmatpush.bf16.msra.mxu0 %v1786
        %2227 = vmatpush.bf16.msra.mxu0 %v1782
        %2228 = vmatpush.bf16.msra.mxu0 %v1778
        %2229 = vmatpush.bf16.msra.mxu0 %v1774
        %2230 = vmatpush.bf16.msra.mxu0 %v1770
        %2231 = vmatmul.bf16.gmra.mxu0 %v2195
        %v2232 = vpop.f32.mrf.mxu0
        %v2233 = vadd.f32 %v1570, %v2232
        %v2234 = vpop.f32.mrf.mxu0
        %2235 = vdwg.mxu0
        %2236 = vmatpush.bf16.msra.mxu0 %v1830
        %2237 = vmatpush.bf16.msra.mxu0 %v1826
        %2238 = vmatpush.bf16.msra.mxu0 %v1822
        %2239 = vmatpush.bf16.msra.mxu0 %v1818
        %2240 = vmatpush.bf16.msra.mxu0 %v1814
        %2241 = vmatpush.bf16.msra.mxu0 %v1810
        %2242 = vmatpush.bf16.msra.mxu0 %v1806
        %2243 = vmatpush.bf16.msra.mxu0 %v1802
        %2244 = vmatmul.bf16.gmra.mxu0 %v2196
        %v2245 = vpop.f32.mrf.mxu0
        %v2246 = vadd.f32 %v2233, %v2245
        %v2247 = vpop.f32.mrf.mxu0
        %2248 = vdwg.mxu0
        %2249 = vmatpush.bf16.msra.mxu0 %v1799
        %2250 = vmatpush.bf16.msra.mxu0 %v1795
        %2251 = vmatpush.bf16.msra.mxu0 %v1791
        %2252 = vmatpush.bf16.msra.mxu0 %v1787
        %2253 = vmatpush.bf16.msra.mxu0 %v1783
        %2254 = vmatpush.bf16.msra.mxu0 %v1779
        %2255 = vmatpush.bf16.msra.mxu0 %v1775
        %2256 = vmatpush.bf16.msra.mxu0 %v1771
        %2257 = vmatmul.bf16.gmra.mxu0 %v2195
        %v2258 = vpop.f32.mrf.mxu0
        %v2259 = vadd.f32 %v1571, %v2258
        %v2260 = vpop.f32.mrf.mxu0
        %2261 = vdwg.mxu0
        %2262 = vmatpush.bf16.msra.mxu0 %v1831
        %2263 = vmatpush.bf16.msra.mxu0 %v1827
        %2264 = vmatpush.bf16.msra.mxu0 %v1823
        %2265 = vmatpush.bf16.msra.mxu0 %v1819
        %2266 = vmatpush.bf16.msra.mxu0 %v1815
        %2267 = vmatpush.bf16.msra.mxu0 %v1811
        %2268 = vmatpush.bf16.msra.mxu0 %v1807
        %2269 = vmatpush.bf16.msra.mxu0 %v1803
        %2270 = vmatmul.bf16.gmra.mxu0 %v2196
        %v2271 = vpop.f32.mrf.mxu0
        %v2272 = vadd.f32 %v2259, %v2271
        %v2273 = vpop.f32.mrf.mxu0
        %2274 = vdwg.mxu0
        %2275 = vmatpush.bf16.msra.mxu0 %v1800
        %2276 = vmatpush.bf16.msra.mxu0 %v1796
        %2277 = vmatpush.bf16.msra.mxu0 %v1792
        %2278 = vmatpush.bf16.msra.mxu0 %v1788
        %2279 = vmatpush.bf16.msra.mxu0 %v1784
        %2280 = vmatpush.bf16.msra.mxu0 %v1780
        %2281 = vmatpush.bf16.msra.mxu0 %v1776
        %2282 = vmatpush.bf16.msra.mxu0 %v1772
        %2283 = vmatmul.bf16.gmra.mxu0 %v2195
        %v2284 = vpop.f32.mrf.mxu0
        %v2285 = vadd.f32 %v1572, %v2284
        %v2286 = vpop.f32.mrf.mxu0
        %2287 = vdwg.mxu0
        %2288 = vmatpush.bf16.msra.mxu0 %v1832
        %2289 = vmatpush.bf16.msra.mxu0 %v1828
        %2290 = vmatpush.bf16.msra.mxu0 %v1824
        %2291 = vmatpush.bf16.msra.mxu0 %v1820
        %2292 = vmatpush.bf16.msra.mxu0 %v1816
        %2293 = vmatpush.bf16.msra.mxu0 %v1812
        %2294 = vmatpush.bf16.msra.mxu0 %v1808
        %2295 = vmatpush.bf16.msra.mxu0 %v1804
        %2296 = vmatmul.bf16.gmra.mxu0 %v2196
        %v2297 = vpop.f32.mrf.mxu0
        %v2298 = vadd.f32 %v2285, %v2297
        %v2299 = vpop.f32.mrf.mxu0
        %2300 = vdwg.mxu0
        %v2301 = vxor.u32 %v2220, 2147483648
        %v2302 = vmul.f32 %v2301, 1.442695
        %v2303 = vpow.pop %v2302
        %v2304 = vadd.f32 %v2303, 1.0
        %v2305 = vrcp.pop %v2304
        %v2306 = vmul.f32 %v2304, %v2305
        %v2307 = vsub.f32 1.0, %v2306
        %v2308 = vmul.f32 %v2305, %v2307
        %v2309 = vadd.f32 %v2305, %v2308
        %vm2310 = vweird.f32 %v2304
        %vm2311 = vweird.f32 %v2305
        %vm2312 = vmor %vm2310, %vm2311
        %v2313 = vsel %vm2312, %v2305, %v2309
        %v2314 = vand.u32 2147483647, %v2304
        %vm2315 = vcmp.eq.f32.partialorder %v2314, 8.507059e+37
        %v2316 = vand.u32 %v2304, 2147483648
        %v2317 = vor.u32 1.1754944e-38, %v2316
        %v2318 = vsel %vm2315, %v2317, %v2313
        %v2319 = vmul.f32 1.0, %v2318
        %v2320 = vxor.u32 %v2246, 2147483648
        %v2321 = vmul.f32 %v2320, 1.442695
        %v2322 = vpow.pop %v2321
        %v2323 = vadd.f32 %v2322, 1.0
        %v2324 = vrcp.pop %v2323
        %v2325 = vmul.f32 %v2323, %v2324
        %v2326 = vsub.f32 1.0, %v2325
        %v2327 = vmul.f32 %v2324, %v2326
        %v2328 = vadd.f32 %v2324, %v2327
        %vm2329 = vweird.f32 %v2323
        %vm2330 = vweird.f32 %v2324
        %vm2331 = vmor %vm2329, %vm2330
        %v2332 = vsel %vm2331, %v2324, %v2328
        %v2333 = vand.u32 2147483647, %v2323
        %vm2334 = vcmp.eq.f32.partialorder %v2333, 8.507059e+37
        %v2335 = vand.u32 %v2323, 2147483648
        %v2336 = vor.u32 1.1754944e-38, %v2335
        %v2337 = vsel %vm2334, %v2336, %v2332
        %v2338 = vmul.f32 1.0, %v2337
        %v2339 = vmul.f32 %v2338, %v2298
        %v2340 = vadd.f32 %v2272, %v2339
        %v2341 = vtanh.pop %v2340
        %v2342 = vsub.f32 1.0, %v2319
        %v2343 = vmul.f32 %v2342, %v2341
        %v2344 = vmul.f32 %v2319, %v2045
        %v2345 = vadd.f32 %v2343, %v2344
        %2346 = vmatpush.bf16.msra.mxu0 %v1253
        %2347 = vmatpush.bf16.msra.mxu0 %v1249
        %2348 = vmatpush.bf16.msra.mxu0 %v1245
        %2349 = vmatpush.bf16.msra.mxu0 %v1241
        %2350 = vmatpush.bf16.msra.mxu0 %v1237
        %2351 = vmatpush.bf16.msra.mxu0 %v1233
        %2352 = vmatpush.bf16.msra.mxu0 %v1229
        %2353 = vmatpush.bf16.msra.mxu0 %v1225
        %2354 = vmatmul.bf16.gmra.mxu0 %v949
        %v2355 = vpop.f32.mrf.mxu0
        %v2356 = vadd.f32 %v1025, %v2355
        %v2357 = vpop.f32.mrf.mxu0
        %2358 = vdwg.mxu0
        %2359 = vmatpush.bf16.msra.mxu0 %v1285
        %2360 = vmatpush.bf16.msra.mxu0 %v1281
        %2361 = vmatpush.bf16.msra.mxu0 %v1277
        %2362 = vmatpush.bf16.msra.mxu0 %v1273
        %2363 = vmatpush.bf16.msra.mxu0 %v1269
        %2364 = vmatpush.bf16.msra.mxu0 %v1265
        %2365 = vmatpush.bf16.msra.mxu0 %v1261
        %2366 = vmatpush.bf16.msra.mxu0 %v1257
        %2367 = vmatmul.bf16.gmra.mxu0 %v2195
        %v2368 = vpop.f32.mrf.mxu0
        %v2369 = vadd.f32 %v2356, %v2368
        %v2370 = vpop.f32.mrf.mxu0
        %2371 = vdwg.mxu0
        %2372 = vmatpush.bf16.msra.mxu0 %v1254
        %2373 = vmatpush.bf16.msra.mxu0 %v1250
        %2374 = vmatpush.bf16.msra.mxu0 %v1246
        %2375 = vmatpush.bf16.msra.mxu0 %v1242
        %2376 = vmatpush.bf16.msra.mxu0 %v1238
        %2377 = vmatpush.bf16.msra.mxu0 %v1234
        %2378 = vmatpush.bf16.msra.mxu0 %v1230
        %2379 = vmatpush.bf16.msra.mxu0 %v1226
        %2380 = vmatmul.bf16.gmra.mxu0 %v949
        %v2381 = vpop.f32.mrf.mxu0
        %v2382 = vadd.f32 %v1026, %v2381
        %v2383 = vpop.f32.mrf.mxu0
        %2384 = vdwg.mxu0
        %2385 = vmatpush.bf16.msra.mxu0 %v1286
        %2386 = vmatpush.bf16.msra.mxu0 %v1282
        %2387 = vmatpush.bf16.msra.mxu0 %v1278
        %2388 = vmatpush.bf16.msra.mxu0 %v1274
        %2389 = vmatpush.bf16.msra.mxu0 %v1270
        %2390 = vmatpush.bf16.msra.mxu0 %v1266
        %2391 = vmatpush.bf16.msra.mxu0 %v1262
        %2392 = vmatpush.bf16.msra.mxu0 %v1258
        %2393 = vmatmul.bf16.gmra.mxu0 %v2195
        %v2394 = vpop.f32.mrf.mxu0
        %v2395 = vadd.f32 %v2382, %v2394
        %v2396 = vpop.f32.mrf.mxu0
        %2397 = vdwg.mxu0
        %2398 = vmatpush.bf16.msra.mxu0 %v1255
        %2399 = vmatpush.bf16.msra.mxu0 %v1251
        %2400 = vmatpush.bf16.msra.mxu0 %v1247
        %2401 = vmatpush.bf16.msra.mxu0 %v1243
        %2402 = vmatpush.bf16.msra.mxu0 %v1239
        %2403 = vmatpush.bf16.msra.mxu0 %v1235
        %2404 = vmatpush.bf16.msra.mxu0 %v1231
        %2405 = vmatpush.bf16.msra.mxu0 %v1227
        %2406 = vmatmul.bf16.gmra.mxu0 %v949
        %v2407 = vpop.f32.mrf.mxu0
        %v2408 = vadd.f32 %v1027, %v2407
        %v2409 = vpop.f32.mrf.mxu0
        %2410 = vdwg.mxu0
        %2411 = vmatpush.bf16.msra.mxu0 %v1287
        %2412 = vmatpush.bf16.msra.mxu0 %v1283
        %2413 = vmatpush.bf16.msra.mxu0 %v1279
        %2414 = vmatpush.bf16.msra.mxu0 %v1275
        %2415 = vmatpush.bf16.msra.mxu0 %v1271
        %2416 = vmatpush.bf16.msra.mxu0 %v1267
        %2417 = vmatpush.bf16.msra.mxu0 %v1263
        %2418 = vmatpush.bf16.msra.mxu0 %v1259
        %2419 = vmatmul.bf16.gmra.mxu0 %v2195
        %v2420 = vpop.f32.mrf.mxu0
        %v2421 = vadd.f32 %v2408, %v2420
        %v2422 = vpop.f32.mrf.mxu0
        %2423 = vdwg.mxu0
        %2424 = vmatpush.bf16.msra.mxu0 %v1256
        %2425 = vmatpush.bf16.msra.mxu0 %v1252
        %2426 = vmatpush.bf16.msra.mxu0 %v1248
        %2427 = vmatpush.bf16.msra.mxu0 %v1244
        %2428 = vmatpush.bf16.msra.mxu0 %v1240
        %2429 = vmatpush.bf16.msra.mxu0 %v1236
        %2430 = vmatpush.bf16.msra.mxu0 %v1232
        %2431 = vmatpush.bf16.msra.mxu0 %v1228
        %2432 = vmatmul.bf16.gmra.mxu0 %v949
        %v2433 = vpop.f32.mrf.mxu0
        %v2434 = vadd.f32 %v1028, %v2433
        %v2435 = vpop.f32.mrf.mxu0
        %2436 = vdwg.mxu0
        %2437 = vmatpush.bf16.msra.mxu0 %v1288
        %2438 = vmatpush.bf16.msra.mxu0 %v1284
        %2439 = vmatpush.bf16.msra.mxu0 %v1280
        %2440 = vmatpush.bf16.msra.mxu0 %v1276
        %2441 = vmatpush.bf16.msra.mxu0 %v1272
        %2442 = vmatpush.bf16.msra.mxu0 %v1268
        %2443 = vmatpush.bf16.msra.mxu0 %v1264
        %2444 = vmatpush.bf16.msra.mxu0 %v1260
        %2445 = vmatmul.bf16.gmra.mxu0 %v2195
        %v2446 = vpop.f32.mrf.mxu0
        %v2447 = vadd.f32 %v2434, %v2446
        %v2448 = vpop.f32.mrf.mxu0
        %2449 = vdwg.mxu0
        %v2450 = vxor.u32 %v2369, 2147483648
        %v2451 = vmul.f32 %v2450, 1.442695
        %v2452 = vpow.pop %v2451
        %v2453 = vadd.f32 %v2452, 1.0
        %v2454 = vrcp.pop %v2453
        %v2455 = vmul.f32 %v2453, %v2454
        %v2456 = vsub.f32 1.0, %v2455
        %v2457 = vmul.f32 %v2454, %v2456
        %v2458 = vadd.f32 %v2454, %v2457
        %vm2459 = vweird.f32 %v2453
        %vm2460 = vweird.f32 %v2454
        %vm2461 = vmor %vm2459, %vm2460
        %v2462 = vsel %vm2461, %v2454, %v2458
        %v2463 = vand.u32 2147483647, %v2453
        %vm2464 = vcmp.eq.f32.partialorder %v2463, 8.507059e+37
        %v2465 = vand.u32 %v2453, 2147483648
        %v2466 = vor.u32 1.1754944e-38, %v2465
        %v2467 = vsel %vm2464, %v2466, %v2462
        %v2468 = vmul.f32 1.0, %v2467
        %v2469 = vxor.u32 %v2395, 2147483648
        %v2470 = vmul.f32 %v2469, 1.442695
        %v2471 = vpow.pop %v2470
        %v2472 = vadd.f32 %v2471, 1.0
        %v2473 = vrcp.pop %v2472
        %v2474 = vmul.f32 %v2472, %v2473
        %v2475 = vsub.f32 1.0, %v2474
        %v2476 = vmul.f32 %v2473, %v2475
        %v2477 = vadd.f32 %v2473, %v2476
        %vm2478 = vweird.f32 %v2472
        %vm2479 = vweird.f32 %v2473
        %vm2480 = vmor %vm2478, %vm2479
        %v2481 = vsel %vm2480, %v2473, %v2477
        %v2482 = vand.u32 2147483647, %v2472
        %vm2483 = vcmp.eq.f32.partialorder %v2482, 8.507059e+37
        %v2484 = vand.u32 %v2472, 2147483648
        %v2485 = vor.u32 1.1754944e-38, %v2484
        %v2486 = vsel %vm2483, %v2485, %v2481
        %v2487 = vmul.f32 1.0, %v2486
        %v2488 = vmul.f32 %v2487, %v2447
        %v2489 = vadd.f32 %v2421, %v2488
        %v2490 = vtanh.pop %v2489
        %v2491 = vsub.f32 1.0, %v2468
        %v2492 = vmul.f32 %v2491, %v2490
        %v2493 = vmul.f32 %v2468, %v2194
        %v2494 = vadd.f32 %v2492, %v2493
        %v2495 = vpack.c.bf16 %v2494, %v2494
        %v2496 = vpack.c.bf16 %v2345, %v2345
        %2497 = vmatpush.bf16.msra.mxu0 %v1797
        %2498 = vmatpush.bf16.msra.mxu0 %v1793
        %2499 = vmatpush.bf16.msra.mxu0 %v1789
        %2500 = vmatpush.bf16.msra.mxu0 %v1785
        %2501 = vmatpush.bf16.msra.mxu0 %v1781
        %2502 = vmatpush.bf16.msra.mxu0 %v1777
        %2503 = vmatpush.bf16.msra.mxu0 %v1773
        %2504 = vmatpush.bf16.msra.mxu0 %v1769
        %2505 = vmatmul.bf16.gmra.mxu0 %v2495
        %v2506 = vpop.f32.mrf.mxu0
        %v2507 = vadd.f32 %v1569, %v2506
        %v2508 = vpop.f32.mrf.mxu0
        %2509 = vdwg.mxu0
        %2510 = vmatpush.bf16.msra.mxu0 %v1829
        %2511 = vmatpush.bf16.msra.mxu0 %v1825
        %2512 = vmatpush.bf16.msra.mxu0 %v1821
        %2513 = vmatpush.bf16.msra.mxu0 %v1817
        %2514 = vmatpush.bf16.msra.mxu0 %v1813
        %2515 = vmatpush.bf16.msra.mxu0 %v1809
        %2516 = vmatpush.bf16.msra.mxu0 %v1805
        %2517 = vmatpush.bf16.msra.mxu0 %v1801
        %2518 = vmatmul.bf16.gmra.mxu0 %v2496
        %v2519 = vpop.f32.mrf.mxu0
        %v2520 = vadd.f32 %v2507, %v2519
        %v2521 = vpop.f32.mrf.mxu0
        %2522 = vdwg.mxu0
        %2523 = vmatpush.bf16.msra.mxu0 %v1798
        %2524 = vmatpush.bf16.msra.mxu0 %v1794
        %2525 = vmatpush.bf16.msra.mxu0 %v1790
        %2526 = vmatpush.bf16.msra.mxu0 %v1786
        %2527 = vmatpush.bf16.msra.mxu0 %v1782
        %2528 = vmatpush.bf16.msra.mxu0 %v1778
        %2529 = vmatpush.bf16.msra.mxu0 %v1774
        %2530 = vmatpush.bf16.msra.mxu0 %v1770
        %2531 = vmatmul.bf16.gmra.mxu0 %v2495
        %v2532 = vpop.f32.mrf.mxu0
        %v2533 = vadd.f32 %v1570, %v2532
        %v2534 = vpop.f32.mrf.mxu0
        %2535 = vdwg.mxu0
        %2536 = vmatpush.bf16.msra.mxu0 %v1830
        %2537 = vmatpush.bf16.msra.mxu0 %v1826
        %2538 = vmatpush.bf16.msra.mxu0 %v1822
        %2539 = vmatpush.bf16.msra.mxu0 %v1818
        %2540 = vmatpush.bf16.msra.mxu0 %v1814
        %2541 = vmatpush.bf16.msra.mxu0 %v1810
        %2542 = vmatpush.bf16.msra.mxu0 %v1806
        %2543 = vmatpush.bf16.msra.mxu0 %v1802
        %2544 = vmatmul.bf16.gmra.mxu0 %v2496
        %v2545 = vpop.f32.mrf.mxu0
        %v2546 = vadd.f32 %v2533, %v2545
        %v2547 = vpop.f32.mrf.mxu0
        %2548 = vdwg.mxu0
        %2549 = vmatpush.bf16.msra.mxu0 %v1799
        %2550 = vmatpush.bf16.msra.mxu0 %v1795
        %2551 = vmatpush.bf16.msra.mxu0 %v1791
        %2552 = vmatpush.bf16.msra.mxu0 %v1787
        %2553 = vmatpush.bf16.msra.mxu0 %v1783
        %2554 = vmatpush.bf16.msra.mxu0 %v1779
        %2555 = vmatpush.bf16.msra.mxu0 %v1775
        %2556 = vmatpush.bf16.msra.mxu0 %v1771
        %2557 = vmatmul.bf16.gmra.mxu0 %v2495
        %v2558 = vpop.f32.mrf.mxu0
        %v2559 = vadd.f32 %v1571, %v2558
        %v2560 = vpop.f32.mrf.mxu0
        %2561 = vdwg.mxu0
        %2562 = vmatpush.bf16.msra.mxu0 %v1831
        %2563 = vmatpush.bf16.msra.mxu0 %v1827
        %2564 = vmatpush.bf16.msra.mxu0 %v1823
        %2565 = vmatpush.bf16.msra.mxu0 %v1819
        %2566 = vmatpush.bf16.msra.mxu0 %v1815
        %2567 = vmatpush.bf16.msra.mxu0 %v1811
        %2568 = vmatpush.bf16.msra.mxu0 %v1807
        %2569 = vmatpush.bf16.msra.mxu0 %v1803
        %2570 = vmatmul.bf16.gmra.mxu0 %v2496
        %v2571 = vpop.f32.mrf.mxu0
        %v2572 = vadd.f32 %v2559, %v2571
        %v2573 = vpop.f32.mrf.mxu0
        %2574 = vdwg.mxu0
        %2575 = vmatpush.bf16.msra.mxu0 %v1800
        %2576 = vmatpush.bf16.msra.mxu0 %v1796
        %2577 = vmatpush.bf16.msra.mxu0 %v1792
        %2578 = vmatpush.bf16.msra.mxu0 %v1788
        %2579 = vmatpush.bf16.msra.mxu0 %v1784
        %2580 = vmatpush.bf16.msra.mxu0 %v1780
        %2581 = vmatpush.bf16.msra.mxu0 %v1776
        %2582 = vmatpush.bf16.msra.mxu0 %v1772
        %2583 = vmatmul.bf16.gmra.mxu0 %v2495
        %v2584 = vpop.f32.mrf.mxu0
        %v2585 = vadd.f32 %v1572, %v2584
        %v2586 = vpop.f32.mrf.mxu0
        %2587 = vdwg.mxu0
        %2588 = vmatpush.bf16.msra.mxu0 %v1832
        %2589 = vmatpush.bf16.msra.mxu0 %v1828
        %2590 = vmatpush.bf16.msra.mxu0 %v1824
        %2591 = vmatpush.bf16.msra.mxu0 %v1820
        %2592 = vmatpush.bf16.msra.mxu0 %v1816
        %2593 = vmatpush.bf16.msra.mxu0 %v1812
        %2594 = vmatpush.bf16.msra.mxu0 %v1808
        %2595 = vmatpush.bf16.msra.mxu0 %v1804
        %2596 = vmatmul.bf16.gmra.mxu0 %v2496
        %v2597 = vpop.f32.mrf.mxu0
        %v2598 = vadd.f32 %v2585, %v2597
        %v2599 = vpop.f32.mrf.mxu0
        %2600 = vdwg.mxu0
        %v2601 = vxor.u32 %v2520, 2147483648
        %v2602 = vmul.f32 %v2601, 1.442695
        %v2603 = vpow.pop %v2602
        %v2604 = vadd.f32 %v2603, 1.0
        %v2605 = vrcp.pop %v2604
        %v2606 = vmul.f32 %v2604, %v2605
        %v2607 = vsub.f32 1.0, %v2606
        %v2608 = vmul.f32 %v2605, %v2607
        %v2609 = vadd.f32 %v2605, %v2608
        %vm2610 = vweird.f32 %v2604
        %vm2611 = vweird.f32 %v2605
        %vm2612 = vmor %vm2610, %vm2611
        %v2613 = vsel %vm2612, %v2605, %v2609
        %v2614 = vand.u32 2147483647, %v2604
        %vm2615 = vcmp.eq.f32.partialorder %v2614, 8.507059e+37
        %v2616 = vand.u32 %v2604, 2147483648
        %v2617 = vor.u32 1.1754944e-38, %v2616
        %v2618 = vsel %vm2615, %v2617, %v2613
        %v2619 = vmul.f32 1.0, %v2618
        %v2620 = vxor.u32 %v2546, 2147483648
        %v2621 = vmul.f32 %v2620, 1.442695
        %v2622 = vpow.pop %v2621
        %v2623 = vadd.f32 %v2622, 1.0
        %v2624 = vrcp.pop %v2623
        %v2625 = vmul.f32 %v2623, %v2624
        %v2626 = vsub.f32 1.0, %v2625
        %v2627 = vmul.f32 %v2624, %v2626
        %v2628 = vadd.f32 %v2624, %v2627
        %vm2629 = vweird.f32 %v2623
        %vm2630 = vweird.f32 %v2624
        %vm2631 = vmor %vm2629, %vm2630
        %v2632 = vsel %vm2631, %v2624, %v2628
        %v2633 = vand.u32 2147483647, %v2623
        %vm2634 = vcmp.eq.f32.partialorder %v2633, 8.507059e+37
        %v2635 = vand.u32 %v2623, 2147483648
        %v2636 = vor.u32 1.1754944e-38, %v2635
        %v2637 = vsel %vm2634, %v2636, %v2632
        %v2638 = vmul.f32 1.0, %v2637
        %v2639 = vmul.f32 %v2638, %v2598
        %v2640 = vadd.f32 %v2572, %v2639
        %v2641 = vtanh.pop %v2640
        %v2642 = vsub.f32 1.0, %v2619
        %v2643 = vmul.f32 %v2642, %v2641
        %v2644 = vmul.f32 %v2619, %v2345
        %v2645 = vadd.f32 %v2643, %v2644
        %2646 = vmatpush.bf16.msra.mxu0 %v1253
        %2647 = vmatpush.bf16.msra.mxu0 %v1249
        %2648 = vmatpush.bf16.msra.mxu0 %v1245
        %2649 = vmatpush.bf16.msra.mxu0 %v1241
        %2650 = vmatpush.bf16.msra.mxu0 %v1237
        %2651 = vmatpush.bf16.msra.mxu0 %v1233
        %2652 = vmatpush.bf16.msra.mxu0 %v1229
        %2653 = vmatpush.bf16.msra.mxu0 %v1225
        %2654 = vmatmul.bf16.gmra.mxu0 %v950
        %v2655 = vpop.f32.mrf.mxu0
        %v2656 = vadd.f32 %v1025, %v2655
        %v2657 = vpop.f32.mrf.mxu0
        %2658 = vdwg.mxu0
        %2659 = vmatpush.bf16.msra.mxu0 %v1285
        %2660 = vmatpush.bf16.msra.mxu0 %v1281
        %2661 = vmatpush.bf16.msra.mxu0 %v1277
        %2662 = vmatpush.bf16.msra.mxu0 %v1273
        %2663 = vmatpush.bf16.msra.mxu0 %v1269
        %2664 = vmatpush.bf16.msra.mxu0 %v1265
        %2665 = vmatpush.bf16.msra.mxu0 %v1261
        %2666 = vmatpush.bf16.msra.mxu0 %v1257
        %2667 = vmatmul.bf16.gmra.mxu0 %v2495
        %v2668 = vpop.f32.mrf.mxu0
        %v2669 = vadd.f32 %v2656, %v2668
        %v2670 = vpop.f32.mrf.mxu0
        %2671 = vdwg.mxu0
        %2672 = vmatpush.bf16.msra.mxu0 %v1254
        %2673 = vmatpush.bf16.msra.mxu0 %v1250
        %2674 = vmatpush.bf16.msra.mxu0 %v1246
        %2675 = vmatpush.bf16.msra.mxu0 %v1242
        %2676 = vmatpush.bf16.msra.mxu0 %v1238
        %2677 = vmatpush.bf16.msra.mxu0 %v1234
        %2678 = vmatpush.bf16.msra.mxu0 %v1230
        %2679 = vmatpush.bf16.msra.mxu0 %v1226
        %2680 = vmatmul.bf16.gmra.mxu0 %v950
        %v2681 = vpop.f32.mrf.mxu0
        %v2682 = vadd.f32 %v1026, %v2681
        %v2683 = vpop.f32.mrf.mxu0
        %2684 = vdwg.mxu0
        %2685 = vmatpush.bf16.msra.mxu0 %v1286
        %2686 = vmatpush.bf16.msra.mxu0 %v1282
        %2687 = vmatpush.bf16.msra.mxu0 %v1278
        %2688 = vmatpush.bf16.msra.mxu0 %v1274
        %2689 = vmatpush.bf16.msra.mxu0 %v1270
        %2690 = vmatpush.bf16.msra.mxu0 %v1266
        %2691 = vmatpush.bf16.msra.mxu0 %v1262
        %2692 = vmatpush.bf16.msra.mxu0 %v1258
        %2693 = vmatmul.bf16.gmra.mxu0 %v2495
        %v2694 = vpop.f32.mrf.mxu0
        %v2695 = vadd.f32 %v2682, %v2694
        %v2696 = vpop.f32.mrf.mxu0
        %2697 = vdwg.mxu0
        %2698 = vmatpush.bf16.msra.mxu0 %v1255
        %2699 = vmatpush.bf16.msra.mxu0 %v1251
        %2700 = vmatpush.bf16.msra.mxu0 %v1247
        %2701 = vmatpush.bf16.msra.mxu0 %v1243
        %2702 = vmatpush.bf16.msra.mxu0 %v1239
        %2703 = vmatpush.bf16.msra.mxu0 %v1235
        %2704 = vmatpush.bf16.msra.mxu0 %v1231
        %2705 = vmatpush.bf16.msra.mxu0 %v1227
        %2706 = vmatmul.bf16.gmra.mxu0 %v950
        %v2707 = vpop.f32.mrf.mxu0
        %v2708 = vadd.f32 %v1027, %v2707
        %v2709 = vpop.f32.mrf.mxu0
        %2710 = vdwg.mxu0
        %2711 = vmatpush.bf16.msra.mxu0 %v1287
        %2712 = vmatpush.bf16.msra.mxu0 %v1283
        %2713 = vmatpush.bf16.msra.mxu0 %v1279
        %2714 = vmatpush.bf16.msra.mxu0 %v1275
        %2715 = vmatpush.bf16.msra.mxu0 %v1271
        %2716 = vmatpush.bf16.msra.mxu0 %v1267
        %2717 = vmatpush.bf16.msra.mxu0 %v1263
        %2718 = vmatpush.bf16.msra.mxu0 %v1259
        %2719 = vmatmul.bf16.gmra.mxu0 %v2495
        %v2720 = vpop.f32.mrf.mxu0
        %v2721 = vadd.f32 %v2708, %v2720
        %v2722 = vpop.f32.mrf.mxu0
        %2723 = vdwg.mxu0
        %2724 = vmatpush.bf16.msra.mxu0 %v1256
        %2725 = vmatpush.bf16.msra.mxu0 %v1252
        %2726 = vmatpush.bf16.msra.mxu0 %v1248
        %2727 = vmatpush.bf16.msra.mxu0 %v1244
        %2728 = vmatpush.bf16.msra.mxu0 %v1240
        %2729 = vmatpush.bf16.msra.mxu0 %v1236
        %2730 = vmatpush.bf16.msra.mxu0 %v1232
        %2731 = vmatpush.bf16.msra.mxu0 %v1228
        %2732 = vmatmul.bf16.gmra.mxu0 %v950
        %v2733 = vpop.f32.mrf.mxu0
        %v2734 = vadd.f32 %v1028, %v2733
        %v2735 = vpop.f32.mrf.mxu0
        %2736 = vdwg.mxu0
        %2737 = vmatpush.bf16.msra.mxu0 %v1288
        %2738 = vmatpush.bf16.msra.mxu0 %v1284
        %2739 = vmatpush.bf16.msra.mxu0 %v1280
        %2740 = vmatpush.bf16.msra.mxu0 %v1276
        %2741 = vmatpush.bf16.msra.mxu0 %v1272
        %2742 = vmatpush.bf16.msra.mxu0 %v1268
        %2743 = vmatpush.bf16.msra.mxu0 %v1264
        %2744 = vmatpush.bf16.msra.mxu0 %v1260
        %2745 = vmatmul.bf16.gmra.mxu0 %v2495
        %v2746 = vpop.f32.mrf.mxu0
        %v2747 = vadd.f32 %v2734, %v2746
        %v2748 = vpop.f32.mrf.mxu0
        %2749 = vdwg.mxu0
        %v2750 = vxor.u32 %v2669, 2147483648
        %v2751 = vmul.f32 %v2750, 1.442695
        %v2752 = vpow.pop %v2751
        %v2753 = vadd.f32 %v2752, 1.0
        %v2754 = vrcp.pop %v2753
        %v2755 = vmul.f32 %v2753, %v2754
        %v2756 = vsub.f32 1.0, %v2755
        %v2757 = vmul.f32 %v2754, %v2756
        %v2758 = vadd.f32 %v2754, %v2757
        %vm2759 = vweird.f32 %v2753
        %vm2760 = vweird.f32 %v2754
        %vm2761 = vmor %vm2759, %vm2760
        %v2762 = vsel %vm2761, %v2754, %v2758
        %v2763 = vand.u32 2147483647, %v2753
        %vm2764 = vcmp.eq.f32.partialorder %v2763, 8.507059e+37
        %v2765 = vand.u32 %v2753, 2147483648
        %v2766 = vor.u32 1.1754944e-38, %v2765
        %v2767 = vsel %vm2764, %v2766, %v2762
        %v2768 = vmul.f32 1.0, %v2767
        %v2769 = vxor.u32 %v2695, 2147483648
        %v2770 = vmul.f32 %v2769, 1.442695
        %v2771 = vpow.pop %v2770
        %v2772 = vadd.f32 %v2771, 1.0
        %v2773 = vrcp.pop %v2772
        %v2774 = vmul.f32 %v2772, %v2773
        %v2775 = vsub.f32 1.0, %v2774
        %v2776 = vmul.f32 %v2773, %v2775
        %v2777 = vadd.f32 %v2773, %v2776
        %vm2778 = vweird.f32 %v2772
        %vm2779 = vweird.f32 %v2773
        %vm2780 = vmor %vm2778, %vm2779
        %v2781 = vsel %vm2780, %v2773, %v2777
        %v2782 = vand.u32 2147483647, %v2772
        %vm2783 = vcmp.eq.f32.partialorder %v2782, 8.507059e+37
        %v2784 = vand.u32 %v2772, 2147483648
        %v2785 = vor.u32 1.1754944e-38, %v2784
        %v2786 = vsel %vm2783, %v2785, %v2781
        %v2787 = vmul.f32 1.0, %v2786
        %v2788 = vmul.f32 %v2787, %v2747
        %v2789 = vadd.f32 %v2721, %v2788
        %v2790 = vtanh.pop %v2789
        %v2791 = vsub.f32 1.0, %v2768
        %v2792 = vmul.f32 %v2791, %v2790
        %v2793 = vmul.f32 %v2768, %v2494
        %v2794 = vadd.f32 %v2792, %v2793
        %v2795 = vpack.c.bf16 %v2794, %v2794
        %v2796 = vpack.c.bf16 %v2645, %v2645
        %2797 = vmatpush.bf16.msra.mxu0 %v1797
        %2798 = vmatpush.bf16.msra.mxu0 %v1793
        %2799 = vmatpush.bf16.msra.mxu0 %v1789
        %2800 = vmatpush.bf16.msra.mxu0 %v1785
        %2801 = vmatpush.bf16.msra.mxu0 %v1781
        %2802 = vmatpush.bf16.msra.mxu0 %v1777
        %2803 = vmatpush.bf16.msra.mxu0 %v1773
        %2804 = vmatpush.bf16.msra.mxu0 %v1769
        %2805 = vmatmul.bf16.gmra.mxu0 %v2795
        %v2806 = vpop.f32.mrf.mxu0
        %v2807 = vadd.f32 %v1569, %v2806
        %v2808 = vpop.f32.mrf.mxu0
        %2809 = vdwg.mxu0
        %2810 = vmatpush.bf16.msra.mxu0 %v1829
        %2811 = vmatpush.bf16.msra.mxu0 %v1825
        %2812 = vmatpush.bf16.msra.mxu0 %v1821
        %2813 = vmatpush.bf16.msra.mxu0 %v1817
        %2814 = vmatpush.bf16.msra.mxu0 %v1813
        %2815 = vmatpush.bf16.msra.mxu0 %v1809
        %2816 = vmatpush.bf16.msra.mxu0 %v1805
        %2817 = vmatpush.bf16.msra.mxu0 %v1801
        %2818 = vmatmul.bf16.gmra.mxu0 %v2796
        %v2819 = vpop.f32.mrf.mxu0
        %v2820 = vadd.f32 %v2807, %v2819
        %v2821 = vpop.f32.mrf.mxu0
        %2822 = vdwg.mxu0
        %2823 = vmatpush.bf16.msra.mxu0 %v1798
        %2824 = vmatpush.bf16.msra.mxu0 %v1794
        %2825 = vmatpush.bf16.msra.mxu0 %v1790
        %2826 = vmatpush.bf16.msra.mxu0 %v1786
        %2827 = vmatpush.bf16.msra.mxu0 %v1782
        %2828 = vmatpush.bf16.msra.mxu0 %v1778
        %2829 = vmatpush.bf16.msra.mxu0 %v1774
        %2830 = vmatpush.bf16.msra.mxu0 %v1770
        %2831 = vmatmul.bf16.gmra.mxu0 %v2795
        %v2832 = vpop.f32.mrf.mxu0
        %v2833 = vadd.f32 %v1570, %v2832
        %v2834 = vpop.f32.mrf.mxu0
        %2835 = vdwg.mxu0
        %2836 = vmatpush.bf16.msra.mxu0 %v1830
        %2837 = vmatpush.bf16.msra.mxu0 %v1826
        %2838 = vmatpush.bf16.msra.mxu0 %v1822
        %2839 = vmatpush.bf16.msra.mxu0 %v1818
        %2840 = vmatpush.bf16.msra.mxu0 %v1814
        %2841 = vmatpush.bf16.msra.mxu0 %v1810
        %2842 = vmatpush.bf16.msra.mxu0 %v1806
        %2843 = vmatpush.bf16.msra.mxu0 %v1802
        %2844 = vmatmul.bf16.gmra.mxu0 %v2796
        %v2845 = vpop.f32.mrf.mxu0
        %v2846 = vadd.f32 %v2833, %v2845
        %v2847 = vpop.f32.mrf.mxu0
        %2848 = vdwg.mxu0
        %2849 = vmatpush.bf16.msra.mxu0 %v1799
        %2850 = vmatpush.bf16.msra.mxu0 %v1795
        %2851 = vmatpush.bf16.msra.mxu0 %v1791
        %2852 = vmatpush.bf16.msra.mxu0 %v1787
        %2853 = vmatpush.bf16.msra.mxu0 %v1783
        %2854 = vmatpush.bf16.msra.mxu0 %v1779
        %2855 = vmatpush.bf16.msra.mxu0 %v1775
        %2856 = vmatpush.bf16.msra.mxu0 %v1771
        %2857 = vmatmul.bf16.gmra.mxu0 %v2795
        %v2858 = vpop.f32.mrf.mxu0
        %v2859 = vadd.f32 %v1571, %v2858
        %v2860 = vpop.f32.mrf.mxu0
        %2861 = vdwg.mxu0
        %2862 = vmatpush.bf16.msra.mxu0 %v1831
        %2863 = vmatpush.bf16.msra.mxu0 %v1827
        %2864 = vmatpush.bf16.msra.mxu0 %v1823
        %2865 = vmatpush.bf16.msra.mxu0 %v1819
        %2866 = vmatpush.bf16.msra.mxu0 %v1815
        %2867 = vmatpush.bf16.msra.mxu0 %v1811
        %2868 = vmatpush.bf16.msra.mxu0 %v1807
        %2869 = vmatpush.bf16.msra.mxu0 %v1803
        %2870 = vmatmul.bf16.gmra.mxu0 %v2796
        %v2871 = vpop.f32.mrf.mxu0
        %v2872 = vadd.f32 %v2859, %v2871
        %v2873 = vpop.f32.mrf.mxu0
        %2874 = vdwg.mxu0
        %2875 = vmatpush.bf16.msra.mxu0 %v1800
        %2876 = vmatpush.bf16.msra.mxu0 %v1796
        %2877 = vmatpush.bf16.msra.mxu0 %v1792
        %2878 = vmatpush.bf16.msra.mxu0 %v1788
        %2879 = vmatpush.bf16.msra.mxu0 %v1784
        %2880 = vmatpush.bf16.msra.mxu0 %v1780
        %2881 = vmatpush.bf16.msra.mxu0 %v1776
        %2882 = vmatpush.bf16.msra.mxu0 %v1772
        %2883 = vmatmul.bf16.gmra.mxu0 %v2795
        %v2884 = vpop.f32.mrf.mxu0
        %v2885 = vadd.f32 %v1572, %v2884
        %v2886 = vpop.f32.mrf.mxu0
        %2887 = vdwg.mxu0
        %2888 = vmatpush.bf16.msra.mxu0 %v1832
        %2889 = vmatpush.bf16.msra.mxu0 %v1828
        %2890 = vmatpush.bf16.msra.mxu0 %v1824
        %2891 = vmatpush.bf16.msra.mxu0 %v1820
        %2892 = vmatpush.bf16.msra.mxu0 %v1816
        %2893 = vmatpush.bf16.msra.mxu0 %v1812
        %2894 = vmatpush.bf16.msra.mxu0 %v1808
        %2895 = vmatpush.bf16.msra.mxu0 %v1804
        %2896 = vmatmul.bf16.gmra.mxu0 %v2796
        %v2897 = vpop.f32.mrf.mxu0
        %v2898 = vadd.f32 %v2885, %v2897
        %v2899 = vpop.f32.mrf.mxu0
        %2900 = vdwg.mxu0
        %v2901 = vxor.u32 %v2820, 2147483648
        %v2902 = vmul.f32 %v2901, 1.442695
        %v2903 = vpow.pop %v2902
        %v2904 = vadd.f32 %v2903, 1.0
        %v2905 = vrcp.pop %v2904
        %v2906 = vmul.f32 %v2904, %v2905
        %v2907 = vsub.f32 1.0, %v2906
        %v2908 = vmul.f32 %v2905, %v2907
        %v2909 = vadd.f32 %v2905, %v2908
        %vm2910 = vweird.f32 %v2904
        %vm2911 = vweird.f32 %v2905
        %vm2912 = vmor %vm2910, %vm2911
        %v2913 = vsel %vm2912, %v2905, %v2909
        %v2914 = vand.u32 2147483647, %v2904
        %vm2915 = vcmp.eq.f32.partialorder %v2914, 8.507059e+37
        %v2916 = vand.u32 %v2904, 2147483648
        %v2917 = vor.u32 1.1754944e-38, %v2916
        %v2918 = vsel %vm2915, %v2917, %v2913
        %v2919 = vmul.f32 1.0, %v2918
        %v2920 = vxor.u32 %v2846, 2147483648
        %v2921 = vmul.f32 %v2920, 1.442695
        %v2922 = vpow.pop %v2921
        %v2923 = vadd.f32 %v2922, 1.0
        %v2924 = vrcp.pop %v2923
        %v2925 = vmul.f32 %v2923, %v2924
        %v2926 = vsub.f32 1.0, %v2925
        %v2927 = vmul.f32 %v2924, %v2926
        %v2928 = vadd.f32 %v2924, %v2927
        %vm2929 = vweird.f32 %v2923
        %vm2930 = vweird.f32 %v2924
        %vm2931 = vmor %vm2929, %vm2930
        %v2932 = vsel %vm2931, %v2924, %v2928
        %v2933 = vand.u32 2147483647, %v2923
        %vm2934 = vcmp.eq.f32.partialorder %v2933, 8.507059e+37
        %v2935 = vand.u32 %v2923, 2147483648
        %v2936 = vor.u32 1.1754944e-38, %v2935
        %v2937 = vsel %vm2934, %v2936, %v2932
        %v2938 = vmul.f32 1.0, %v2937
        %v2939 = vmul.f32 %v2938, %v2898
        %v2940 = vadd.f32 %v2872, %v2939
        %v2941 = vtanh.pop %v2940
        %v2942 = vsub.f32 1.0, %v2919
        %v2943 = vmul.f32 %v2942, %v2941
        %v2944 = vmul.f32 %v2919, %v2645
        %v2945 = vadd.f32 %v2943, %v2944
        %2946 = vmatpush.bf16.msra.mxu0 %v1253
        %2947 = vmatpush.bf16.msra.mxu0 %v1249
        %2948 = vmatpush.bf16.msra.mxu0 %v1245
        %2949 = vmatpush.bf16.msra.mxu0 %v1241
        %2950 = vmatpush.bf16.msra.mxu0 %v1237
        %2951 = vmatpush.bf16.msra.mxu0 %v1233
        %2952 = vmatpush.bf16.msra.mxu0 %v1229
        %2953 = vmatpush.bf16.msra.mxu0 %v1225
        %2954 = vmatmul.bf16.gmra.mxu0 %v951
        %v2955 = vpop.f32.mrf.mxu0
        %v2956 = vadd.f32 %v1025, %v2955
        %v2957 = vpop.f32.mrf.mxu0
        %2958 = vdwg.mxu0
        %2959 = vmatpush.bf16.msra.mxu0 %v1285
        %2960 = vmatpush.bf16.msra.mxu0 %v1281
        %2961 = vmatpush.bf16.msra.mxu0 %v1277
        %2962 = vmatpush.bf16.msra.mxu0 %v1273
        %2963 = vmatpush.bf16.msra.mxu0 %v1269
        %2964 = vmatpush.bf16.msra.mxu0 %v1265
        %2965 = vmatpush.bf16.msra.mxu0 %v1261
        %2966 = vmatpush.bf16.msra.mxu0 %v1257
        %2967 = vmatmul.bf16.gmra.mxu0 %v2795
        %v2968 = vpop.f32.mrf.mxu0
        %v2969 = vadd.f32 %v2956, %v2968
        %v2970 = vpop.f32.mrf.mxu0
        %2971 = vdwg.mxu0
        %2972 = vmatpush.bf16.msra.mxu0 %v1254
        %2973 = vmatpush.bf16.msra.mxu0 %v1250
        %2974 = vmatpush.bf16.msra.mxu0 %v1246
        %2975 = vmatpush.bf16.msra.mxu0 %v1242
        %2976 = vmatpush.bf16.msra.mxu0 %v1238
        %2977 = vmatpush.bf16.msra.mxu0 %v1234
        %2978 = vmatpush.bf16.msra.mxu0 %v1230
        %2979 = vmatpush.bf16.msra.mxu0 %v1226
        %2980 = vmatmul.bf16.gmra.mxu0 %v951
        %v2981 = vpop.f32.mrf.mxu0
        %v2982 = vadd.f32 %v1026, %v2981
        %v2983 = vpop.f32.mrf.mxu0
        %2984 = vdwg.mxu0
        %2985 = vmatpush.bf16.msra.mxu0 %v1286
        %2986 = vmatpush.bf16.msra.mxu0 %v1282
        %2987 = vmatpush.bf16.msra.mxu0 %v1278
        %2988 = vmatpush.bf16.msra.mxu0 %v1274
        %2989 = vmatpush.bf16.msra.mxu0 %v1270
        %2990 = vmatpush.bf16.msra.mxu0 %v1266
        %2991 = vmatpush.bf16.msra.mxu0 %v1262
        %2992 = vmatpush.bf16.msra.mxu0 %v1258
        %2993 = vmatmul.bf16.gmra.mxu0 %v2795
        %v2994 = vpop.f32.mrf.mxu0
        %v2995 = vadd.f32 %v2982, %v2994
        %v2996 = vpop.f32.mrf.mxu0
        %2997 = vdwg.mxu0
        %2998 = vmatpush.bf16.msra.mxu0 %v1255
        %2999 = vmatpush.bf16.msra.mxu0 %v1251
        %3000 = vmatpush.bf16.msra.mxu0 %v1247
        %3001 = vmatpush.bf16.msra.mxu0 %v1243
        %3002 = vmatpush.bf16.msra.mxu0 %v1239
        %3003 = vmatpush.bf16.msra.mxu0 %v1235
        %3004 = vmatpush.bf16.msra.mxu0 %v1231
        %3005 = vmatpush.bf16.msra.mxu0 %v1227
        %3006 = vmatmul.bf16.gmra.mxu0 %v951
        %v3007 = vpop.f32.mrf.mxu0
        %v3008 = vadd.f32 %v1027, %v3007
        %v3009 = vpop.f32.mrf.mxu0
        %3010 = vdwg.mxu0
        %3011 = vmatpush.bf16.msra.mxu0 %v1287
        %3012 = vmatpush.bf16.msra.mxu0 %v1283
        %3013 = vmatpush.bf16.msra.mxu0 %v1279
        %3014 = vmatpush.bf16.msra.mxu0 %v1275
        %3015 = vmatpush.bf16.msra.mxu0 %v1271
        %3016 = vmatpush.bf16.msra.mxu0 %v1267
        %3017 = vmatpush.bf16.msra.mxu0 %v1263
        %3018 = vmatpush.bf16.msra.mxu0 %v1259
        %3019 = vmatmul.bf16.gmra.mxu0 %v2795
        %v3020 = vpop.f32.mrf.mxu0
        %v3021 = vadd.f32 %v3008, %v3020
        %v3022 = vpop.f32.mrf.mxu0
        %3023 = vdwg.mxu0
        %3024 = vmatpush.bf16.msra.mxu0 %v1256
        %3025 = vmatpush.bf16.msra.mxu0 %v1252
        %3026 = vmatpush.bf16.msra.mxu0 %v1248
        %3027 = vmatpush.bf16.msra.mxu0 %v1244
        %3028 = vmatpush.bf16.msra.mxu0 %v1240
        %3029 = vmatpush.bf16.msra.mxu0 %v1236
        %3030 = vmatpush.bf16.msra.mxu0 %v1232
        %3031 = vmatpush.bf16.msra.mxu0 %v1228
        %3032 = vmatmul.bf16.gmra.mxu0 %v951
        %v3033 = vpop.f32.mrf.mxu0
        %v3034 = vadd.f32 %v1028, %v3033
        %v3035 = vpop.f32.mrf.mxu0
        %3036 = vdwg.mxu0
        %3037 = vmatpush.bf16.msra.mxu0 %v1288
        %3038 = vmatpush.bf16.msra.mxu0 %v1284
        %3039 = vmatpush.bf16.msra.mxu0 %v1280
        %3040 = vmatpush.bf16.msra.mxu0 %v1276
        %3041 = vmatpush.bf16.msra.mxu0 %v1272
        %3042 = vmatpush.bf16.msra.mxu0 %v1268
        %3043 = vmatpush.bf16.msra.mxu0 %v1264
        %3044 = vmatpush.bf16.msra.mxu0 %v1260
        %3045 = vmatmul.bf16.gmra.mxu0 %v2795
        %v3046 = vpop.f32.mrf.mxu0
        %v3047 = vadd.f32 %v3034, %v3046
        %v3048 = vpop.f32.mrf.mxu0
        %3049 = vdwg.mxu0
        %v3050 = vxor.u32 %v2969, 2147483648
        %v3051 = vmul.f32 %v3050, 1.442695
        %v3052 = vpow.pop %v3051
        %v3053 = vadd.f32 %v3052, 1.0
        %v3054 = vrcp.pop %v3053
        %v3055 = vmul.f32 %v3053, %v3054
        %v3056 = vsub.f32 1.0, %v3055
        %v3057 = vmul.f32 %v3054, %v3056
        %v3058 = vadd.f32 %v3054, %v3057
        %vm3059 = vweird.f32 %v3053
        %vm3060 = vweird.f32 %v3054
        %vm3061 = vmor %vm3059, %vm3060
        %v3062 = vsel %vm3061, %v3054, %v3058
        %v3063 = vand.u32 2147483647, %v3053
        %vm3064 = vcmp.eq.f32.partialorder %v3063, 8.507059e+37
        %v3065 = vand.u32 %v3053, 2147483648
        %v3066 = vor.u32 1.1754944e-38, %v3065
        %v3067 = vsel %vm3064, %v3066, %v3062
        %v3068 = vmul.f32 1.0, %v3067
        %v3069 = vxor.u32 %v2995, 2147483648
        %v3070 = vmul.f32 %v3069, 1.442695
        %v3071 = vpow.pop %v3070
        %v3072 = vadd.f32 %v3071, 1.0
        %v3073 = vrcp.pop %v3072
        %v3074 = vmul.f32 %v3072, %v3073
        %v3075 = vsub.f32 1.0, %v3074
        %v3076 = vmul.f32 %v3073, %v3075
        %v3077 = vadd.f32 %v3073, %v3076
        %vm3078 = vweird.f32 %v3072
        %vm3079 = vweird.f32 %v3073
        %vm3080 = vmor %vm3078, %vm3079
        %v3081 = vsel %vm3080, %v3073, %v3077
        %v3082 = vand.u32 2147483647, %v3072
        %vm3083 = vcmp.eq.f32.partialorder %v3082, 8.507059e+37
        %v3084 = vand.u32 %v3072, 2147483648
        %v3085 = vor.u32 1.1754944e-38, %v3084
        %v3086 = vsel %vm3083, %v3085, %v3081
        %v3087 = vmul.f32 1.0, %v3086
        %v3088 = vmul.f32 %v3087, %v3047
        %v3089 = vadd.f32 %v3021, %v3088
        %v3090 = vtanh.pop %v3089
        %v3091 = vsub.f32 1.0, %v3068
        %v3092 = vmul.f32 %v3091, %v3090
        %v3093 = vmul.f32 %v3068, %v2794
        %v3094 = vadd.f32 %v3092, %v3093
        %v3095 = vpack.c.bf16 %v3094, %v3094
        %v3096 = vpack.c.bf16 %v2945, %v2945
        %3097 = vmatpush.bf16.msra.mxu0 %v1797
        %3098 = vmatpush.bf16.msra.mxu0 %v1793
        %3099 = vmatpush.bf16.msra.mxu0 %v1789
        %3100 = vmatpush.bf16.msra.mxu0 %v1785
        %3101 = vmatpush.bf16.msra.mxu0 %v1781
        %3102 = vmatpush.bf16.msra.mxu0 %v1777
        %3103 = vmatpush.bf16.msra.mxu0 %v1773
        %3104 = vmatpush.bf16.msra.mxu0 %v1769
        %3105 = vmatmul.bf16.gmra.mxu0 %v3095
        %v3106 = vpop.f32.mrf.mxu0
        %v3107 = vadd.f32 %v1569, %v3106
        %v3108 = vpop.f32.mrf.mxu0
        %3109 = vdwg.mxu0
        %3110 = vmatpush.bf16.msra.mxu0 %v1829
        %3111 = vmatpush.bf16.msra.mxu0 %v1825
        %3112 = vmatpush.bf16.msra.mxu0 %v1821
        %3113 = vmatpush.bf16.msra.mxu0 %v1817
        %3114 = vmatpush.bf16.msra.mxu0 %v1813
        %3115 = vmatpush.bf16.msra.mxu0 %v1809
        %3116 = vmatpush.bf16.msra.mxu0 %v1805
        %3117 = vmatpush.bf16.msra.mxu0 %v1801
        %3118 = vmatmul.bf16.gmra.mxu0 %v3096
        %v3119 = vpop.f32.mrf.mxu0
        %v3120 = vadd.f32 %v3107, %v3119
        %v3121 = vpop.f32.mrf.mxu0
        %3122 = vdwg.mxu0
        %3123 = vmatpush.bf16.msra.mxu0 %v1798
        %3124 = vmatpush.bf16.msra.mxu0 %v1794
        %3125 = vmatpush.bf16.msra.mxu0 %v1790
        %3126 = vmatpush.bf16.msra.mxu0 %v1786
        %3127 = vmatpush.bf16.msra.mxu0 %v1782
        %3128 = vmatpush.bf16.msra.mxu0 %v1778
        %3129 = vmatpush.bf16.msra.mxu0 %v1774
        %3130 = vmatpush.bf16.msra.mxu0 %v1770
        %3131 = vmatmul.bf16.gmra.mxu0 %v3095
        %v3132 = vpop.f32.mrf.mxu0
        %v3133 = vadd.f32 %v1570, %v3132
        %v3134 = vpop.f32.mrf.mxu0
        %3135 = vdwg.mxu0
        %3136 = vmatpush.bf16.msra.mxu0 %v1830
        %3137 = vmatpush.bf16.msra.mxu0 %v1826
        %3138 = vmatpush.bf16.msra.mxu0 %v1822
        %3139 = vmatpush.bf16.msra.mxu0 %v1818
        %3140 = vmatpush.bf16.msra.mxu0 %v1814
        %3141 = vmatpush.bf16.msra.mxu0 %v1810
        %3142 = vmatpush.bf16.msra.mxu0 %v1806
        %3143 = vmatpush.bf16.msra.mxu0 %v1802
        %3144 = vmatmul.bf16.gmra.mxu0 %v3096
        %v3145 = vpop.f32.mrf.mxu0
        %v3146 = vadd.f32 %v3133, %v3145
        %v3147 = vpop.f32.mrf.mxu0
        %3148 = vdwg.mxu0
        %3149 = vmatpush.bf16.msra.mxu0 %v1799
        %3150 = vmatpush.bf16.msra.mxu0 %v1795
        %3151 = vmatpush.bf16.msra.mxu0 %v1791
        %3152 = vmatpush.bf16.msra.mxu0 %v1787
        %3153 = vmatpush.bf16.msra.mxu0 %v1783
        %3154 = vmatpush.bf16.msra.mxu0 %v1779
        %3155 = vmatpush.bf16.msra.mxu0 %v1775
        %3156 = vmatpush.bf16.msra.mxu0 %v1771
        %3157 = vmatmul.bf16.gmra.mxu0 %v3095
        %v3158 = vpop.f32.mrf.mxu0
        %v3159 = vadd.f32 %v1571, %v3158
        %v3160 = vpop.f32.mrf.mxu0
        %3161 = vdwg.mxu0
        %3162 = vmatpush.bf16.msra.mxu0 %v1831
        %3163 = vmatpush.bf16.msra.mxu0 %v1827
        %3164 = vmatpush.bf16.msra.mxu0 %v1823
        %3165 = vmatpush.bf16.msra.mxu0 %v1819
        %3166 = vmatpush.bf16.msra.mxu0 %v1815
        %3167 = vmatpush.bf16.msra.mxu0 %v1811
        %3168 = vmatpush.bf16.msra.mxu0 %v1807
        %3169 = vmatpush.bf16.msra.mxu0 %v1803
        %3170 = vmatmul.bf16.gmra.mxu0 %v3096
        %v3171 = vpop.f32.mrf.mxu0
        %v3172 = vadd.f32 %v3159, %v3171
        %v3173 = vpop.f32.mrf.mxu0
        %3174 = vdwg.mxu0
        %3175 = vmatpush.bf16.msra.mxu0 %v1800
        %3176 = vmatpush.bf16.msra.mxu0 %v1796
        %3177 = vmatpush.bf16.msra.mxu0 %v1792
        %3178 = vmatpush.bf16.msra.mxu0 %v1788
        %3179 = vmatpush.bf16.msra.mxu0 %v1784
        %3180 = vmatpush.bf16.msra.mxu0 %v1780
        %3181 = vmatpush.bf16.msra.mxu0 %v1776
        %3182 = vmatpush.bf16.msra.mxu0 %v1772
        %3183 = vmatmul.bf16.gmra.mxu0 %v3095
        %v3184 = vpop.f32.mrf.mxu0
        %v3185 = vadd.f32 %v1572, %v3184
        %v3186 = vpop.f32.mrf.mxu0
        %3187 = vdwg.mxu0
        %3188 = vmatpush.bf16.msra.mxu0 %v1832
        %3189 = vmatpush.bf16.msra.mxu0 %v1828
        %3190 = vmatpush.bf16.msra.mxu0 %v1824
        %3191 = vmatpush.bf16.msra.mxu0 %v1820
        %3192 = vmatpush.bf16.msra.mxu0 %v1816
        %3193 = vmatpush.bf16.msra.mxu0 %v1812
        %3194 = vmatpush.bf16.msra.mxu0 %v1808
        %3195 = vmatpush.bf16.msra.mxu0 %v1804
        %3196 = vmatmul.bf16.gmra.mxu0 %v3096
        %v3197 = vpop.f32.mrf.mxu0
        %v3198 = vadd.f32 %v3185, %v3197
        %v3199 = vpop.f32.mrf.mxu0
        %3200 = vdwg.mxu0
        %v3201 = vxor.u32 %v3120, 2147483648
        %v3202 = vmul.f32 %v3201, 1.442695
        %v3203 = vpow.pop %v3202
        %v3204 = vadd.f32 %v3203, 1.0
        %v3205 = vrcp.pop %v3204
        %v3206 = vmul.f32 %v3204, %v3205
        %v3207 = vsub.f32 1.0, %v3206
        %v3208 = vmul.f32 %v3205, %v3207
        %v3209 = vadd.f32 %v3205, %v3208
        %vm3210 = vweird.f32 %v3204
        %vm3211 = vweird.f32 %v3205
        %vm3212 = vmor %vm3210, %vm3211
        %v3213 = vsel %vm3212, %v3205, %v3209
        %v3214 = vand.u32 2147483647, %v3204
        %vm3215 = vcmp.eq.f32.partialorder %v3214, 8.507059e+37
        %v3216 = vand.u32 %v3204, 2147483648
        %v3217 = vor.u32 1.1754944e-38, %v3216
        %v3218 = vsel %vm3215, %v3217, %v3213
        %v3219 = vmul.f32 1.0, %v3218
        %v3220 = vxor.u32 %v3146, 2147483648
        %v3221 = vmul.f32 %v3220, 1.442695
        %v3222 = vpow.pop %v3221
        %v3223 = vadd.f32 %v3222, 1.0
        %v3224 = vrcp.pop %v3223
        %v3225 = vmul.f32 %v3223, %v3224
        %v3226 = vsub.f32 1.0, %v3225
        %v3227 = vmul.f32 %v3224, %v3226
        %v3228 = vadd.f32 %v3224, %v3227
        %vm3229 = vweird.f32 %v3223
        %vm3230 = vweird.f32 %v3224
        %vm3231 = vmor %vm3229, %vm3230
        %v3232 = vsel %vm3231, %v3224, %v3228
        %v3233 = vand.u32 2147483647, %v3223
        %vm3234 = vcmp.eq.f32.partialorder %v3233, 8.507059e+37
        %v3235 = vand.u32 %v3223, 2147483648
        %v3236 = vor.u32 1.1754944e-38, %v3235
        %v3237 = vsel %vm3234, %v3236, %v3232
        %v3238 = vmul.f32 1.0, %v3237
        %v3239 = vmul.f32 %v3238, %v3198
        %v3240 = vadd.f32 %v3172, %v3239
        %v3241 = vtanh.pop %v3240
        %v3242 = vsub.f32 1.0, %v3219
        %v3243 = vmul.f32 %v3242, %v3241
        %v3244 = vmul.f32 %v3219, %v2945
        %v3245 = vadd.f32 %v3243, %v3244
        %3246 = vmatpush.bf16.msra.mxu0 %v1253
        %3247 = vmatpush.bf16.msra.mxu0 %v1249
        %3248 = vmatpush.bf16.msra.mxu0 %v1245
        %3249 = vmatpush.bf16.msra.mxu0 %v1241
        %3250 = vmatpush.bf16.msra.mxu0 %v1237
        %3251 = vmatpush.bf16.msra.mxu0 %v1233
        %3252 = vmatpush.bf16.msra.mxu0 %v1229
        %3253 = vmatpush.bf16.msra.mxu0 %v1225
        %3254 = vmatmul.bf16.gmra.mxu0 %v952
        %v3255 = vpop.f32.mrf.mxu0
        %v3256 = vadd.f32 %v1025, %v3255
        %v3257 = vpop.f32.mrf.mxu0
        %3258 = vdwg.mxu0
        %3259 = vmatpush.bf16.msra.mxu0 %v1285
        %3260 = vmatpush.bf16.msra.mxu0 %v1281
        %3261 = vmatpush.bf16.msra.mxu0 %v1277
        %3262 = vmatpush.bf16.msra.mxu0 %v1273
        %3263 = vmatpush.bf16.msra.mxu0 %v1269
        %3264 = vmatpush.bf16.msra.mxu0 %v1265
        %3265 = vmatpush.bf16.msra.mxu0 %v1261
        %3266 = vmatpush.bf16.msra.mxu0 %v1257
        %3267 = vmatmul.bf16.gmra.mxu0 %v3095
        %v3268 = vpop.f32.mrf.mxu0
        %v3269 = vadd.f32 %v3256, %v3268
        %v3270 = vpop.f32.mrf.mxu0
        %3271 = vdwg.mxu0
        %3272 = vmatpush.bf16.msra.mxu0 %v1254
        %3273 = vmatpush.bf16.msra.mxu0 %v1250
        %3274 = vmatpush.bf16.msra.mxu0 %v1246
        %3275 = vmatpush.bf16.msra.mxu0 %v1242
        %3276 = vmatpush.bf16.msra.mxu0 %v1238
        %3277 = vmatpush.bf16.msra.mxu0 %v1234
        %3278 = vmatpush.bf16.msra.mxu0 %v1230
        %3279 = vmatpush.bf16.msra.mxu0 %v1226
        %3280 = vmatmul.bf16.gmra.mxu0 %v952
        %v3281 = vpop.f32.mrf.mxu0
        %v3282 = vadd.f32 %v1026, %v3281
        %v3283 = vpop.f32.mrf.mxu0
        %3284 = vdwg.mxu0
        %3285 = vmatpush.bf16.msra.mxu0 %v1286
        %3286 = vmatpush.bf16.msra.mxu0 %v1282
        %3287 = vmatpush.bf16.msra.mxu0 %v1278
        %3288 = vmatpush.bf16.msra.mxu0 %v1274
        %3289 = vmatpush.bf16.msra.mxu0 %v1270
        %3290 = vmatpush.bf16.msra.mxu0 %v1266
        %3291 = vmatpush.bf16.msra.mxu0 %v1262
        %3292 = vmatpush.bf16.msra.mxu0 %v1258
        %3293 = vmatmul.bf16.gmra.mxu0 %v3095
        %v3294 = vpop.f32.mrf.mxu0
        %v3295 = vadd.f32 %v3282, %v3294
        %v3296 = vpop.f32.mrf.mxu0
        %3297 = vdwg.mxu0
        %3298 = vmatpush.bf16.msra.mxu0 %v1255
        %3299 = vmatpush.bf16.msra.mxu0 %v1251
        %3300 = vmatpush.bf16.msra.mxu0 %v1247
        %3301 = vmatpush.bf16.msra.mxu0 %v1243
        %3302 = vmatpush.bf16.msra.mxu0 %v1239
        %3303 = vmatpush.bf16.msra.mxu0 %v1235
        %3304 = vmatpush.bf16.msra.mxu0 %v1231
        %3305 = vmatpush.bf16.msra.mxu0 %v1227
        %3306 = vmatmul.bf16.gmra.mxu0 %v952
        %v3307 = vpop.f32.mrf.mxu0
        %v3308 = vadd.f32 %v1027, %v3307
        %v3309 = vpop.f32.mrf.mxu0
        %3310 = vdwg.mxu0
        %3311 = vmatpush.bf16.msra.mxu0 %v1287
        %3312 = vmatpush.bf16.msra.mxu0 %v1283
        %3313 = vmatpush.bf16.msra.mxu0 %v1279
        %3314 = vmatpush.bf16.msra.mxu0 %v1275
        %3315 = vmatpush.bf16.msra.mxu0 %v1271
        %3316 = vmatpush.bf16.msra.mxu0 %v1267
        %3317 = vmatpush.bf16.msra.mxu0 %v1263
        %3318 = vmatpush.bf16.msra.mxu0 %v1259
        %3319 = vmatmul.bf16.gmra.mxu0 %v3095
        %v3320 = vpop.f32.mrf.mxu0
        %v3321 = vadd.f32 %v3308, %v3320
        %v3322 = vpop.f32.mrf.mxu0
        %3323 = vdwg.mxu0
        %3324 = vmatpush.bf16.msra.mxu0 %v1256
        %3325 = vmatpush.bf16.msra.mxu0 %v1252
        %3326 = vmatpush.bf16.msra.mxu0 %v1248
        %3327 = vmatpush.bf16.msra.mxu0 %v1244
        %3328 = vmatpush.bf16.msra.mxu0 %v1240
        %3329 = vmatpush.bf16.msra.mxu0 %v1236
        %3330 = vmatpush.bf16.msra.mxu0 %v1232
        %3331 = vmatpush.bf16.msra.mxu0 %v1228
        %3332 = vmatmul.bf16.gmra.mxu0 %v952
        %v3333 = vpop.f32.mrf.mxu0
        %v3334 = vadd.f32 %v1028, %v3333
        %v3335 = vpop.f32.mrf.mxu0
        %3336 = vdwg.mxu0
        %3337 = vmatpush.bf16.msra.mxu0 %v1288
        %3338 = vmatpush.bf16.msra.mxu0 %v1284
        %3339 = vmatpush.bf16.msra.mxu0 %v1280
        %3340 = vmatpush.bf16.msra.mxu0 %v1276
        %3341 = vmatpush.bf16.msra.mxu0 %v1272
        %3342 = vmatpush.bf16.msra.mxu0 %v1268
        %3343 = vmatpush.bf16.msra.mxu0 %v1264
        %3344 = vmatpush.bf16.msra.mxu0 %v1260
        %3345 = vmatmul.bf16.gmra.mxu0 %v3095
        %v3346 = vpop.f32.mrf.mxu0
        %v3347 = vadd.f32 %v3334, %v3346
        %v3348 = vpop.f32.mrf.mxu0
        %3349 = vdwg.mxu0
        %v3350 = vxor.u32 %v3269, 2147483648
        %v3351 = vmul.f32 %v3350, 1.442695
        %v3352 = vpow.pop %v3351
        %v3353 = vadd.f32 %v3352, 1.0
        %v3354 = vrcp.pop %v3353
        %v3355 = vmul.f32 %v3353, %v3354
        %v3356 = vsub.f32 1.0, %v3355
        %v3357 = vmul.f32 %v3354, %v3356
        %v3358 = vadd.f32 %v3354, %v3357
        %vm3359 = vweird.f32 %v3353
        %vm3360 = vweird.f32 %v3354
        %vm3361 = vmor %vm3359, %vm3360
        %v3362 = vsel %vm3361, %v3354, %v3358
        %v3363 = vand.u32 2147483647, %v3353
        %vm3364 = vcmp.eq.f32.partialorder %v3363, 8.507059e+37
        %v3365 = vand.u32 %v3353, 2147483648
        %v3366 = vor.u32 1.1754944e-38, %v3365
        %v3367 = vsel %vm3364, %v3366, %v3362
        %v3368 = vmul.f32 1.0, %v3367
        %v3369 = vxor.u32 %v3295, 2147483648
        %v3370 = vmul.f32 %v3369, 1.442695
        %v3371 = vpow.pop %v3370
        %v3372 = vadd.f32 %v3371, 1.0
        %v3373 = vrcp.pop %v3372
        %v3374 = vmul.f32 %v3372, %v3373
        %v3375 = vsub.f32 1.0, %v3374
        %v3376 = vmul.f32 %v3373, %v3375
        %v3377 = vadd.f32 %v3373, %v3376
        %vm3378 = vweird.f32 %v3372
        %vm3379 = vweird.f32 %v3373
        %vm3380 = vmor %vm3378, %vm3379
        %v3381 = vsel %vm3380, %v3373, %v3377
        %v3382 = vand.u32 2147483647, %v3372
        %vm3383 = vcmp.eq.f32.partialorder %v3382, 8.507059e+37
        %v3384 = vand.u32 %v3372, 2147483648
        %v3385 = vor.u32 1.1754944e-38, %v3384
        %v3386 = vsel %vm3383, %v3385, %v3381
        %v3387 = vmul.f32 1.0, %v3386
        %v3388 = vmul.f32 %v3387, %v3347
        %v3389 = vadd.f32 %v3321, %v3388
        %v3390 = vtanh.pop %v3389
        %v3391 = vsub.f32 1.0, %v3368
        %v3392 = vmul.f32 %v3391, %v3390
        %v3393 = vmul.f32 %v3368, %v3094
        %v3394 = vadd.f32 %v3392, %v3393
        %v3395 = vpack.c.bf16 %v3394, %v3394
        %v3396 = vpack.c.bf16 %v3245, %v3245
        %3397 = vmatpush.bf16.msra.mxu0 %v1797
        %3398 = vmatpush.bf16.msra.mxu0 %v1793
        %3399 = vmatpush.bf16.msra.mxu0 %v1789
        %3400 = vmatpush.bf16.msra.mxu0 %v1785
        %3401 = vmatpush.bf16.msra.mxu0 %v1781
        %3402 = vmatpush.bf16.msra.mxu0 %v1777
        %3403 = vmatpush.bf16.msra.mxu0 %v1773
        %3404 = vmatpush.bf16.msra.mxu0 %v1769
        %3405 = vmatmul.bf16.gmra.mxu0 %v3395
        %v3406 = vpop.f32.mrf.mxu0
        %v3407 = vadd.f32 %v1569, %v3406
        %v3408 = vpop.f32.mrf.mxu0
        %3409 = vdwg.mxu0
        %3410 = vmatpush.bf16.msra.mxu0 %v1829
        %3411 = vmatpush.bf16.msra.mxu0 %v1825
        %3412 = vmatpush.bf16.msra.mxu0 %v1821
        %3413 = vmatpush.bf16.msra.mxu0 %v1817
        %3414 = vmatpush.bf16.msra.mxu0 %v1813
        %3415 = vmatpush.bf16.msra.mxu0 %v1809
        %3416 = vmatpush.bf16.msra.mxu0 %v1805
        %3417 = vmatpush.bf16.msra.mxu0 %v1801
        %3418 = vmatmul.bf16.gmra.mxu0 %v3396
        %v3419 = vpop.f32.mrf.mxu0
        %v3420 = vadd.f32 %v3407, %v3419
        %v3421 = vpop.f32.mrf.mxu0
        %3422 = vdwg.mxu0
        %3423 = vmatpush.bf16.msra.mxu0 %v1798
        %3424 = vmatpush.bf16.msra.mxu0 %v1794
        %3425 = vmatpush.bf16.msra.mxu0 %v1790
        %3426 = vmatpush.bf16.msra.mxu0 %v1786
        %3427 = vmatpush.bf16.msra.mxu0 %v1782
        %3428 = vmatpush.bf16.msra.mxu0 %v1778
        %3429 = vmatpush.bf16.msra.mxu0 %v1774
        %3430 = vmatpush.bf16.msra.mxu0 %v1770
        %3431 = vmatmul.bf16.gmra.mxu0 %v3395
        %v3432 = vpop.f32.mrf.mxu0
        %v3433 = vadd.f32 %v1570, %v3432
        %v3434 = vpop.f32.mrf.mxu0
        %3435 = vdwg.mxu0
        %3436 = vmatpush.bf16.msra.mxu0 %v1830
        %3437 = vmatpush.bf16.msra.mxu0 %v1826
        %3438 = vmatpush.bf16.msra.mxu0 %v1822
        %3439 = vmatpush.bf16.msra.mxu0 %v1818
        %3440 = vmatpush.bf16.msra.mxu0 %v1814
        %3441 = vmatpush.bf16.msra.mxu0 %v1810
        %3442 = vmatpush.bf16.msra.mxu0 %v1806
        %3443 = vmatpush.bf16.msra.mxu0 %v1802
        %3444 = vmatmul.bf16.gmra.mxu0 %v3396
        %v3445 = vpop.f32.mrf.mxu0
        %v3446 = vadd.f32 %v3433, %v3445
        %v3447 = vpop.f32.mrf.mxu0
        %3448 = vdwg.mxu0
        %3449 = vmatpush.bf16.msra.mxu0 %v1799
        %3450 = vmatpush.bf16.msra.mxu0 %v1795
        %3451 = vmatpush.bf16.msra.mxu0 %v1791
        %3452 = vmatpush.bf16.msra.mxu0 %v1787
        %3453 = vmatpush.bf16.msra.mxu0 %v1783
        %3454 = vmatpush.bf16.msra.mxu0 %v1779
        %3455 = vmatpush.bf16.msra.mxu0 %v1775
        %3456 = vmatpush.bf16.msra.mxu0 %v1771
        %3457 = vmatmul.bf16.gmra.mxu0 %v3395
        %v3458 = vpop.f32.mrf.mxu0
        %v3459 = vadd.f32 %v1571, %v3458
        %v3460 = vpop.f32.mrf.mxu0
        %3461 = vdwg.mxu0
        %3462 = vmatpush.bf16.msra.mxu0 %v1831
        %3463 = vmatpush.bf16.msra.mxu0 %v1827
        %3464 = vmatpush.bf16.msra.mxu0 %v1823
        %3465 = vmatpush.bf16.msra.mxu0 %v1819
        %3466 = vmatpush.bf16.msra.mxu0 %v1815
        %3467 = vmatpush.bf16.msra.mxu0 %v1811
        %3468 = vmatpush.bf16.msra.mxu0 %v1807
        %3469 = vmatpush.bf16.msra.mxu0 %v1803
        %3470 = vmatmul.bf16.gmra.mxu0 %v3396
        %v3471 = vpop.f32.mrf.mxu0
        %v3472 = vadd.f32 %v3459, %v3471
        %v3473 = vpop.f32.mrf.mxu0
        %3474 = vdwg.mxu0
        %3475 = vmatpush.bf16.msra.mxu0 %v1800
        %3476 = vmatpush.bf16.msra.mxu0 %v1796
        %3477 = vmatpush.bf16.msra.mxu0 %v1792
        %3478 = vmatpush.bf16.msra.mxu0 %v1788
        %3479 = vmatpush.bf16.msra.mxu0 %v1784
        %3480 = vmatpush.bf16.msra.mxu0 %v1780
        %3481 = vmatpush.bf16.msra.mxu0 %v1776
        %3482 = vmatpush.bf16.msra.mxu0 %v1772
        %3483 = vmatmul.bf16.gmra.mxu0 %v3395
        %v3484 = vpop.f32.mrf.mxu0
        %v3485 = vadd.f32 %v1572, %v3484
        %v3486 = vpop.f32.mrf.mxu0
        %3487 = vdwg.mxu0
        %3488 = vmatpush.bf16.msra.mxu0 %v1832
        %3489 = vmatpush.bf16.msra.mxu0 %v1828
        %3490 = vmatpush.bf16.msra.mxu0 %v1824
        %3491 = vmatpush.bf16.msra.mxu0 %v1820
        %3492 = vmatpush.bf16.msra.mxu0 %v1816
        %3493 = vmatpush.bf16.msra.mxu0 %v1812
        %3494 = vmatpush.bf16.msra.mxu0 %v1808
        %3495 = vmatpush.bf16.msra.mxu0 %v1804
        %3496 = vmatmul.bf16.gmra.mxu0 %v3396
        %v3497 = vpop.f32.mrf.mxu0
        %v3498 = vadd.f32 %v3485, %v3497
        %v3499 = vpop.f32.mrf.mxu0
        %3500 = vdwg.mxu0
        %v3501 = vxor.u32 %v3420, 2147483648
        %v3502 = vmul.f32 %v3501, 1.442695
        %v3503 = vpow.pop %v3502
        %v3504 = vadd.f32 %v3503, 1.0
        %v3505 = vrcp.pop %v3504
        %v3506 = vmul.f32 %v3504, %v3505
        %v3507 = vsub.f32 1.0, %v3506
        %v3508 = vmul.f32 %v3505, %v3507
        %v3509 = vadd.f32 %v3505, %v3508
        %vm3510 = vweird.f32 %v3504
        %vm3511 = vweird.f32 %v3505
        %vm3512 = vmor %vm3510, %vm3511
        %v3513 = vsel %vm3512, %v3505, %v3509
        %v3514 = vand.u32 2147483647, %v3504
        %vm3515 = vcmp.eq.f32.partialorder %v3514, 8.507059e+37
        %v3516 = vand.u32 %v3504, 2147483648
        %v3517 = vor.u32 1.1754944e-38, %v3516
        %v3518 = vsel %vm3515, %v3517, %v3513
        %v3519 = vmul.f32 1.0, %v3518
        %v3520 = vxor.u32 %v3446, 2147483648
        %v3521 = vmul.f32 %v3520, 1.442695
        %v3522 = vpow.pop %v3521
        %v3523 = vadd.f32 %v3522, 1.0
        %v3524 = vrcp.pop %v3523
        %v3525 = vmul.f32 %v3523, %v3524
        %v3526 = vsub.f32 1.0, %v3525
        %v3527 = vmul.f32 %v3524, %v3526
        %v3528 = vadd.f32 %v3524, %v3527
        %vm3529 = vweird.f32 %v3523
        %vm3530 = vweird.f32 %v3524
        %vm3531 = vmor %vm3529, %vm3530
        %v3532 = vsel %vm3531, %v3524, %v3528
        %v3533 = vand.u32 2147483647, %v3523
        %vm3534 = vcmp.eq.f32.partialorder %v3533, 8.507059e+37
        %v3535 = vand.u32 %v3523, 2147483648
        %v3536 = vor.u32 1.1754944e-38, %v3535
        %v3537 = vsel %vm3534, %v3536, %v3532
        %v3538 = vmul.f32 1.0, %v3537
        %v3539 = vmul.f32 %v3538, %v3498
        %v3540 = vadd.f32 %v3472, %v3539
        %v3541 = vtanh.pop %v3540
        %v3542 = vsub.f32 1.0, %v3519
        %v3543 = vmul.f32 %v3542, %v3541
        %v3544 = vmul.f32 %v3519, %v3245
        %v3545 = vadd.f32 %v3543, %v3544
        %3546 = vmatpush.bf16.msra.mxu0 %v1253
        %3547 = vmatpush.bf16.msra.mxu0 %v1249
        %3548 = vmatpush.bf16.msra.mxu0 %v1245
        %3549 = vmatpush.bf16.msra.mxu0 %v1241
        %3550 = vmatpush.bf16.msra.mxu0 %v1237
        %3551 = vmatpush.bf16.msra.mxu0 %v1233
        %3552 = vmatpush.bf16.msra.mxu0 %v1229
        %3553 = vmatpush.bf16.msra.mxu0 %v1225
        %3554 = vmatmul.bf16.gmra.mxu0 %v953
        %v3555 = vpop.f32.mrf.mxu0
        %v3556 = vadd.f32 %v1025, %v3555
        %v3557 = vpop.f32.mrf.mxu0
        %3558 = vdwg.mxu0
        %3559 = vmatpush.bf16.msra.mxu0 %v1285
        %3560 = vmatpush.bf16.msra.mxu0 %v1281
        %3561 = vmatpush.bf16.msra.mxu0 %v1277
        %3562 = vmatpush.bf16.msra.mxu0 %v1273
        %3563 = vmatpush.bf16.msra.mxu0 %v1269
        %3564 = vmatpush.bf16.msra.mxu0 %v1265
        %3565 = vmatpush.bf16.msra.mxu0 %v1261
        %3566 = vmatpush.bf16.msra.mxu0 %v1257
        %3567 = vmatmul.bf16.gmra.mxu0 %v3395
        %v3568 = vpop.f32.mrf.mxu0
        %v3569 = vadd.f32 %v3556, %v3568
        %v3570 = vpop.f32.mrf.mxu0
        %3571 = vdwg.mxu0
        %3572 = vmatpush.bf16.msra.mxu0 %v1254
        %3573 = vmatpush.bf16.msra.mxu0 %v1250
        %3574 = vmatpush.bf16.msra.mxu0 %v1246
        %3575 = vmatpush.bf16.msra.mxu0 %v1242
        %3576 = vmatpush.bf16.msra.mxu0 %v1238
        %3577 = vmatpush.bf16.msra.mxu0 %v1234
        %3578 = vmatpush.bf16.msra.mxu0 %v1230
        %3579 = vmatpush.bf16.msra.mxu0 %v1226
        %3580 = vmatmul.bf16.gmra.mxu0 %v953
        %v3581 = vpop.f32.mrf.mxu0
        %v3582 = vadd.f32 %v1026, %v3581
        %v3583 = vpop.f32.mrf.mxu0
        %3584 = vdwg.mxu0
        %3585 = vmatpush.bf16.msra.mxu0 %v1286
        %3586 = vmatpush.bf16.msra.mxu0 %v1282
        %3587 = vmatpush.bf16.msra.mxu0 %v1278
        %3588 = vmatpush.bf16.msra.mxu0 %v1274
        %3589 = vmatpush.bf16.msra.mxu0 %v1270
        %3590 = vmatpush.bf16.msra.mxu0 %v1266
        %3591 = vmatpush.bf16.msra.mxu0 %v1262
        %3592 = vmatpush.bf16.msra.mxu0 %v1258
        %3593 = vmatmul.bf16.gmra.mxu0 %v3395
        %v3594 = vpop.f32.mrf.mxu0
        %v3595 = vadd.f32 %v3582, %v3594
        %v3596 = vpop.f32.mrf.mxu0
        %3597 = vdwg.mxu0
        %3598 = vmatpush.bf16.msra.mxu0 %v1255
        %3599 = vmatpush.bf16.msra.mxu0 %v1251
        %3600 = vmatpush.bf16.msra.mxu0 %v1247
        %3601 = vmatpush.bf16.msra.mxu0 %v1243
        %3602 = vmatpush.bf16.msra.mxu0 %v1239
        %3603 = vmatpush.bf16.msra.mxu0 %v1235
        %3604 = vmatpush.bf16.msra.mxu0 %v1231
        %3605 = vmatpush.bf16.msra.mxu0 %v1227
        %3606 = vmatmul.bf16.gmra.mxu0 %v953
        %v3607 = vpop.f32.mrf.mxu0
        %v3608 = vadd.f32 %v1027, %v3607
        %v3609 = vpop.f32.mrf.mxu0
        %3610 = vdwg.mxu0
        %3611 = vmatpush.bf16.msra.mxu0 %v1287
        %3612 = vmatpush.bf16.msra.mxu0 %v1283
        %3613 = vmatpush.bf16.msra.mxu0 %v1279
        %3614 = vmatpush.bf16.msra.mxu0 %v1275
        %3615 = vmatpush.bf16.msra.mxu0 %v1271
        %3616 = vmatpush.bf16.msra.mxu0 %v1267
        %3617 = vmatpush.bf16.msra.mxu0 %v1263
        %3618 = vmatpush.bf16.msra.mxu0 %v1259
        %3619 = vmatmul.bf16.gmra.mxu0 %v3395
        %v3620 = vpop.f32.mrf.mxu0
        %v3621 = vadd.f32 %v3608, %v3620
        %v3622 = vpop.f32.mrf.mxu0
        %3623 = vdwg.mxu0
        %3624 = vmatpush.bf16.msra.mxu0 %v1256
        %3625 = vmatpush.bf16.msra.mxu0 %v1252
        %3626 = vmatpush.bf16.msra.mxu0 %v1248
        %3627 = vmatpush.bf16.msra.mxu0 %v1244
        %3628 = vmatpush.bf16.msra.mxu0 %v1240
        %3629 = vmatpush.bf16.msra.mxu0 %v1236
        %3630 = vmatpush.bf16.msra.mxu0 %v1232
        %3631 = vmatpush.bf16.msra.mxu0 %v1228
        %3632 = vmatmul.bf16.gmra.mxu0 %v953
        %v3633 = vpop.f32.mrf.mxu0
        %v3634 = vadd.f32 %v1028, %v3633
        %v3635 = vpop.f32.mrf.mxu0
        %3636 = vdwg.mxu0
        %3637 = vmatpush.bf16.msra.mxu0 %v1288
        %3638 = vmatpush.bf16.msra.mxu0 %v1284
        %3639 = vmatpush.bf16.msra.mxu0 %v1280
        %3640 = vmatpush.bf16.msra.mxu0 %v1276
        %3641 = vmatpush.bf16.msra.mxu0 %v1272
        %3642 = vmatpush.bf16.msra.mxu0 %v1268
        %3643 = vmatpush.bf16.msra.mxu0 %v1264
        %3644 = vmatpush.bf16.msra.mxu0 %v1260
        %3645 = vmatmul.bf16.gmra.mxu0 %v3395
        %v3646 = vpop.f32.mrf.mxu0
        %v3647 = vadd.f32 %v3634, %v3646
        %v3648 = vpop.f32.mrf.mxu0
        %3649 = vdwg.mxu0
        %v3650 = vxor.u32 %v3569, 2147483648
        %v3651 = vmul.f32 %v3650, 1.442695
        %v3652 = vpow.pop %v3651
        %v3653 = vadd.f32 %v3652, 1.0
        %v3654 = vrcp.pop %v3653
        %v3655 = vmul.f32 %v3653, %v3654
        %v3656 = vsub.f32 1.0, %v3655
        %v3657 = vmul.f32 %v3654, %v3656
        %v3658 = vadd.f32 %v3654, %v3657
        %vm3659 = vweird.f32 %v3653
        %vm3660 = vweird.f32 %v3654
        %vm3661 = vmor %vm3659, %vm3660
        %v3662 = vsel %vm3661, %v3654, %v3658
        %v3663 = vand.u32 2147483647, %v3653
        %vm3664 = vcmp.eq.f32.partialorder %v3663, 8.507059e+37
        %v3665 = vand.u32 %v3653, 2147483648
        %v3666 = vor.u32 1.1754944e-38, %v3665
        %v3667 = vsel %vm3664, %v3666, %v3662
        %v3668 = vmul.f32 1.0, %v3667
        %v3669 = vxor.u32 %v3595, 2147483648
        %v3670 = vmul.f32 %v3669, 1.442695
        %v3671 = vpow.pop %v3670
        %v3672 = vadd.f32 %v3671, 1.0
        %v3673 = vrcp.pop %v3672
        %v3674 = vmul.f32 %v3672, %v3673
        %v3675 = vsub.f32 1.0, %v3674
        %v3676 = vmul.f32 %v3673, %v3675
        %v3677 = vadd.f32 %v3673, %v3676
        %vm3678 = vweird.f32 %v3672
        %vm3679 = vweird.f32 %v3673
        %vm3680 = vmor %vm3678, %vm3679
        %v3681 = vsel %vm3680, %v3673, %v3677
        %v3682 = vand.u32 2147483647, %v3672
        %vm3683 = vcmp.eq.f32.partialorder %v3682, 8.507059e+37
        %v3684 = vand.u32 %v3672, 2147483648
        %v3685 = vor.u32 1.1754944e-38, %v3684
        %v3686 = vsel %vm3683, %v3685, %v3681
        %v3687 = vmul.f32 1.0, %v3686
        %v3688 = vmul.f32 %v3687, %v3647
        %v3689 = vadd.f32 %v3621, %v3688
        %v3690 = vtanh.pop %v3689
        %v3691 = vsub.f32 1.0, %v3668
        %v3692 = vmul.f32 %v3691, %v3690
        %v3693 = vmul.f32 %v3668, %v3394
        %v3694 = vadd.f32 %v3692, %v3693
        %v3695 = vpack.c.bf16 %v3694, %v3694
        %v3696 = vpack.c.bf16 %v3545, %v3545
        %3697 = vmatpush.bf16.msra.mxu0 %v1797
        %3698 = vmatpush.bf16.msra.mxu0 %v1793
        %3699 = vmatpush.bf16.msra.mxu0 %v1789
        %3700 = vmatpush.bf16.msra.mxu0 %v1785
        %3701 = vmatpush.bf16.msra.mxu0 %v1781
        %3702 = vmatpush.bf16.msra.mxu0 %v1777
        %3703 = vmatpush.bf16.msra.mxu0 %v1773
        %3704 = vmatpush.bf16.msra.mxu0 %v1769
        %3705 = vmatmul.bf16.gmra.mxu0 %v3695
        %v3706 = vpop.f32.mrf.mxu0
        %v3707 = vadd.f32 %v1569, %v3706
        %v3708 = vpop.f32.mrf.mxu0
        %3709 = vdwg.mxu0
        %3710 = vmatpush.bf16.msra.mxu0 %v1829
        %3711 = vmatpush.bf16.msra.mxu0 %v1825
        %3712 = vmatpush.bf16.msra.mxu0 %v1821
        %3713 = vmatpush.bf16.msra.mxu0 %v1817
        %3714 = vmatpush.bf16.msra.mxu0 %v1813
        %3715 = vmatpush.bf16.msra.mxu0 %v1809
        %3716 = vmatpush.bf16.msra.mxu0 %v1805
        %3717 = vmatpush.bf16.msra.mxu0 %v1801
        %3718 = vmatmul.bf16.gmra.mxu0 %v3696
        %v3719 = vpop.f32.mrf.mxu0
        %v3720 = vadd.f32 %v3707, %v3719
        %v3721 = vpop.f32.mrf.mxu0
        %3722 = vdwg.mxu0
        %3723 = vmatpush.bf16.msra.mxu0 %v1798
        %3724 = vmatpush.bf16.msra.mxu0 %v1794
        %3725 = vmatpush.bf16.msra.mxu0 %v1790
        %3726 = vmatpush.bf16.msra.mxu0 %v1786
        %3727 = vmatpush.bf16.msra.mxu0 %v1782
        %3728 = vmatpush.bf16.msra.mxu0 %v1778
        %3729 = vmatpush.bf16.msra.mxu0 %v1774
        %3730 = vmatpush.bf16.msra.mxu0 %v1770
        %3731 = vmatmul.bf16.gmra.mxu0 %v3695
        %v3732 = vpop.f32.mrf.mxu0
        %v3733 = vadd.f32 %v1570, %v3732
        %v3734 = vpop.f32.mrf.mxu0
        %3735 = vdwg.mxu0
        %3736 = vmatpush.bf16.msra.mxu0 %v1830
        %3737 = vmatpush.bf16.msra.mxu0 %v1826
        %3738 = vmatpush.bf16.msra.mxu0 %v1822
        %3739 = vmatpush.bf16.msra.mxu0 %v1818
        %3740 = vmatpush.bf16.msra.mxu0 %v1814
        %3741 = vmatpush.bf16.msra.mxu0 %v1810
        %3742 = vmatpush.bf16.msra.mxu0 %v1806
        %3743 = vmatpush.bf16.msra.mxu0 %v1802
        %3744 = vmatmul.bf16.gmra.mxu0 %v3696
        %v3745 = vpop.f32.mrf.mxu0
        %v3746 = vadd.f32 %v3733, %v3745
        %v3747 = vpop.f32.mrf.mxu0
        %3748 = vdwg.mxu0
        %3749 = vmatpush.bf16.msra.mxu0 %v1799
        %3750 = vmatpush.bf16.msra.mxu0 %v1795
        %3751 = vmatpush.bf16.msra.mxu0 %v1791
        %3752 = vmatpush.bf16.msra.mxu0 %v1787
        %3753 = vmatpush.bf16.msra.mxu0 %v1783
        %3754 = vmatpush.bf16.msra.mxu0 %v1779
        %3755 = vmatpush.bf16.msra.mxu0 %v1775
        %3756 = vmatpush.bf16.msra.mxu0 %v1771
        %3757 = vmatmul.bf16.gmra.mxu0 %v3695
        %v3758 = vpop.f32.mrf.mxu0
        %v3759 = vadd.f32 %v1571, %v3758
        %v3760 = vpop.f32.mrf.mxu0
        %3761 = vdwg.mxu0
        %3762 = vmatpush.bf16.msra.mxu0 %v1831
        %3763 = vmatpush.bf16.msra.mxu0 %v1827
        %3764 = vmatpush.bf16.msra.mxu0 %v1823
        %3765 = vmatpush.bf16.msra.mxu0 %v1819
        %3766 = vmatpush.bf16.msra.mxu0 %v1815
        %3767 = vmatpush.bf16.msra.mxu0 %v1811
        %3768 = vmatpush.bf16.msra.mxu0 %v1807
        %3769 = vmatpush.bf16.msra.mxu0 %v1803
        %3770 = vmatmul.bf16.gmra.mxu0 %v3696
        %v3771 = vpop.f32.mrf.mxu0
        %v3772 = vadd.f32 %v3759, %v3771
        %v3773 = vpop.f32.mrf.mxu0
        %3774 = vdwg.mxu0
        %3775 = vmatpush.bf16.msra.mxu0 %v1800
        %3776 = vmatpush.bf16.msra.mxu0 %v1796
        %3777 = vmatpush.bf16.msra.mxu0 %v1792
        %3778 = vmatpush.bf16.msra.mxu0 %v1788
        %3779 = vmatpush.bf16.msra.mxu0 %v1784
        %3780 = vmatpush.bf16.msra.mxu0 %v1780
        %3781 = vmatpush.bf16.msra.mxu0 %v1776
        %3782 = vmatpush.bf16.msra.mxu0 %v1772
        %3783 = vmatmul.bf16.gmra.mxu0 %v3695
        %v3784 = vpop.f32.mrf.mxu0
        %v3785 = vadd.f32 %v1572, %v3784
        %v3786 = vpop.f32.mrf.mxu0
        %3787 = vdwg.mxu0
        %3788 = vmatpush.bf16.msra.mxu0 %v1832
        %3789 = vmatpush.bf16.msra.mxu0 %v1828
        %3790 = vmatpush.bf16.msra.mxu0 %v1824
        %3791 = vmatpush.bf16.msra.mxu0 %v1820
        %3792 = vmatpush.bf16.msra.mxu0 %v1816
        %3793 = vmatpush.bf16.msra.mxu0 %v1812
        %3794 = vmatpush.bf16.msra.mxu0 %v1808
        %3795 = vmatpush.bf16.msra.mxu0 %v1804
        %3796 = vmatmul.bf16.gmra.mxu0 %v3696
        %v3797 = vpop.f32.mrf.mxu0
        %v3798 = vadd.f32 %v3785, %v3797
        %v3799 = vpop.f32.mrf.mxu0
        %3800 = vdwg.mxu0
        %v3801 = vxor.u32 %v3720, 2147483648
        %v3802 = vmul.f32 %v3801, 1.442695
        %v3803 = vpow.pop %v3802
        %v3804 = vadd.f32 %v3803, 1.0
        %v3805 = vrcp.pop %v3804
        %v3806 = vmul.f32 %v3804, %v3805
        %v3807 = vsub.f32 1.0, %v3806
        %v3808 = vmul.f32 %v3805, %v3807
        %v3809 = vadd.f32 %v3805, %v3808
        %vm3810 = vweird.f32 %v3804
        %vm3811 = vweird.f32 %v3805
        %vm3812 = vmor %vm3810, %vm3811
        %v3813 = vsel %vm3812, %v3805, %v3809
        %v3814 = vand.u32 2147483647, %v3804
        %vm3815 = vcmp.eq.f32.partialorder %v3814, 8.507059e+37
        %v3816 = vand.u32 %v3804, 2147483648
        %v3817 = vor.u32 1.1754944e-38, %v3816
        %v3818 = vsel %vm3815, %v3817, %v3813
        %v3819 = vmul.f32 1.0, %v3818
        %v3820 = vxor.u32 %v3746, 2147483648
        %v3821 = vmul.f32 %v3820, 1.442695
        %v3822 = vpow.pop %v3821
        %v3823 = vadd.f32 %v3822, 1.0
        %v3824 = vrcp.pop %v3823
        %v3825 = vmul.f32 %v3823, %v3824
        %v3826 = vsub.f32 1.0, %v3825
        %v3827 = vmul.f32 %v3824, %v3826
        %v3828 = vadd.f32 %v3824, %v3827
        %vm3829 = vweird.f32 %v3823
        %vm3830 = vweird.f32 %v3824
        %vm3831 = vmor %vm3829, %vm3830
        %v3832 = vsel %vm3831, %v3824, %v3828
        %v3833 = vand.u32 2147483647, %v3823
        %vm3834 = vcmp.eq.f32.partialorder %v3833, 8.507059e+37
        %v3835 = vand.u32 %v3823, 2147483648
        %v3836 = vor.u32 1.1754944e-38, %v3835
        %v3837 = vsel %vm3834, %v3836, %v3832
        %v3838 = vmul.f32 1.0, %v3837
        %v3839 = vmul.f32 %v3838, %v3798
        %v3840 = vadd.f32 %v3772, %v3839
        %v3841 = vtanh.pop %v3840
        %v3842 = vsub.f32 1.0, %v3819
        %v3843 = vmul.f32 %v3842, %v3841
        %v3844 = vmul.f32 %v3819, %v3545
        %v3845 = vadd.f32 %v3843, %v3844
        %3846 = vmatpush.bf16.msra.mxu0 %v1253
        %3847 = vmatpush.bf16.msra.mxu0 %v1249
        %3848 = vmatpush.bf16.msra.mxu0 %v1245
        %3849 = vmatpush.bf16.msra.mxu0 %v1241
        %3850 = vmatpush.bf16.msra.mxu0 %v1237
        %3851 = vmatpush.bf16.msra.mxu0 %v1233
        %3852 = vmatpush.bf16.msra.mxu0 %v1229
        %3853 = vmatpush.bf16.msra.mxu0 %v1225
        %3854 = vmatmul.bf16.gmra.mxu0 %v954
        %v3855 = vpop.f32.mrf.mxu0
        %v3856 = vadd.f32 %v1025, %v3855
        %v3857 = vpop.f32.mrf.mxu0
        %3858 = vdwg.mxu0
        %3859 = vmatpush.bf16.msra.mxu0 %v1285
        %3860 = vmatpush.bf16.msra.mxu0 %v1281
        %3861 = vmatpush.bf16.msra.mxu0 %v1277
        %3862 = vmatpush.bf16.msra.mxu0 %v1273
        %3863 = vmatpush.bf16.msra.mxu0 %v1269
        %3864 = vmatpush.bf16.msra.mxu0 %v1265
        %3865 = vmatpush.bf16.msra.mxu0 %v1261
        %3866 = vmatpush.bf16.msra.mxu0 %v1257
        %3867 = vmatmul.bf16.gmra.mxu0 %v3695
        %v3868 = vpop.f32.mrf.mxu0
        %v3869 = vadd.f32 %v3856, %v3868
        %v3870 = vpop.f32.mrf.mxu0
        %3871 = vdwg.mxu0
        %3872 = vmatpush.bf16.msra.mxu0 %v1254
        %3873 = vmatpush.bf16.msra.mxu0 %v1250
        %3874 = vmatpush.bf16.msra.mxu0 %v1246
        %3875 = vmatpush.bf16.msra.mxu0 %v1242
        %3876 = vmatpush.bf16.msra.mxu0 %v1238
        %3877 = vmatpush.bf16.msra.mxu0 %v1234
        %3878 = vmatpush.bf16.msra.mxu0 %v1230
        %3879 = vmatpush.bf16.msra.mxu0 %v1226
        %3880 = vmatmul.bf16.gmra.mxu0 %v954
        %v3881 = vpop.f32.mrf.mxu0
        %v3882 = vadd.f32 %v1026, %v3881
        %v3883 = vpop.f32.mrf.mxu0
        %3884 = vdwg.mxu0
        %3885 = vmatpush.bf16.msra.mxu0 %v1286
        %3886 = vmatpush.bf16.msra.mxu0 %v1282
        %3887 = vmatpush.bf16.msra.mxu0 %v1278
        %3888 = vmatpush.bf16.msra.mxu0 %v1274
        %3889 = vmatpush.bf16.msra.mxu0 %v1270
        %3890 = vmatpush.bf16.msra.mxu0 %v1266
        %3891 = vmatpush.bf16.msra.mxu0 %v1262
        %3892 = vmatpush.bf16.msra.mxu0 %v1258
        %3893 = vmatmul.bf16.gmra.mxu0 %v3695
        %v3894 = vpop.f32.mrf.mxu0
        %v3895 = vadd.f32 %v3882, %v3894
        %v3896 = vpop.f32.mrf.mxu0
        %3897 = vdwg.mxu0
        %3898 = vmatpush.bf16.msra.mxu0 %v1255
        %3899 = vmatpush.bf16.msra.mxu0 %v1251
        %3900 = vmatpush.bf16.msra.mxu0 %v1247
        %3901 = vmatpush.bf16.msra.mxu0 %v1243
        %3902 = vmatpush.bf16.msra.mxu0 %v1239
        %3903 = vmatpush.bf16.msra.mxu0 %v1235
        %3904 = vmatpush.bf16.msra.mxu0 %v1231
        %3905 = vmatpush.bf16.msra.mxu0 %v1227
        %3906 = vmatmul.bf16.gmra.mxu0 %v954
        %v3907 = vpop.f32.mrf.mxu0
        %v3908 = vadd.f32 %v1027, %v3907
        %v3909 = vpop.f32.mrf.mxu0
        %3910 = vdwg.mxu0
        %3911 = vmatpush.bf16.msra.mxu0 %v1287
        %3912 = vmatpush.bf16.msra.mxu0 %v1283
        %3913 = vmatpush.bf16.msra.mxu0 %v1279
        %3914 = vmatpush.bf16.msra.mxu0 %v1275
        %3915 = vmatpush.bf16.msra.mxu0 %v1271
        %3916 = vmatpush.bf16.msra.mxu0 %v1267
        %3917 = vmatpush.bf16.msra.mxu0 %v1263
        %3918 = vmatpush.bf16.msra.mxu0 %v1259
        %3919 = vmatmul.bf16.gmra.mxu0 %v3695
        %v3920 = vpop.f32.mrf.mxu0
        %v3921 = vadd.f32 %v3908, %v3920
        %v3922 = vpop.f32.mrf.mxu0
        %3923 = vdwg.mxu0
        %3924 = vmatpush.bf16.msra.mxu0 %v1256
        %3925 = vmatpush.bf16.msra.mxu0 %v1252
        %3926 = vmatpush.bf16.msra.mxu0 %v1248
        %3927 = vmatpush.bf16.msra.mxu0 %v1244
        %3928 = vmatpush.bf16.msra.mxu0 %v1240
        %3929 = vmatpush.bf16.msra.mxu0 %v1236
        %3930 = vmatpush.bf16.msra.mxu0 %v1232
        %3931 = vmatpush.bf16.msra.mxu0 %v1228
        %3932 = vmatmul.bf16.gmra.mxu0 %v954
        %v3933 = vpop.f32.mrf.mxu0
        %v3934 = vadd.f32 %v1028, %v3933
        %v3935 = vpop.f32.mrf.mxu0
        %3936 = vdwg.mxu0
        %3937 = vmatpush.bf16.msra.mxu0 %v1288
        %3938 = vmatpush.bf16.msra.mxu0 %v1284
        %3939 = vmatpush.bf16.msra.mxu0 %v1280
        %3940 = vmatpush.bf16.msra.mxu0 %v1276
        %3941 = vmatpush.bf16.msra.mxu0 %v1272
        %3942 = vmatpush.bf16.msra.mxu0 %v1268
        %3943 = vmatpush.bf16.msra.mxu0 %v1264
        %3944 = vmatpush.bf16.msra.mxu0 %v1260
        %3945 = vmatmul.bf16.gmra.mxu0 %v3695
        %v3946 = vpop.f32.mrf.mxu0
        %v3947 = vadd.f32 %v3934, %v3946
        %v3948 = vpop.f32.mrf.mxu0
        %3949 = vdwg.mxu0
        %v3950 = vxor.u32 %v3869, 2147483648
        %v3951 = vmul.f32 %v3950, 1.442695
        %v3952 = vpow.pop %v3951
        %v3953 = vadd.f32 %v3952, 1.0
        %v3954 = vrcp.pop %v3953
        %v3955 = vmul.f32 %v3953, %v3954
        %v3956 = vsub.f32 1.0, %v3955
        %v3957 = vmul.f32 %v3954, %v3956
        %v3958 = vadd.f32 %v3954, %v3957
        %vm3959 = vweird.f32 %v3953
        %vm3960 = vweird.f32 %v3954
        %vm3961 = vmor %vm3959, %vm3960
        %v3962 = vsel %vm3961, %v3954, %v3958
        %v3963 = vand.u32 2147483647, %v3953
        %vm3964 = vcmp.eq.f32.partialorder %v3963, 8.507059e+37
        %v3965 = vand.u32 %v3953, 2147483648
        %v3966 = vor.u32 1.1754944e-38, %v3965
        %v3967 = vsel %vm3964, %v3966, %v3962
        %v3968 = vmul.f32 1.0, %v3967
        %v3969 = vxor.u32 %v3895, 2147483648
        %v3970 = vmul.f32 %v3969, 1.442695
        %v3971 = vpow.pop %v3970
        %v3972 = vadd.f32 %v3971, 1.0
        %v3973 = vrcp.pop %v3972
        %v3974 = vmul.f32 %v3972, %v3973
        %v3975 = vsub.f32 1.0, %v3974
        %v3976 = vmul.f32 %v3973, %v3975
        %v3977 = vadd.f32 %v3973, %v3976
        %vm3978 = vweird.f32 %v3972
        %vm3979 = vweird.f32 %v3973
        %vm3980 = vmor %vm3978, %vm3979
        %v3981 = vsel %vm3980, %v3973, %v3977
        %v3982 = vand.u32 2147483647, %v3972
        %vm3983 = vcmp.eq.f32.partialorder %v3982, 8.507059e+37
        %v3984 = vand.u32 %v3972, 2147483648
        %v3985 = vor.u32 1.1754944e-38, %v3984
        %v3986 = vsel %vm3983, %v3985, %v3981
        %v3987 = vmul.f32 1.0, %v3986
        %v3988 = vmul.f32 %v3987, %v3947
        %v3989 = vadd.f32 %v3921, %v3988
        %v3990 = vtanh.pop %v3989
        %v3991 = vsub.f32 1.0, %v3968
        %v3992 = vmul.f32 %v3991, %v3990
        %v3993 = vmul.f32 %v3968, %v3694
        %v3994 = vadd.f32 %v3992, %v3993
        %v3995 = vpack.c.bf16 %v3994, %v3994
        %v3996 = vpack.c.bf16 %v3845, %v3845
        %3997 = vmatpush.bf16.msra.mxu0 %v1797
        %3998 = vmatpush.bf16.msra.mxu0 %v1793
        %3999 = vmatpush.bf16.msra.mxu0 %v1789
        %4000 = vmatpush.bf16.msra.mxu0 %v1785
        %4001 = vmatpush.bf16.msra.mxu0 %v1781
        %4002 = vmatpush.bf16.msra.mxu0 %v1777
        %4003 = vmatpush.bf16.msra.mxu0 %v1773
        %4004 = vmatpush.bf16.msra.mxu0 %v1769
        %4005 = vmatmul.bf16.gmra.mxu0 %v3995
        %v4006 = vpop.f32.mrf.mxu0
        %v4007 = vadd.f32 %v1569, %v4006
        %v4008 = vpop.f32.mrf.mxu0
        %4009 = vdwg.mxu0
        %4010 = vmatpush.bf16.msra.mxu0 %v1829
        %4011 = vmatpush.bf16.msra.mxu0 %v1825
        %4012 = vmatpush.bf16.msra.mxu0 %v1821
        %4013 = vmatpush.bf16.msra.mxu0 %v1817
        %4014 = vmatpush.bf16.msra.mxu0 %v1813
        %4015 = vmatpush.bf16.msra.mxu0 %v1809
        %4016 = vmatpush.bf16.msra.mxu0 %v1805
        %4017 = vmatpush.bf16.msra.mxu0 %v1801
        %4018 = vmatmul.bf16.gmra.mxu0 %v3996
        %v4019 = vpop.f32.mrf.mxu0
        %v4020 = vadd.f32 %v4007, %v4019
        %v4021 = vpop.f32.mrf.mxu0
        %4022 = vdwg.mxu0
        %4023 = vmatpush.bf16.msra.mxu0 %v1798
        %4024 = vmatpush.bf16.msra.mxu0 %v1794
        %4025 = vmatpush.bf16.msra.mxu0 %v1790
        %4026 = vmatpush.bf16.msra.mxu0 %v1786
        %4027 = vmatpush.bf16.msra.mxu0 %v1782
        %4028 = vmatpush.bf16.msra.mxu0 %v1778
        %4029 = vmatpush.bf16.msra.mxu0 %v1774
        %4030 = vmatpush.bf16.msra.mxu0 %v1770
        %4031 = vmatmul.bf16.gmra.mxu0 %v3995
        %v4032 = vpop.f32.mrf.mxu0
        %v4033 = vadd.f32 %v1570, %v4032
        %v4034 = vpop.f32.mrf.mxu0
        %4035 = vdwg.mxu0
        %4036 = vmatpush.bf16.msra.mxu0 %v1830
        %4037 = vmatpush.bf16.msra.mxu0 %v1826
        %4038 = vmatpush.bf16.msra.mxu0 %v1822
        %4039 = vmatpush.bf16.msra.mxu0 %v1818
        %4040 = vmatpush.bf16.msra.mxu0 %v1814
        %4041 = vmatpush.bf16.msra.mxu0 %v1810
        %4042 = vmatpush.bf16.msra.mxu0 %v1806
        %4043 = vmatpush.bf16.msra.mxu0 %v1802
        %4044 = vmatmul.bf16.gmra.mxu0 %v3996
        %v4045 = vpop.f32.mrf.mxu0
        %v4046 = vadd.f32 %v4033, %v4045
        %v4047 = vpop.f32.mrf.mxu0
        %4048 = vdwg.mxu0
        %4049 = vmatpush.bf16.msra.mxu0 %v1799
        %4050 = vmatpush.bf16.msra.mxu0 %v1795
        %4051 = vmatpush.bf16.msra.mxu0 %v1791
        %4052 = vmatpush.bf16.msra.mxu0 %v1787
        %4053 = vmatpush.bf16.msra.mxu0 %v1783
        %4054 = vmatpush.bf16.msra.mxu0 %v1779
        %4055 = vmatpush.bf16.msra.mxu0 %v1775
        %4056 = vmatpush.bf16.msra.mxu0 %v1771
        %4057 = vmatmul.bf16.gmra.mxu0 %v3995
        %v4058 = vpop.f32.mrf.mxu0
        %v4059 = vadd.f32 %v1571, %v4058
        %v4060 = vpop.f32.mrf.mxu0
        %4061 = vdwg.mxu0
        %4062 = vmatpush.bf16.msra.mxu0 %v1831
        %4063 = vmatpush.bf16.msra.mxu0 %v1827
        %4064 = vmatpush.bf16.msra.mxu0 %v1823
        %4065 = vmatpush.bf16.msra.mxu0 %v1819
        %4066 = vmatpush.bf16.msra.mxu0 %v1815
        %4067 = vmatpush.bf16.msra.mxu0 %v1811
        %4068 = vmatpush.bf16.msra.mxu0 %v1807
        %4069 = vmatpush.bf16.msra.mxu0 %v1803
        %4070 = vmatmul.bf16.gmra.mxu0 %v3996
        %v4071 = vpop.f32.mrf.mxu0
        %v4072 = vadd.f32 %v4059, %v4071
        %v4073 = vpop.f32.mrf.mxu0
        %4074 = vdwg.mxu0
        %4075 = vmatpush.bf16.msra.mxu0 %v1800
        %4076 = vmatpush.bf16.msra.mxu0 %v1796
        %4077 = vmatpush.bf16.msra.mxu0 %v1792
        %4078 = vmatpush.bf16.msra.mxu0 %v1788
        %4079 = vmatpush.bf16.msra.mxu0 %v1784
        %4080 = vmatpush.bf16.msra.mxu0 %v1780
        %4081 = vmatpush.bf16.msra.mxu0 %v1776
        %4082 = vmatpush.bf16.msra.mxu0 %v1772
        %4083 = vmatmul.bf16.gmra.mxu0 %v3995
        %v4084 = vpop.f32.mrf.mxu0
        %v4085 = vadd.f32 %v1572, %v4084
        %v4086 = vpop.f32.mrf.mxu0
        %4087 = vdwg.mxu0
        %4088 = vmatpush.bf16.msra.mxu0 %v1832
        %4089 = vmatpush.bf16.msra.mxu0 %v1828
        %4090 = vmatpush.bf16.msra.mxu0 %v1824
        %4091 = vmatpush.bf16.msra.mxu0 %v1820
        %4092 = vmatpush.bf16.msra.mxu0 %v1816
        %4093 = vmatpush.bf16.msra.mxu0 %v1812
        %4094 = vmatpush.bf16.msra.mxu0 %v1808
        %4095 = vmatpush.bf16.msra.mxu0 %v1804
        %4096 = vmatmul.bf16.gmra.mxu0 %v3996
        %v4097 = vpop.f32.mrf.mxu0
        %v4098 = vadd.f32 %v4085, %v4097
        %v4099 = vpop.f32.mrf.mxu0
        %4100 = vdwg.mxu0
        %v4101 = vxor.u32 %v4020, 2147483648
        %v4102 = vmul.f32 %v4101, 1.442695
        %v4103 = vpow.pop %v4102
        %v4104 = vadd.f32 %v4103, 1.0
        %v4105 = vrcp.pop %v4104
        %v4106 = vmul.f32 %v4104, %v4105
        %v4107 = vsub.f32 1.0, %v4106
        %v4108 = vmul.f32 %v4105, %v4107
        %v4109 = vadd.f32 %v4105, %v4108
        %vm4110 = vweird.f32 %v4104
        %vm4111 = vweird.f32 %v4105
        %vm4112 = vmor %vm4110, %vm4111
        %v4113 = vsel %vm4112, %v4105, %v4109
        %v4114 = vand.u32 2147483647, %v4104
        %vm4115 = vcmp.eq.f32.partialorder %v4114, 8.507059e+37
        %v4116 = vand.u32 %v4104, 2147483648
        %v4117 = vor.u32 1.1754944e-38, %v4116
        %v4118 = vsel %vm4115, %v4117, %v4113
        %v4119 = vmul.f32 1.0, %v4118
        %v4120 = vxor.u32 %v4046, 2147483648
        %v4121 = vmul.f32 %v4120, 1.442695
        %v4122 = vpow.pop %v4121
        %v4123 = vadd.f32 %v4122, 1.0
        %v4124 = vrcp.pop %v4123
        %v4125 = vmul.f32 %v4123, %v4124
        %v4126 = vsub.f32 1.0, %v4125
        %v4127 = vmul.f32 %v4124, %v4126
        %v4128 = vadd.f32 %v4124, %v4127
        %vm4129 = vweird.f32 %v4123
        %vm4130 = vweird.f32 %v4124
        %vm4131 = vmor %vm4129, %vm4130
        %v4132 = vsel %vm4131, %v4124, %v4128
        %v4133 = vand.u32 2147483647, %v4123
        %vm4134 = vcmp.eq.f32.partialorder %v4133, 8.507059e+37
        %v4135 = vand.u32 %v4123, 2147483648
        %v4136 = vor.u32 1.1754944e-38, %v4135
        %v4137 = vsel %vm4134, %v4136, %v4132
        %v4138 = vmul.f32 1.0, %v4137
        %v4139 = vmul.f32 %v4138, %v4098
        %v4140 = vadd.f32 %v4072, %v4139
        %v4141 = vtanh.pop %v4140
        %v4142 = vsub.f32 1.0, %v4119
        %v4143 = vmul.f32 %v4142, %v4141
        %v4144 = vmul.f32 %v4119, %v3845
        %v4145 = vadd.f32 %v4143, %v4144
        %4146 = vst [vmem:[%s800] sm:$0xff] %v3994
        %4147 = vst [vmem:[%s807] sm:$0xff] %v4145
        %v4148 = vpack.c.bf16 %v2345, %v2045
        %v4149 = vpack.c.bf16 %v2945, %v2645
        %v4150 = vpack.c.bf16 %v3545, %v3245
        %v4151 = vpack.c.bf16 %v4145, %v3845
        %v4152 = vld [vmem:[#allocation16] sm:$0xff]
        %v4153 = vld [vmem:[#allocation16 + $0x8] sm:$0xff]
        %v4154 = vld [vmem:[#allocation16 + $0x10] sm:$0xff]
        %v4155 = vld [vmem:[#allocation16 + $0x18] sm:$0xff]
        %v4156 = vld [vmem:[#allocation16 + $0x20] sm:$0xff]
        %v4157 = vld [vmem:[#allocation16 + $0x28] sm:$0xff]
        %v4158 = vld [vmem:[#allocation16 + $0x30] sm:$0xff]
        %v4159 = vld [vmem:[#allocation16 + $0x38] sm:$0xff]
        %v4160 = vld [vmem:[#allocation16 + $0x40] sm:$0xff]
        %v4161 = vld [vmem:[#allocation16 + $0x48] sm:$0xff]
        %v4162 = vld [vmem:[#allocation16 + $0x50] sm:$0xff]
        %v4163 = vld [vmem:[#allocation16 + $0x58] sm:$0xff]
        %v4164 = vld [vmem:[#allocation16 + $0x60] sm:$0xff]
        %v4165 = vld [vmem:[#allocation16 + $0x68] sm:$0xff]
        %v4166 = vld [vmem:[#allocation16 + $0x70] sm:$0xff]
        %v4167 = vld [vmem:[#allocation16 + $0x78] sm:$0xff]
        %v4168 = vld [vmem:[%s10] sm:$0x3]
        %v4170 = vperm.slane %v4168, 0
        %v4171 = vperm.slane %v4168, 1
        %v4190 = vunpack.c.l.b16 %v4152
        %v4191 = vunpack.c.h.b16 %v4152
        %v4192 = vunpack.c.l.b16 %v4153
        %v4193 = vunpack.c.h.b16 %v4153
        %v4194 = vunpack.c.l.b16 %v4154
        %v4195 = vunpack.c.h.b16 %v4154
        %v4196 = vunpack.c.l.b16 %v4155
        %v4197 = vunpack.c.h.b16 %v4155
        %v4198 = vunpack.c.l.b16 %v4156
        %v4199 = vunpack.c.h.b16 %v4156
        %v4200 = vunpack.c.l.b16 %v4157
        %v4201 = vunpack.c.h.b16 %v4157
        %v4202 = vunpack.c.l.b16 %v4158
        %v4203 = vunpack.c.h.b16 %v4158
        %v4204 = vunpack.c.l.b16 %v4159
        %v4205 = vunpack.c.h.b16 %v4159
        %v4206 = vunpack.c.l.b16 %v4160
        %v4207 = vunpack.c.h.b16 %v4160
        %v4208 = vunpack.c.l.b16 %v4161
        %v4209 = vunpack.c.h.b16 %v4161
        %v4210 = vunpack.c.l.b16 %v4162
        %v4211 = vunpack.c.h.b16 %v4162
        %v4212 = vunpack.c.l.b16 %v4163
        %v4213 = vunpack.c.h.b16 %v4163
        %v4214 = vunpack.c.l.b16 %v4164
        %v4215 = vunpack.c.h.b16 %v4164
        %v4216 = vunpack.c.l.b16 %v4165
        %v4217 = vunpack.c.h.b16 %v4165
        %v4218 = vunpack.c.l.b16 %v4166
        %v4219 = vunpack.c.h.b16 %v4166
        %v4220 = vunpack.c.l.b16 %v4167
        %v4221 = vunpack.c.h.b16 %v4167
        %v4222 = vpack.c.b16 %v4192, %v4190
        %v4223 = vpack.c.b16 %v4193, %v4191
        %v4224 = vpack.c.b16 %v4196, %v4194
        %v4225 = vpack.c.b16 %v4197, %v4195
        %v4226 = vpack.c.b16 %v4200, %v4198
        %v4227 = vpack.c.b16 %v4201, %v4199
        %v4228 = vpack.c.b16 %v4204, %v4202
        %v4229 = vpack.c.b16 %v4205, %v4203
        %v4230 = vpack.c.b16 %v4208, %v4206
        %v4231 = vpack.c.b16 %v4209, %v4207
        %v4232 = vpack.c.b16 %v4212, %v4210
        %v4233 = vpack.c.b16 %v4213, %v4211
        %v4234 = vpack.c.b16 %v4216, %v4214
        %v4235 = vpack.c.b16 %v4217, %v4215
        %v4236 = vpack.c.b16 %v4220, %v4218
        %v4237 = vpack.c.b16 %v4221, %v4219
        %4254 = vmatpush.bf16.msra.mxu0 %v4236
        %4255 = vmatpush.bf16.msra.mxu0 %v4234
        %4256 = vmatpush.bf16.msra.mxu0 %v4232
        %4257 = vmatpush.bf16.msra.mxu0 %v4230
        %4258 = vmatpush.bf16.msra.mxu0 %v4228
        %4259 = vmatpush.bf16.msra.mxu0 %v4226
        %4260 = vmatpush.bf16.msra.mxu0 %v4224
        %4261 = vmatpush.bf16.msra.mxu0 %v4222
        %4262 = vmatmul.bf16.gmra.mxu0 %v4148
        %v4263 = vpop.f32.mrf.mxu0
        %v4264 = vadd.f32 %v4170, %v4263
        %v4265 = vpop.f32.mrf.mxu0
        %v4266 = vadd.f32 %v4170, %v4265
        %4267 = vmatmul.bf16.gmra.mxu0 %v4149
        %v4268 = vpop.f32.mrf.mxu0
        %v4269 = vadd.f32 %v4170, %v4268
        %v4270 = vpop.f32.mrf.mxu0
        %v4271 = vadd.f32 %v4170, %v4270
        %4272 = vmatmul.bf16.gmra.mxu0 %v4150
        %v4273 = vpop.f32.mrf.mxu0
        %v4274 = vadd.f32 %v4170, %v4273
        %v4275 = vpop.f32.mrf.mxu0
        %v4276 = vadd.f32 %v4170, %v4275
        %4277 = vmatmul.bf16.gmra.mxu0 %v4151
        %v4278 = vpop.f32.mrf.mxu0
        %v4279 = vadd.f32 %v4170, %v4278
        %v4280 = vpop.f32.mrf.mxu0
        %v4281 = vadd.f32 %v4170, %v4280
        %4282 = vdwg.mxu0
        %4283 = vmatpush.bf16.msra.mxu0 %v4237
        %4284 = vmatpush.bf16.msra.mxu0 %v4235
        %4285 = vmatpush.bf16.msra.mxu0 %v4233
        %4286 = vmatpush.bf16.msra.mxu0 %v4231
        %4287 = vmatpush.bf16.msra.mxu0 %v4229
        %4288 = vmatpush.bf16.msra.mxu0 %v4227
        %4289 = vmatpush.bf16.msra.mxu0 %v4225
        %4290 = vmatpush.bf16.msra.mxu0 %v4223
        %4291 = vmatmul.bf16.gmra.mxu0 %v4148
        %v4292 = vpop.f32.mrf.mxu0
        %v4293 = vadd.f32 %v4171, %v4292
        %v4294 = vpop.f32.mrf.mxu0
        %v4295 = vadd.f32 %v4171, %v4294
        %4296 = vmatmul.bf16.gmra.mxu0 %v4149
        %v4297 = vpop.f32.mrf.mxu0
        %v4298 = vadd.f32 %v4171, %v4297
        %v4299 = vpop.f32.mrf.mxu0
        %v4300 = vadd.f32 %v4171, %v4299
        %4301 = vmatmul.bf16.gmra.mxu0 %v4150
        %v4302 = vpop.f32.mrf.mxu0
        %v4303 = vadd.f32 %v4171, %v4302
        %v4304 = vpop.f32.mrf.mxu0
        %v4305 = vadd.f32 %v4171, %v4304
        %4306 = vmatmul.bf16.gmra.mxu0 %v4151
        %v4307 = vpop.f32.mrf.mxu0
        %v4308 = vadd.f32 %v4171, %v4307
        %v4309 = vpop.f32.mrf.mxu0
        %v4310 = vadd.f32 %v4171, %v4309
        %4311 = vdwg.mxu0
        %v4312 = vmax.f32 %v4264, 0.0
        %v4313 = vmax.f32 %v4293, 0.0
        %v4314 = vmax.f32 %v4266, 0.0
        %v4315 = vmax.f32 %v4295, 0.0
        %v4316 = vmax.f32 %v4269, 0.0
        %v4317 = vmax.f32 %v4298, 0.0
        %v4318 = vmax.f32 %v4271, 0.0
        %v4319 = vmax.f32 %v4300, 0.0
        %v4320 = vmax.f32 %v4274, 0.0
        %v4321 = vmax.f32 %v4303, 0.0
        %v4322 = vmax.f32 %v4276, 0.0
        %v4323 = vmax.f32 %v4305, 0.0
        %v4324 = vmax.f32 %v4279, 0.0
        %v4325 = vmax.f32 %v4308, 0.0
        %v4326 = vmax.f32 %v4281, 0.0
        %v4327 = vmax.f32 %v4310, 0.0
        %v4328 = vpack.c.bf16 %v4314, %v4312
        %v4329 = vpack.c.bf16 %v4315, %v4313
        %v4330 = vpack.c.bf16 %v4318, %v4316
        %v4331 = vpack.c.bf16 %v4319, %v4317
        %v4332 = vpack.c.bf16 %v4322, %v4320
        %v4333 = vpack.c.bf16 %v4323, %v4321
        %v4334 = vpack.c.bf16 %v4326, %v4324
        %v4335 = vpack.c.bf16 %v4327, %v4325
        %v4336 = vld [vmem:[#allocation17] sm:$0xff]
        %v4337 = vld [vmem:[#allocation17 + $0x8] sm:$0xff]
        %v4338 = vld [vmem:[#allocation17 + $0x10] sm:$0xff]
        %v4339 = vld [vmem:[#allocation17 + $0x18] sm:$0xff]
        %v4340 = vld [vmem:[#allocation17 + $0x20] sm:$0xff]
        %v4341 = vld [vmem:[#allocation17 + $0x28] sm:$0xff]
        %v4342 = vld [vmem:[#allocation17 + $0x30] sm:$0xff]
        %v4343 = vld [vmem:[#allocation17 + $0x38] sm:$0xff]
        %v4344 = vld [vmem:[#allocation17 + $0x40] sm:$0xff]
        %v4345 = vld [vmem:[#allocation17 + $0x48] sm:$0xff]
        %v4346 = vld [vmem:[#allocation17 + $0x50] sm:$0xff]
        %v4347 = vld [vmem:[#allocation17 + $0x58] sm:$0xff]
        %v4348 = vld [vmem:[#allocation17 + $0x60] sm:$0xff]
        %v4349 = vld [vmem:[#allocation17 + $0x68] sm:$0xff]
        %v4350 = vld [vmem:[#allocation17 + $0x70] sm:$0xff]
        %v4351 = vld [vmem:[#allocation17 + $0x78] sm:$0xff]
        %v4352 = vld [vmem:[#allocation17 + $0x80] sm:$0xff]
        %v4353 = vld [vmem:[#allocation17 + $0x88] sm:$0xff]
        %v4354 = vld [vmem:[#allocation17 + $0x90] sm:$0xff]
        %v4355 = vld [vmem:[#allocation17 + $0x98] sm:$0xff]
        %v4356 = vld [vmem:[#allocation17 + $0xa0] sm:$0xff]
        %v4357 = vld [vmem:[#allocation17 + $0xa8] sm:$0xff]
        %v4358 = vld [vmem:[#allocation17 + $0xb0] sm:$0xff]
        %v4359 = vld [vmem:[#allocation17 + $0xb8] sm:$0xff]
        %v4360 = vld [vmem:[#allocation17 + $0xc0] sm:$0xff]
        %v4361 = vld [vmem:[#allocation17 + $0xc8] sm:$0xff]
        %v4362 = vld [vmem:[#allocation17 + $0xd0] sm:$0xff]
        %v4363 = vld [vmem:[#allocation17 + $0xd8] sm:$0xff]
        %v4364 = vld [vmem:[#allocation17 + $0xe0] sm:$0xff]
        %v4365 = vld [vmem:[#allocation17 + $0xe8] sm:$0xff]
        %v4366 = vld [vmem:[#allocation17 + $0xf0] sm:$0xff]
        %v4367 = vld [vmem:[#allocation17 + $0xf8] sm:$0xff]
        %v4368 = vld [vmem:[%s12] sm:$0x3]
        %v4370 = vperm.slane %v4368, 0
        %v4371 = vperm.slane %v4368, 1
        %v4406 = vunpack.c.l.b16 %v4336
        %v4407 = vunpack.c.h.b16 %v4336
        %v4408 = vunpack.c.l.b16 %v4337
        %v4409 = vunpack.c.h.b16 %v4337
        %v4410 = vunpack.c.l.b16 %v4338
        %v4411 = vunpack.c.h.b16 %v4338
        %v4412 = vunpack.c.l.b16 %v4339
        %v4413 = vunpack.c.h.b16 %v4339
        %v4414 = vunpack.c.l.b16 %v4340
        %v4415 = vunpack.c.h.b16 %v4340
        %v4416 = vunpack.c.l.b16 %v4341
        %v4417 = vunpack.c.h.b16 %v4341
        %v4418 = vunpack.c.l.b16 %v4342
        %v4419 = vunpack.c.h.b16 %v4342
        %v4420 = vunpack.c.l.b16 %v4343
        %v4421 = vunpack.c.h.b16 %v4343
        %v4422 = vunpack.c.l.b16 %v4344
        %v4423 = vunpack.c.h.b16 %v4344
        %v4424 = vunpack.c.l.b16 %v4345
        %v4425 = vunpack.c.h.b16 %v4345
        %v4426 = vunpack.c.l.b16 %v4346
        %v4427 = vunpack.c.h.b16 %v4346
        %v4428 = vunpack.c.l.b16 %v4347
        %v4429 = vunpack.c.h.b16 %v4347
        %v4430 = vunpack.c.l.b16 %v4348
        %v4431 = vunpack.c.h.b16 %v4348
        %v4432 = vunpack.c.l.b16 %v4349
        %v4433 = vunpack.c.h.b16 %v4349
        %v4434 = vunpack.c.l.b16 %v4350
        %v4435 = vunpack.c.h.b16 %v4350
        %v4436 = vunpack.c.l.b16 %v4351
        %v4437 = vunpack.c.h.b16 %v4351
        %v4438 = vunpack.c.l.b16 %v4352
        %v4439 = vunpack.c.h.b16 %v4352
        %v4440 = vunpack.c.l.b16 %v4353
        %v4441 = vunpack.c.h.b16 %v4353
        %v4442 = vunpack.c.l.b16 %v4354
        %v4443 = vunpack.c.h.b16 %v4354
        %v4444 = vunpack.c.l.b16 %v4355
        %v4445 = vunpack.c.h.b16 %v4355
        %v4446 = vunpack.c.l.b16 %v4356
        %v4447 = vunpack.c.h.b16 %v4356
        %v4448 = vunpack.c.l.b16 %v4357
        %v4449 = vunpack.c.h.b16 %v4357
        %v4450 = vunpack.c.l.b16 %v4358
        %v4451 = vunpack.c.h.b16 %v4358
        %v4452 = vunpack.c.l.b16 %v4359
        %v4453 = vunpack.c.h.b16 %v4359
        %v4454 = vunpack.c.l.b16 %v4360
        %v4455 = vunpack.c.h.b16 %v4360
        %v4456 = vunpack.c.l.b16 %v4361
        %v4457 = vunpack.c.h.b16 %v4361
        %v4458 = vunpack.c.l.b16 %v4362
        %v4459 = vunpack.c.h.b16 %v4362
        %v4460 = vunpack.c.l.b16 %v4363
        %v4461 = vunpack.c.h.b16 %v4363
        %v4462 = vunpack.c.l.b16 %v4364
        %v4463 = vunpack.c.h.b16 %v4364
        %v4464 = vunpack.c.l.b16 %v4365
        %v4465 = vunpack.c.h.b16 %v4365
        %v4466 = vunpack.c.l.b16 %v4366
        %v4467 = vunpack.c.h.b16 %v4366
        %v4468 = vunpack.c.l.b16 %v4367
        %v4469 = vunpack.c.h.b16 %v4367
        %v4470 = vpack.c.b16 %v4408, %v4406
        %v4471 = vpack.c.b16 %v4409, %v4407
        %v4472 = vpack.c.b16 %v4412, %v4410
        %v4473 = vpack.c.b16 %v4413, %v4411
        %v4474 = vpack.c.b16 %v4416, %v4414
        %v4475 = vpack.c.b16 %v4417, %v4415
        %v4476 = vpack.c.b16 %v4420, %v4418
        %v4477 = vpack.c.b16 %v4421, %v4419
        %v4478 = vpack.c.b16 %v4424, %v4422
        %v4479 = vpack.c.b16 %v4425, %v4423
        %v4480 = vpack.c.b16 %v4428, %v4426
        %v4481 = vpack.c.b16 %v4429, %v4427
        %v4482 = vpack.c.b16 %v4432, %v4430
        %v4483 = vpack.c.b16 %v4433, %v4431
        %v4484 = vpack.c.b16 %v4436, %v4434
        %v4485 = vpack.c.b16 %v4437, %v4435
        %v4486 = vpack.c.b16 %v4440, %v4438
        %v4487 = vpack.c.b16 %v4441, %v4439
        %v4488 = vpack.c.b16 %v4444, %v4442
        %v4489 = vpack.c.b16 %v4445, %v4443
        %v4490 = vpack.c.b16 %v4448, %v4446
        %v4491 = vpack.c.b16 %v4449, %v4447
        %v4492 = vpack.c.b16 %v4452, %v4450
        %v4493 = vpack.c.b16 %v4453, %v4451
        %v4494 = vpack.c.b16 %v4456, %v4454
        %v4495 = vpack.c.b16 %v4457, %v4455
        %v4496 = vpack.c.b16 %v4460, %v4458
        %v4497 = vpack.c.b16 %v4461, %v4459
        %v4498 = vpack.c.b16 %v4464, %v4462
        %v4499 = vpack.c.b16 %v4465, %v4463
        %v4500 = vpack.c.b16 %v4468, %v4466
        %v4501 = vpack.c.b16 %v4469, %v4467
        %4534 = vmatpush.bf16.msra.mxu0 %v4484
        %4535 = vmatpush.bf16.msra.mxu0 %v4482
        %4536 = vmatpush.bf16.msra.mxu0 %v4480
        %4537 = vmatpush.bf16.msra.mxu0 %v4478
        %4538 = vmatpush.bf16.msra.mxu0 %v4476
        %4539 = vmatpush.bf16.msra.mxu0 %v4474
        %4540 = vmatpush.bf16.msra.mxu0 %v4472
        %4541 = vmatpush.bf16.msra.mxu0 %v4470
        %4542 = vmatmul.bf16.gmra.mxu0 %v4328
        %v4543 = vpop.f32.mrf.mxu0
        %v4544 = vadd.f32 %v4370, %v4543
        %v4545 = vpop.f32.mrf.mxu0
        %v4546 = vadd.f32 %v4370, %v4545
        %4547 = vmatmul.bf16.gmra.mxu0 %v4330
        %v4548 = vpop.f32.mrf.mxu0
        %v4549 = vadd.f32 %v4370, %v4548
        %v4550 = vpop.f32.mrf.mxu0
        %v4551 = vadd.f32 %v4370, %v4550
        %4552 = vmatmul.bf16.gmra.mxu0 %v4332
        %v4553 = vpop.f32.mrf.mxu0
        %v4554 = vadd.f32 %v4370, %v4553
        %v4555 = vpop.f32.mrf.mxu0
        %v4556 = vadd.f32 %v4370, %v4555
        %4557 = vmatmul.bf16.gmra.mxu0 %v4334
        %v4558 = vpop.f32.mrf.mxu0
        %v4559 = vadd.f32 %v4370, %v4558
        %v4560 = vpop.f32.mrf.mxu0
        %v4561 = vadd.f32 %v4370, %v4560
        %4562 = vdwg.mxu0
        %4563 = vmatpush.bf16.msra.mxu0 %v4500
        %4564 = vmatpush.bf16.msra.mxu0 %v4498
        %4565 = vmatpush.bf16.msra.mxu0 %v4496
        %4566 = vmatpush.bf16.msra.mxu0 %v4494
        %4567 = vmatpush.bf16.msra.mxu0 %v4492
        %4568 = vmatpush.bf16.msra.mxu0 %v4490
        %4569 = vmatpush.bf16.msra.mxu0 %v4488
        %4570 = vmatpush.bf16.msra.mxu0 %v4486
        %4571 = vmatmul.bf16.gmra.mxu0 %v4329
        %v4572 = vpop.f32.mrf.mxu0
        %v4573 = vadd.f32 %v4544, %v4572
        %v4574 = vpop.f32.mrf.mxu0
        %v4575 = vadd.f32 %v4546, %v4574
        %4576 = vmatmul.bf16.gmra.mxu0 %v4331
        %v4577 = vpop.f32.mrf.mxu0
        %v4578 = vadd.f32 %v4549, %v4577
        %v4579 = vpop.f32.mrf.mxu0
        %v4580 = vadd.f32 %v4551, %v4579
        %4581 = vmatmul.bf16.gmra.mxu0 %v4333
        %v4582 = vpop.f32.mrf.mxu0
        %v4583 = vadd.f32 %v4554, %v4582
        %v4584 = vpop.f32.mrf.mxu0
        %v4585 = vadd.f32 %v4556, %v4584
        %4586 = vmatmul.bf16.gmra.mxu0 %v4335
        %v4587 = vpop.f32.mrf.mxu0
        %v4588 = vadd.f32 %v4559, %v4587
        %v4589 = vpop.f32.mrf.mxu0
        %v4590 = vadd.f32 %v4561, %v4589
        %4591 = vdwg.mxu0
        %4592 = vmatpush.bf16.msra.mxu0 %v4485
        %4593 = vmatpush.bf16.msra.mxu0 %v4483
        %4594 = vmatpush.bf16.msra.mxu0 %v4481
        %4595 = vmatpush.bf16.msra.mxu0 %v4479
        %4596 = vmatpush.bf16.msra.mxu0 %v4477
        %4597 = vmatpush.bf16.msra.mxu0 %v4475
        %4598 = vmatpush.bf16.msra.mxu0 %v4473
        %4599 = vmatpush.bf16.msra.mxu0 %v4471
        %4600 = vmatmul.bf16.gmra.mxu0 %v4328
        %v4601 = vpop.f32.mrf.mxu0
        %v4602 = vadd.f32 %v4371, %v4601
        %v4603 = vpop.f32.mrf.mxu0
        %v4604 = vadd.f32 %v4371, %v4603
        %4605 = vmatmul.bf16.gmra.mxu0 %v4330
        %v4606 = vpop.f32.mrf.mxu0
        %v4607 = vadd.f32 %v4371, %v4606
        %v4608 = vpop.f32.mrf.mxu0
        %v4609 = vadd.f32 %v4371, %v4608
        %4610 = vmatmul.bf16.gmra.mxu0 %v4332
        %v4611 = vpop.f32.mrf.mxu0
        %v4612 = vadd.f32 %v4371, %v4611
        %v4613 = vpop.f32.mrf.mxu0
        %v4614 = vadd.f32 %v4371, %v4613
        %4615 = vmatmul.bf16.gmra.mxu0 %v4334
        %v4616 = vpop.f32.mrf.mxu0
        %v4617 = vadd.f32 %v4371, %v4616
        %v4618 = vpop.f32.mrf.mxu0
        %v4619 = vadd.f32 %v4371, %v4618
        %4620 = vdwg.mxu0
        %4621 = vmatpush.bf16.msra.mxu0 %v4501
        %4622 = vmatpush.bf16.msra.mxu0 %v4499
        %4623 = vmatpush.bf16.msra.mxu0 %v4497
        %4624 = vmatpush.bf16.msra.mxu0 %v4495
        %4625 = vmatpush.bf16.msra.mxu0 %v4493
        %4626 = vmatpush.bf16.msra.mxu0 %v4491
        %4627 = vmatpush.bf16.msra.mxu0 %v4489
        %4628 = vmatpush.bf16.msra.mxu0 %v4487
        %4629 = vmatmul.bf16.gmra.mxu0 %v4329
        %v4630 = vpop.f32.mrf.mxu0
        %v4631 = vadd.f32 %v4602, %v4630
        %v4632 = vpop.f32.mrf.mxu0
        %v4633 = vadd.f32 %v4604, %v4632
        %4634 = vmatmul.bf16.gmra.mxu0 %v4331
        %v4635 = vpop.f32.mrf.mxu0
        %v4636 = vadd.f32 %v4607, %v4635
        %v4637 = vpop.f32.mrf.mxu0
        %v4638 = vadd.f32 %v4609, %v4637
        %4639 = vmatmul.bf16.gmra.mxu0 %v4333
        %v4640 = vpop.f32.mrf.mxu0
        %v4641 = vadd.f32 %v4612, %v4640
        %v4642 = vpop.f32.mrf.mxu0
        %v4643 = vadd.f32 %v4614, %v4642
        %4644 = vmatmul.bf16.gmra.mxu0 %v4335
        %v4645 = vpop.f32.mrf.mxu0
        %v4646 = vadd.f32 %v4617, %v4645
        %v4647 = vpop.f32.mrf.mxu0
        %v4648 = vadd.f32 %v4619, %v4647
        %4649 = vdwg.mxu0
        %v4650 = vmax.f32 %v4573, 0.0
        %v4651 = vmax.f32 %v4631, 0.0
        %v4652 = vmax.f32 %v4575, 0.0
        %v4653 = vmax.f32 %v4633, 0.0
        %v4654 = vmax.f32 %v4578, 0.0
        %v4655 = vmax.f32 %v4636, 0.0
        %v4656 = vmax.f32 %v4580, 0.0
        %v4657 = vmax.f32 %v4638, 0.0
        %v4658 = vmax.f32 %v4583, 0.0
        %v4659 = vmax.f32 %v4641, 0.0
        %v4660 = vmax.f32 %v4585, 0.0
        %v4661 = vmax.f32 %v4643, 0.0
        %v4662 = vmax.f32 %v4588, 0.0
        %v4663 = vmax.f32 %v4646, 0.0
        %v4664 = vmax.f32 %v4590, 0.0
        %v4665 = vmax.f32 %v4648, 0.0
        %v4666 = vpack.c.bf16 %v4652, %v4650
        %v4667 = vpack.c.bf16 %v4653, %v4651
        %v4668 = vpack.c.bf16 %v4656, %v4654
        %v4669 = vpack.c.bf16 %v4657, %v4655
        %v4670 = vpack.c.bf16 %v4660, %v4658
        %v4671 = vpack.c.bf16 %v4661, %v4659
        %v4672 = vpack.c.bf16 %v4664, %v4662
        %v4673 = vpack.c.bf16 %v4665, %v4663
        %v4674 = vld [vmem:[#allocation19] sm:$0xf]
        %v4675 = vld [vmem:[#allocation19 + $0x4] sm:$0xf]
        %v4676 = vld [vmem:[#allocation19 + $0x8] sm:$0xf]
        %v4677 = vld [vmem:[#allocation19 + $0xc] sm:$0xf]
        %v4678 = vld [vmem:[#allocation19 + $0x10] sm:$0xf]
        %v4679 = vld [vmem:[#allocation19 + $0x14] sm:$0xf]
        %v4680 = vld [vmem:[#allocation19 + $0x18] sm:$0xf]
        %v4681 = vld [vmem:[#allocation19 + $0x1c] sm:$0xf]
        %v4682 = vld [vmem:[#allocation19 + $0x20] sm:$0xf]
        %v4683 = vld [vmem:[#allocation19 + $0x24] sm:$0xf]
        %v4684 = vld [vmem:[#allocation19 + $0x28] sm:$0xf]
        %v4685 = vld [vmem:[#allocation19 + $0x2c] sm:$0xf]
        %v4686 = vld [vmem:[#allocation19 + $0x30] sm:$0xf]
        %v4687 = vld [vmem:[#allocation19 + $0x34] sm:$0xf]
        %v4688 = vld [vmem:[#allocation19 + $0x38] sm:$0xf]
        %v4689 = vld [vmem:[#allocation19 + $0x3c] sm:$0xf]
        %v4690 = vld [vmem:[#allocation19 + $0x40] sm:$0xf]
        %v4691 = vld [vmem:[#allocation19 + $0x44] sm:$0xf]
        %v4692 = vld [vmem:[#allocation19 + $0x48] sm:$0xf]
        %v4693 = vld [vmem:[#allocation19 + $0x4c] sm:$0xf]
        %v4694 = vld [vmem:[#allocation19 + $0x50] sm:$0xf]
        %v4695 = vld [vmem:[#allocation19 + $0x54] sm:$0xf]
        %v4696 = vld [vmem:[#allocation19 + $0x58] sm:$0xf]
        %v4697 = vld [vmem:[#allocation19 + $0x5c] sm:$0xf]
        %v4698 = vld [vmem:[#allocation19 + $0x60] sm:$0xf]
        %v4699 = vld [vmem:[#allocation19 + $0x64] sm:$0xf]
        %v4700 = vld [vmem:[#allocation19 + $0x68] sm:$0xf]
        %v4701 = vld [vmem:[#allocation19 + $0x6c] sm:$0xf]
        %v4702 = vld [vmem:[#allocation19 + $0x70] sm:$0xf]
        %v4703 = vld [vmem:[#allocation19 + $0x74] sm:$0xf]
        %v4704 = vld [vmem:[#allocation19 + $0x78] sm:$0xf]
        %v4705 = vld [vmem:[#allocation19 + $0x7c] sm:$0xf]
        %v4706 = vld [vmem:[%s14] sm:$0x1]
        %v4708 = vperm.slane %v4706, 0
        %v4742 = vunpack.c.l.b16 %v4674
        %v4743 = vunpack.c.l.b16 %v4675
        %v4744 = vunpack.c.l.b16 %v4676
        %v4745 = vunpack.c.l.b16 %v4677
        %v4746 = vunpack.c.l.b16 %v4678
        %v4747 = vunpack.c.l.b16 %v4679
        %v4748 = vunpack.c.l.b16 %v4680
        %v4749 = vunpack.c.l.b16 %v4681
        %v4750 = vunpack.c.l.b16 %v4682
        %v4751 = vunpack.c.l.b16 %v4683
        %v4752 = vunpack.c.l.b16 %v4684
        %v4753 = vunpack.c.l.b16 %v4685
        %v4754 = vunpack.c.l.b16 %v4686
        %v4755 = vunpack.c.l.b16 %v4687
        %v4756 = vunpack.c.l.b16 %v4688
        %v4757 = vunpack.c.l.b16 %v4689
        %v4758 = vunpack.c.l.b16 %v4690
        %v4759 = vunpack.c.l.b16 %v4691
        %v4760 = vunpack.c.l.b16 %v4692
        %v4761 = vunpack.c.l.b16 %v4693
        %v4762 = vunpack.c.l.b16 %v4694
        %v4763 = vunpack.c.l.b16 %v4695
        %v4764 = vunpack.c.l.b16 %v4696
        %v4765 = vunpack.c.l.b16 %v4697
        %v4766 = vunpack.c.l.b16 %v4698
        %v4767 = vunpack.c.l.b16 %v4699
        %v4768 = vunpack.c.l.b16 %v4700
        %v4769 = vunpack.c.l.b16 %v4701
        %v4770 = vunpack.c.l.b16 %v4702
        %v4771 = vunpack.c.l.b16 %v4703
        %v4772 = vunpack.c.l.b16 %v4704
        %v4773 = vunpack.c.l.b16 %v4705
        %v4774 = vpack.c.b16 %v4743, %v4742
        %v4775 = vpack.c.b16 %v4745, %v4744
        %v4776 = vpack.c.b16 %v4747, %v4746
        %v4777 = vpack.c.b16 %v4749, %v4748
        %v4778 = vpack.c.b16 %v4751, %v4750
        %v4779 = vpack.c.b16 %v4753, %v4752
        %v4780 = vpack.c.b16 %v4755, %v4754
        %v4781 = vpack.c.b16 %v4757, %v4756
        %v4782 = vpack.c.b16 %v4759, %v4758
        %v4783 = vpack.c.b16 %v4761, %v4760
        %v4784 = vpack.c.b16 %v4763, %v4762
        %v4785 = vpack.c.b16 %v4765, %v4764
        %v4786 = vpack.c.b16 %v4767, %v4766
        %v4787 = vpack.c.b16 %v4769, %v4768
        %v4788 = vpack.c.b16 %v4771, %v4770
        %v4789 = vpack.c.b16 %v4773, %v4772
        %4806 = vmatpush.bf16.msra.mxu0 %v4781
        %4807 = vmatpush.bf16.msra.mxu0 %v4780
        %4808 = vmatpush.bf16.msra.mxu0 %v4779
        %4809 = vmatpush.bf16.msra.mxu0 %v4778
        %4810 = vmatpush.bf16.msra.mxu0 %v4777
        %4811 = vmatpush.bf16.msra.mxu0 %v4776
        %4812 = vmatpush.bf16.msra.mxu0 %v4775
        %4813 = vmatpush.bf16.msra.mxu0 %v4774
        %4814 = vmatmul.bf16.gmra.mxu0 %v4666
        %v4815 = vpop.f32.mrf.mxu0
        %v4816 = vadd.f32 %v4708, %v4815
        %v4817 = vpop.f32.mrf.mxu0
        %v4818 = vadd.f32 %v4708, %v4817
        %4819 = vmatmul.bf16.gmra.mxu0 %v4668
        %v4820 = vpop.f32.mrf.mxu0
        %v4821 = vadd.f32 %v4708, %v4820
        %v4822 = vpop.f32.mrf.mxu0
        %v4823 = vadd.f32 %v4708, %v4822
        %4824 = vmatmul.bf16.gmra.mxu0 %v4670
        %v4825 = vpop.f32.mrf.mxu0
        %v4826 = vadd.f32 %v4708, %v4825
        %v4827 = vpop.f32.mrf.mxu0
        %v4828 = vadd.f32 %v4708, %v4827
        %4829 = vmatmul.bf16.gmra.mxu0 %v4672
        %v4830 = vpop.f32.mrf.mxu0
        %v4831 = vadd.f32 %v4708, %v4830
        %v4832 = vpop.f32.mrf.mxu0
        %v4833 = vadd.f32 %v4708, %v4832
        %4834 = vdwg.mxu0
        %4835 = vmatpush.bf16.msra.mxu0 %v4789
        %4836 = vmatpush.bf16.msra.mxu0 %v4788
        %4837 = vmatpush.bf16.msra.mxu0 %v4787
        %4838 = vmatpush.bf16.msra.mxu0 %v4786
        %4839 = vmatpush.bf16.msra.mxu0 %v4785
        %4840 = vmatpush.bf16.msra.mxu0 %v4784
        %4841 = vmatpush.bf16.msra.mxu0 %v4783
        %4842 = vmatpush.bf16.msra.mxu0 %v4782
        %4843 = vmatmul.bf16.gmra.mxu0 %v4667
        %v4844 = vpop.f32.mrf.mxu0
        %v4845 = vadd.f32 %v4816, %v4844
        %v4846 = vpop.f32.mrf.mxu0
        %v4847 = vadd.f32 %v4818, %v4846
        %4848 = vmatmul.bf16.gmra.mxu0 %v4669
        %v4849 = vpop.f32.mrf.mxu0
        %v4850 = vadd.f32 %v4821, %v4849
        %v4851 = vpop.f32.mrf.mxu0
        %v4852 = vadd.f32 %v4823, %v4851
        %4853 = vmatmul.bf16.gmra.mxu0 %v4671
        %v4854 = vpop.f32.mrf.mxu0
        %v4855 = vadd.f32 %v4826, %v4854
        %v4856 = vpop.f32.mrf.mxu0
        %v4857 = vadd.f32 %v4828, %v4856
        %4858 = vmatmul.bf16.gmra.mxu0 %v4673
        %v4859 = vpop.f32.mrf.mxu0
        %v4860 = vadd.f32 %v4831, %v4859
        %v4861 = vpop.f32.mrf.mxu0
        %v4862 = vadd.f32 %v4833, %v4861
        %4863 = vdwg.mxu0
        %v4864 = vxor.u32 %v4845, 2147483648
        %v4865 = vxor.u32 %v4847, 2147483648
        %v4866 = vxor.u32 %v4850, 2147483648
        %v4867 = vxor.u32 %v4852, 2147483648
        %v4868 = vxor.u32 %v4855, 2147483648
        %v4869 = vxor.u32 %v4857, 2147483648
        %v4870 = vxor.u32 %v4860, 2147483648
        %v4871 = vxor.u32 %v4862, 2147483648
        %v4872 = vmul.f32 %v4864, 1.442695
        %v4873 = vpow.pop %v4872
        %v4874 = vmul.f32 %v4865, 1.442695
        %v4875 = vpow.pop %v4874
        %v4876 = vmul.f32 %v4866, 1.442695
        %v4877 = vpow.pop %v4876
        %v4878 = vmul.f32 %v4867, 1.442695
        %v4879 = vpow.pop %v4878
        %v4880 = vmul.f32 %v4868, 1.442695
        %v4881 = vpow.pop %v4880
        %v4882 = vmul.f32 %v4869, 1.442695
        %v4883 = vpow.pop %v4882
        %v4884 = vmul.f32 %v4870, 1.442695
        %v4885 = vpow.pop %v4884
        %v4886 = vmul.f32 %v4871, 1.442695
        %v4887 = vpow.pop %v4886
        %v4888 = vadd.f32 %v4873, 1.0
        %v4889 = vadd.f32 %v4875, 1.0
        %v4890 = vadd.f32 %v4877, 1.0
        %v4891 = vadd.f32 %v4879, 1.0
        %v4892 = vadd.f32 %v4881, 1.0
        %v4893 = vadd.f32 %v4883, 1.0
        %v4894 = vadd.f32 %v4885, 1.0
        %v4895 = vadd.f32 %v4887, 1.0
        %v4896 = vrcp.pop %v4888
        %v4897 = vmul.f32 %v4888, %v4896
        %v4898 = vsub.f32 1.0, %v4897
        %v4899 = vmul.f32 %v4896, %v4898
        %v4900 = vadd.f32 %v4896, %v4899
        %vm4901 = vweird.f32 %v4888
        %vm4902 = vweird.f32 %v4896
        %vm4903 = vmor %vm4901, %vm4902
        %v4904 = vsel %vm4903, %v4896, %v4900
        %v4905 = vand.u32 2147483647, %v4888
        %vm4906 = vcmp.eq.f32.partialorder %v4905, 8.507059e+37
        %v4907 = vand.u32 %v4888, 2147483648
        %v4908 = vor.u32 1.1754944e-38, %v4907
        %v4909 = vsel %vm4906, %v4908, %v4904
        %v4910 = vmul.f32 1.0, %v4909
        %v4911 = vrcp.pop %v4889
        %v4912 = vmul.f32 %v4889, %v4911
        %v4913 = vsub.f32 1.0, %v4912
        %v4914 = vmul.f32 %v4911, %v4913
        %v4915 = vadd.f32 %v4911, %v4914
        %vm4916 = vweird.f32 %v4889
        %vm4917 = vweird.f32 %v4911
        %vm4918 = vmor %vm4916, %vm4917
        %v4919 = vsel %vm4918, %v4911, %v4915
        %v4920 = vand.u32 2147483647, %v4889
        %vm4921 = vcmp.eq.f32.partialorder %v4920, 8.507059e+37
        %v4922 = vand.u32 %v4889, 2147483648
        %v4923 = vor.u32 1.1754944e-38, %v4922
        %v4924 = vsel %vm4921, %v4923, %v4919
        %v4925 = vmul.f32 1.0, %v4924
        %v4926 = vrcp.pop %v4890
        %v4927 = vmul.f32 %v4890, %v4926
        %v4928 = vsub.f32 1.0, %v4927
        %v4929 = vmul.f32 %v4926, %v4928
        %v4930 = vadd.f32 %v4926, %v4929
        %vm4931 = vweird.f32 %v4890
        %vm4932 = vweird.f32 %v4926
        %vm4933 = vmor %vm4931, %vm4932
        %v4934 = vsel %vm4933, %v4926, %v4930
        %v4935 = vand.u32 2147483647, %v4890
        %vm4936 = vcmp.eq.f32.partialorder %v4935, 8.507059e+37
        %v4937 = vand.u32 %v4890, 2147483648
        %v4938 = vor.u32 1.1754944e-38, %v4937
        %v4939 = vsel %vm4936, %v4938, %v4934
        %v4940 = vmul.f32 1.0, %v4939
        %v4941 = vrcp.pop %v4891
        %v4942 = vmul.f32 %v4891, %v4941
        %v4943 = vsub.f32 1.0, %v4942
        %v4944 = vmul.f32 %v4941, %v4943
        %v4945 = vadd.f32 %v4941, %v4944
        %vm4946 = vweird.f32 %v4891
        %vm4947 = vweird.f32 %v4941
        %vm4948 = vmor %vm4946, %vm4947
        %v4949 = vsel %vm4948, %v4941, %v4945
        %v4950 = vand.u32 2147483647, %v4891
        %vm4951 = vcmp.eq.f32.partialorder %v4950, 8.507059e+37
        %v4952 = vand.u32 %v4891, 2147483648
        %v4953 = vor.u32 1.1754944e-38, %v4952
        %v4954 = vsel %vm4951, %v4953, %v4949
        %v4955 = vmul.f32 1.0, %v4954
        %v4956 = vrcp.pop %v4892
        %v4957 = vmul.f32 %v4892, %v4956
        %v4958 = vsub.f32 1.0, %v4957
        %v4959 = vmul.f32 %v4956, %v4958
        %v4960 = vadd.f32 %v4956, %v4959
        %vm4961 = vweird.f32 %v4892
        %vm4962 = vweird.f32 %v4956
        %vm4963 = vmor %vm4961, %vm4962
        %v4964 = vsel %vm4963, %v4956, %v4960
        %v4965 = vand.u32 2147483647, %v4892
        %vm4966 = vcmp.eq.f32.partialorder %v4965, 8.507059e+37
        %v4967 = vand.u32 %v4892, 2147483648
        %v4968 = vor.u32 1.1754944e-38, %v4967
        %v4969 = vsel %vm4966, %v4968, %v4964
        %v4970 = vmul.f32 1.0, %v4969
        %v4971 = vrcp.pop %v4893
        %v4972 = vmul.f32 %v4893, %v4971
        %v4973 = vsub.f32 1.0, %v4972
        %v4974 = vmul.f32 %v4971, %v4973
        %v4975 = vadd.f32 %v4971, %v4974
        %vm4976 = vweird.f32 %v4893
        %vm4977 = vweird.f32 %v4971
        %vm4978 = vmor %vm4976, %vm4977
        %v4979 = vsel %vm4978, %v4971, %v4975
        %v4980 = vand.u32 2147483647, %v4893
        %vm4981 = vcmp.eq.f32.partialorder %v4980, 8.507059e+37
        %v4982 = vand.u32 %v4893, 2147483648
        %v4983 = vor.u32 1.1754944e-38, %v4982
        %v4984 = vsel %vm4981, %v4983, %v4979
        %v4985 = vmul.f32 1.0, %v4984
        %v4986 = vrcp.pop %v4894
        %v4987 = vmul.f32 %v4894, %v4986
        %v4988 = vsub.f32 1.0, %v4987
        %v4989 = vmul.f32 %v4986, %v4988
        %v4990 = vadd.f32 %v4986, %v4989
        %vm4991 = vweird.f32 %v4894
        %vm4992 = vweird.f32 %v4986
        %vm4993 = vmor %vm4991, %vm4992
        %v4994 = vsel %vm4993, %v4986, %v4990
        %v4995 = vand.u32 2147483647, %v4894
        %vm4996 = vcmp.eq.f32.partialorder %v4995, 8.507059e+37
        %v4997 = vand.u32 %v4894, 2147483648
        %v4998 = vor.u32 1.1754944e-38, %v4997
        %v4999 = vsel %vm4996, %v4998, %v4994
        %v5000 = vmul.f32 1.0, %v4999
        %v5001 = vrcp.pop %v4895
        %v5002 = vmul.f32 %v4895, %v5001
        %v5003 = vsub.f32 1.0, %v5002
        %v5004 = vmul.f32 %v5001, %v5003
        %v5005 = vadd.f32 %v5001, %v5004
        %vm5006 = vweird.f32 %v4895
        %vm5007 = vweird.f32 %v5001
        %vm5008 = vmor %vm5006, %vm5007
        %v5009 = vsel %vm5008, %v5001, %v5005
        %v5010 = vand.u32 2147483647, %v4895
        %vm5011 = vcmp.eq.f32.partialorder %v5010, 8.507059e+37
        %v5012 = vand.u32 %v4895, 2147483648
        %v5013 = vor.u32 1.1754944e-38, %v5012
        %v5014 = vsel %vm5011, %v5013, %v5009
        %v5015 = vmul.f32 1.0, %v5014
        %5016 = vst [vmem:[%s793] sm:$0xff] %v4910
        %5017 = vst [vmem:[%s793 + $0x8] sm:$0xff] %v4925
        %5018 = vst [vmem:[%s793 + $0x10] sm:$0xff] %v4940
        %5019 = vst [vmem:[%s793 + $0x18] sm:$0xff] %v4955
        %5020 = vst [vmem:[%s793 + $0x20] sm:$0xff] %v4970
        %5021 = vst [vmem:[%s793 + $0x28] sm:$0xff] %v4985
        %5022 = vst [vmem:[%s793 + $0x30] sm:$0xff] %v5000
        %5023 = vst [vmem:[%s793 + $0x38] sm:$0xff] %v5015
        %s5024 = sand.u32 %s399, 1
        %s5025 = scalar_lea.sflag [#allocation4], %s5024
        %s5026 = sand.u32 %s399, 1
        %s5027 = smul.addr %s5026, 64
        %s5028 = scalar_lea.vmem [#allocation20], %s5027
        %s5029 = sand.u32 %s45, 1
        %s5030 = scalar_lea.sflag [#allocation22], %s5029
        %s5031 = sand.u32 %s425, 1
        %s5032 = smul.addr %s5031, 8
        %s5033 = scalar_lea.vmem [#allocation21], %s5032
        %s5034 = sand.u32 %s45, 1
        %s5035 = scalar_lea.sflag [#allocation22], %s5034
        %s5036 = sand.u32 %s451, 1
        %s5037 = smul.addr %s5036, 8
        %s5038 = scalar_lea.vmem [#allocation23], %s5037
        // Predicated region
        $region129: #{tpu_custom_call.1} parent=79 // pred_check
          %p5039 = pneg %p409
        $region130: #{tpu_custom_call.1} parent=79 // pred_check_branch
          %5041 = sbr.rel (%p5039) target = $region132
        $region131: #{tpu_custom_call.1} parent=79 // pred_region
          %s5042 = smul.u32 8, %s50
          %5044 = vsyncadd %s5025, 0
          %s5045 = smul.addr %s49, 16
          %s5046 = sadd.s32 %s5042, %s5045
          %s5047 = smul.addr %s5046, 8
          %s5048 = scalar_lea.hbm %s15, %s5047
          %s5049 = sshll.u32 %s5028, 4
          %s5050 = int_to_ptr.vmem [resolvable:$true] %s5049
          %s5051 = sshll.u32 %s5048, 4
          %s5052 = int_to_ptr.hbm [resolvable:$true] %s5051
          %5057 = dma.vmem_to_hbm [thread:$0]  %s5050, 1024, %s5052, %s5025, 128, 128, 8
        $region132: #{tpu_custom_call.1} parent=79 // pred_fallthru
          _
        // Predicated region
        $region133: #{tpu_custom_call.1} parent=79 // pred_check
          %p5058 = pneg %p435
        $region134: #{tpu_custom_call.1} parent=79 // pred_check_branch
          %5060 = sbr.rel (%p5058) target = $region136
        $region135: #{tpu_custom_call.1} parent=79 // pred_region
          %5062 = vsyncadd %s5030, 0
          %s5063 = smul.addr %s49, 8
          %s5064 = scalar_lea.hbm %s16, %s5063
          %s5066 = sshll.u32 %s5033, 4
          %s5067 = int_to_ptr.vmem [resolvable:$true] %s5066
          %s5068 = sshll.u32 %s5064, 4
          %s5069 = int_to_ptr.hbm [resolvable:$true] %s5068
          %5071 = dma.vmem_to_hbm [thread:$0]  %s5067, 128, %s5069, %s5030
        $region136: #{tpu_custom_call.1} parent=79 // pred_fallthru
          _
        // Predicated region
        $region137: #{tpu_custom_call.1} parent=79 // pred_check
          %p5072 = pneg %p461
        $region138: #{tpu_custom_call.1} parent=79 // pred_check_branch
          %5074 = sbr.rel (%p5072) target = $region140
        $region139: #{tpu_custom_call.1} parent=79 // pred_region
          %5076 = vsyncadd %s5035, 0
          %s5077 = smul.addr %s49, 8
          %s5078 = scalar_lea.hbm %s17, %s5077
          %s5080 = sshll.u32 %s5038, 4
          %s5081 = int_to_ptr.vmem [resolvable:$true] %s5080
          %s5082 = sshll.u32 %s5078, 4
          %s5083 = int_to_ptr.hbm [resolvable:$true] %s5082
          %5085 = dma.vmem_to_hbm [thread:$0]  %s5081, 128, %s5083, %s5035
        $region140: #{tpu_custom_call.1} parent=79 // pred_fallthru
          _
      $region80: #{tpu_custom_call.1} parent=5 // pred_fallthru
        _
      %p5086 = scmp.le.s32.totalorder 2, %s40
      // Predicated region
      $region141: #{tpu_custom_call.1} parent=5 // pred_check
        %p5087 = pneg %p5086
      $region142: #{tpu_custom_call.1} parent=5 // pred_check_branch
        %5089 = sbr.rel (%p5087) target = $region144
      $region143: #{tpu_custom_call.1} parent=5 // pred_region
        %s5090 = ssub.s32 %s40, 2
        // Predicated region
        $region145: #{tpu_custom_call.1} parent=143 // pred_check
          %p5091 = pneg %p415
        $region146: #{tpu_custom_call.1} parent=143 // pred_check_branch
          %5093 = sbr.rel (%p5091) target = $region148
        $region147: #{tpu_custom_call.1} parent=143 // pred_region
          %s5094 = sand.u32 %s400, 1
          %s5095 = scalar_lea.sflag [#allocation4], %s5094
          %s5096 = sand.u32 %s400, 1
          %s5097 = smul.addr %s5096, 64
          %s5098 = scalar_lea.vmem [#allocation20], %s5097
          %5100 = dma.done %s5095, 1024
        $region148: #{tpu_custom_call.1} parent=143 // pred_fallthru
          _
        // Predicated region
        $region149: #{tpu_custom_call.1} parent=143 // pred_check
          %p5101 = pneg %p441
        $region150: #{tpu_custom_call.1} parent=143 // pred_check_branch
          %5103 = sbr.rel (%p5101) target = $region152
        $region151: #{tpu_custom_call.1} parent=143 // pred_region
          %s5104 = sand.u32 %s46, 1
          %s5105 = scalar_lea.sflag [#allocation22], %s5104
          %s5106 = sand.u32 %s426, 1
          %s5107 = smul.addr %s5106, 8
          %s5108 = scalar_lea.vmem [#allocation21], %s5107
          %5110 = dma.done %s5105, 128
        $region152: #{tpu_custom_call.1} parent=143 // pred_fallthru
          _
        // Predicated region
        $region153: #{tpu_custom_call.1} parent=143 // pred_check
          %p5111 = pneg %p467
        $region154: #{tpu_custom_call.1} parent=143 // pred_check_branch
          %5113 = sbr.rel (%p5111) target = $region156
        $region155: #{tpu_custom_call.1} parent=143 // pred_region
          %s5114 = sand.u32 %s46, 1
          %s5115 = scalar_lea.sflag [#allocation22], %s5114
          %s5116 = sand.u32 %s452, 1
          %s5117 = smul.addr %s5116, 8
          %s5118 = scalar_lea.vmem [#allocation23], %s5117
          %5120 = dma.done %s5115, 128
        $region156: #{tpu_custom_call.1} parent=143 // pred_fallthru
          _
      $region144: #{tpu_custom_call.1} parent=5 // pred_fallthru
        _
    $region6: #{tpu_custom_call.1} parent=1 // loop_footer
      %s44 = sadd.s32 1, %s40
    $region7: #{tpu_custom_call.1} parent=1 // loop_footer_branch
      %39 = sbr.rel target = $region3
    $region8: #{tpu_custom_call.1} parent=1 // loop_exit
      _
    %5121 = vsyncpa [#allocation3], 1
    %s5122 = scalar_lea.sflag [#allocation3], 1
    %5123 = vsyncpa %s5122, 1
    %5124 = vsyncpa [#allocation6], 1
    %s5125 = scalar_lea.sflag [#allocation6], 1
    %5126 = vsyncpa %s5125, 1
    %5127 = vsyncpa [#allocation9], 1
    %5128 = vsyncpa [#allocation12], 1
    %5129 = vsyncpa [#allocation15], 1
    %5130 = vsyncpa [#allocation18], 1
    %5131 = vsyncpa [#allocation4], 1
    %s5132 = scalar_lea.sflag [#allocation4], 1
    %5133 = vsyncpa %s5132, 1
    %5134 = vsyncpa [#allocation22], 1
    %s5135 = scalar_lea.sflag [#allocation22], 1
    %5136 = vsyncpa %s5135, 1

</llo_original>
